<compile_context>
chip_gen: v5e
topology: v5e:2x2
jax: 0.10.0
libtpu: 0.0.40
codegen_flags: <defaults>
</compile_context>

<pallas_src>
import functools
import math

import jax
import jax.numpy as jnp
from jax import lax
from jax.experimental import pallas as pl
from jax.experimental.pallas import tpu as pltpu  # noqa: F401  (TPU backend assumed)

EPS = 1e-5
LANES = 128
MXU_DTYPE = jnp.float32     # set to jnp.bfloat16 on v6e/v7x if tolerance allows


def _round_up(n, m):
    return ((n + m - 1) // m) * m


# ---------------------------------------------------------------------------
# Fused Pallas kernel
# ---------------------------------------------------------------------------
def fused_tcn_kernel(x_ref, sm_ref, pc_ref, *refs,
                     B, T, fpad, couts, dilations, k_effs, shifts):
    """Whole-network forward for the full batch in (B*T, C) layout.

    refs = [wblk_0, ..., wblk_{nb-1}, whead, out]
    """
    nb = len(couts)
    wb_refs = refs[:nb]
    wh_ref = refs[nb]
    o_ref = refs[nb + 1]

    BT = B * T
    C = couts[-1]
    shift_idx = {s: i for i, s in enumerate(shifts)}

    def prow(r, width):
        row = pc_ref[r:r + 1, :]                  # (1, 128) single-sublane load
        return row if width == LANES else row[:, :width]

    def mm(a, b):
        return jnp.dot(a.astype(MXU_DTYPE), b.astype(MXU_DTYPE),
                       preferred_element_type=jnp.float32)

    def shift_rows(v, s):
        # (S_s @ v)[r] = v[r - s] if (r % T) >= s else 0   (causal, per window)
        i = shift_idx[s]
        return mm(sm_ref[i * BT:(i + 1) * BT, :], v)

    # --- folded input BatchNorm (features pre-padded to fpad on host) -------
    h = x_ref[...] * prow(0, fpad) + prow(1, fpad)        # (BT, fpad)

    # --- TCN residual blocks (dropout = identity in eval mode) --------------
    pcr = 2
    cin = fpad
    for blk in range(nb):
        cout, d, ke = couts[blk], dilations[blk], k_effs[blk]
        wref = wb_refs[blk]
        off2 = ke * cin                 # conv2 taps start (sublane-aligned)
        offd = off2 + ke * cout         # downsample weight start

        def conv(inp, base, ci):
            out = mm(inp, wref[base:base + ci, :])                      # tap 0
            for j in range(1, ke):
                wj = wref[base + j * ci: base + (j + 1) * ci, :]
                out += shift_rows(mm(inp, wj), j * d)                   # tap j
            return out

        c1 = jnp.maximum(conv(h, 0, cin) * prow(pcr, cout)
                         + prow(pcr + 1, cout), 0.0)                    # conv1+bn1+relu
        c2 = conv(c1, off2, cout) * prow(pcr + 2, cout) + prow(pcr + 3, cout)
        res = mm(h, wref[offd:offd + cin, :]) + prow(pcr + 4, cout)     # downsample
        h = jnp.maximum(c2 + res, 0.0)                                  # residual+relu
        cin = cout
        pcr += 5

    # --- attention pooling over time (per-window softmax) -------------------
    hb = pcr                                                 # head-row base in pc slab
    a = jnp.tanh(mm(h, wh_ref[0:C, :]) + prow(hb, C))        # (BT, C)
    s = jnp.sum(a * prow(hb + 1, C), axis=-1, keepdims=True) + prow(hb + 2, 1)  # (BT,1)
    s3 = s.reshape(B, T, 1)
    p3 = jnp.exp(s3 - jnp.max(s3, axis=1, keepdims=True))    # per-window stabilized
    h3 = h.reshape(B, T, C)
    ctx = jnp.sum(p3 * h3, axis=1) / jnp.sum(p3, axis=1)     # (B, C)

    # --- classifier head -----------------------------------------------------
    h1 = jnp.maximum(mm(ctx, wh_ref[C:2 * C, :]) + prow(hb + 3, C), 0.0)
    h2 = jnp.maximum(mm(h1, wh_ref[2 * C:3 * C, :]) + prow(hb + 4, C), 0.0)
    logit = jnp.sum(h2 * prow(hb + 5, C), axis=-1, keepdims=True) + prow(hb + 6, 1)
    o_ref[...] = jax.nn.sigmoid(logit)                        # (B, 1)


# ---------------------------------------------------------------------------
# Host-side packing (BN folding, weight slabs, shift matrices)
# ---------------------------------------------------------------------------
def _fold_bn(bias, bn):
    gamma, beta, mean, var = bn
    scale = gamma / jnp.sqrt(var + EPS)
    shift = beta - mean * scale + bias * scale      # conv bias folded too
    return scale, shift


def _conv_taps(w, k_eff, cin_pad):
    """w: (Cout, Cin, K) -> k_eff tap matrices (cin_pad, Cout); tap j <-> shift j*d."""
    cout, cin, K = w.shape
    taps = []
    for j in range(k_eff):
        wj = w[:, :, K - 1 - j].T                   # (Cin, Cout)
        if cin_pad > cin:
            wj = jnp.pad(wj, ((0, cin_pad - cin), (0, 0)))
        taps.append(wj)
    return taps


def _pad_row(v, width=LANES):
    v = jnp.asarray(v, jnp.float32).reshape(-1)
    return jnp.pad(v, (0, width - v.shape[0]))


def prepare_packed(params, batch, seq_len):
    blocks = params["blocks"]
    nb = len(blocks)
    K = blocks[0]["w1"].shape[2]
    feat = blocks[0]["w1"].shape[1]
    fpad = _round_up(feat, 8)                                     # 9 -> 16
    dilations = tuple(int(b["dilation"]) for b in blocks)
    k_effs = tuple(min(K, (seq_len - 1) // d + 1) for d in dilations)
    couts = tuple(b["w1"].shape[0] for b in blocks)
    bt = batch * seq_len

    # per-channel params slab: one (rows, 128) array, 1 row per vector
    rows = []
    g, beta, mean, var = params["input_bn"]
    s = g / jnp.sqrt(var + EPS)
    rows += [_pad_row(jnp.pad(s, (0, fpad - feat))),
             _pad_row(jnp.pad(beta - mean * s, (0, fpad - feat)))]
    for blk in blocks:
        sc1, sh1 = _fold_bn(blk["b1"], blk["bn1"])
        sc2, sh2 = _fold_bn(blk["b2"], blk["bn2"])
        rows += [_pad_row(sc1), _pad_row(sh1), _pad_row(sc2), _pad_row(sh2),
                 _pad_row(blk["bd"])]
    rows += [_pad_row(params["ba1"]), _pad_row(params["wa2"].reshape(-1)),
             _pad_row(params["ba2"]), _pad_row(params["bf1"]), _pad_row(params["bf2"]),
             _pad_row(params["wf3"].reshape(-1)), _pad_row(params["bf3"])]
    while len(rows) % 8:
        rows.append(jnp.zeros((LANES,), jnp.float32))
    pc = jnp.stack(rows, axis=0)

    # per-block weight slab: [conv1 taps ; conv2 taps ; downsample], rows aligned
    wslabs = []
    cin = fpad
    for blk, ke in zip(blocks, k_effs):
        cout = blk["w1"].shape[0]
        pieces = _conv_taps(blk["w1"], ke, cin)
        pieces += _conv_taps(blk["w2"], ke, cout)
        wd = blk["wd"].T
        if cin > wd.shape[0]:
            wd = jnp.pad(wd, ((0, cin - wd.shape[0]), (0, 0)))
        pieces.append(wd)
        wslabs.append(jnp.concatenate(pieces, axis=0))
        cin = cout

    # head weight slab (all 128-lane wide)
    C = couts[-1]
    wf2t = params["wf2"].T
    wf2t = jnp.pad(wf2t, ((0, 0), (0, LANES - wf2t.shape[1])))
    whead = jnp.concatenate([params["wa1"].T, params["wf1"].T, wf2t], axis=0)

    # causal shift matrices S_s (block-diagonal per window)
    shifts = tuple(sorted({j * d for d, ke in zip(dilations, k_effs)
                           for j in range(1, ke)}))
    r = jnp.arange(bt)
    mats = [(((r[:, None] - s_) == r[None, :]) &
             ((r[:, None] % seq_len) >= s_)).astype(jnp.float32) for s_ in shifts]
    if not mats:
        mats = [jnp.zeros((bt, bt), jnp.float32)]
    smat = jnp.concatenate(mats, axis=0)                           # (n_s*BT, BT)

    meta = dict(fpad=fpad, feat=feat, couts=couts, dilations=dilations,
                k_effs=k_effs, shifts=shifts)
    return (pc, wslabs, whead, smat), meta


def build_forward(params, batch, seq_len):
    """Hoists all packing / BN folding out of the per-call path; returns jitted fn."""
    (pc, wslabs, whead, smat), meta = prepare_packed(params, batch, seq_len)
    feat, fpad = meta["feat"], meta["fpad"]
    bt = batch * seq_len

    kern = functools.partial(
        fused_tcn_kernel, B=batch, T=seq_len, fpad=fpad, couts=meta["couts"],
        dilations=meta["dilations"], k_effs=meta["k_effs"], shifts=meta["shifts"])

    @jax.jit
    def forward(x):                                   # x: (B, T, F)
        x2d = x.reshape(bt, feat)                     # matches PyTorch input_bn reshape
        x2d = jnp.pad(x2d, ((0, 0), (0, fpad - feat)))
        return pl.pallas_call(
            kern,
            out_shape=jax.ShapeDtypeStruct((batch, 1), jnp.float32),
        )(x2d, smat, pc, *wslabs, whead)

    return forward


# ---------------------------------------------------------------------------
# Parameter construction (deterministic, synthetic)
# ---------------------------------------------------------------------------
def make_params(key, input_size, channels, kernel_size):
    keys = iter(jax.random.split(key, 128))

    def nrm(shape, scale):
        return scale * jax.random.normal(next(keys), shape, jnp.float32)

    def conv_w(cout, cin, k):
        return nrm((cout, cin, k), 1.0 / math.sqrt(cin * k))

    def lin_w(cout, cin):
        return nrm((cout, cin), 1.0 / math.sqrt(cin))

    def bn(c):
        gamma = 1.0 + nrm((c,), 0.1)
        beta = nrm((c,), 0.1)
        mean = nrm((c,), 0.1)
        var = 0.5 + jax.random.uniform(next(keys), (c,), jnp.float32)
        return gamma, beta, mean, var

    p = {"input_bn": bn(input_size), "blocks": []}
    cin = input_size
    for i, cout in enumerate(channels):
        p["blocks"].append({
            "dilation": 2 ** i,
            "w1": conv_w(cout, cin, kernel_size), "b1": nrm((cout,), 0.05), "bn1": bn(cout),
            "w2": conv_w(cout, cout, kernel_size), "b2": nrm((cout,), 0.05), "bn2": bn(cout),
            "wd": lin_w(cout, cin), "bd": nrm((cout,), 0.05),
        })
        cin = cout
    C = channels[-1]
    p["wa1"], p["ba1"] = lin_w(C, C), nrm((C,), 0.05)
    p["wa2"], p["ba2"] = lin_w(1, C), nrm((1,), 0.05)
    p["wf1"], p["bf1"] = lin_w(C, C), nrm((C,), 0.05)
    p["wf2"], p["bf2"] = lin_w(C // 2, C), nrm((C // 2,), 0.05)
    p["wf3"], p["bf3"] = lin_w(1, C // 2), nrm((1,), 0.05)
    return p


# ---------------------------------------------------------------------------
# Pure-JAX reference (for correctness check)
# ---------------------------------------------------------------------------
def _causal_conv_ref(x, w, b, dilation):
    pad = (w.shape[-1] - 1) * dilation
    y = lax.conv_general_dilated(
        x, w, window_strides=(1,), padding=[(pad, 0)],
        rhs_dilation=(dilation,), dimension_numbers=("NCH", "OIH", "NCH"))
    return y + b[None, :, None]


def _bn_ref(x, bn):
    gamma, beta, mean, var = bn
    return ((x - mean[None, :, None]) / jnp.sqrt(var[None, :, None] + EPS)
            * gamma[None, :, None] + beta[None, :, None])


def forward_reference(x, p):
    g, beta, mean, var = p["input_bn"]
    xn = (x - mean) / jnp.sqrt(var + EPS) * g + beta       # (B, T, F)
    h = jnp.transpose(xn, (0, 2, 1))                       # (B, F, T)
    for blk in p["blocks"]:
        d = blk["dilation"]
        res = jnp.einsum("oc,bct->bot", blk["wd"], h) + blk["bd"][None, :, None]
        o = jnp.maximum(_bn_ref(_causal_conv_ref(h, blk["w1"], blk["b1"], d), blk["bn1"]), 0.0)
        o = _bn_ref(_causal_conv_ref(o, blk["w2"], blk["b2"], d), blk["bn2"])
        h = jnp.maximum(o + res, 0.0)
    y = jnp.transpose(h, (0, 2, 1))                        # (B, T, C)
    a = jnp.tanh(y @ p["wa1"].T + p["ba1"])
    s = a @ p["wa2"].T + p["ba2"]                          # (B, T, 1)
    attn = jax.nn.softmax(s, axis=1)
    ctx = jnp.sum(attn * y, axis=1)                        # (B, C)
    h1 = jnp.maximum(ctx @ p["wf1"].T + p["bf1"], 0.0)
    h2 = jnp.maximum(h1 @ p["wf2"].T + p["bf2"], 0.0)
    return jax.nn.sigmoid(h2 @ p["wf3"].T + p["bf3"])      # (B, 1)


# ---------------------------------------------------------------------------
if __name__ == "__main__":
    B, T, F = 2, 16, 9                     # batch, seq_len, len(SENSOR_COLS)
    channels = [32, 64, 128]               # CHANNEL_SIZES
    K = 7                                  # KERNEL_SIZE

    root = jax.random.PRNGKey(0)
    k_x, k_p = jax.random.split(root)
    x = jax.random.normal(k_x, (B, T, F), jnp.float32)
    params = make_params(k_p, F, channels, K)

    forward = build_forward(params, B, T)
    out = jax.block_until_ready(forward(x))
    ref = jax.block_until_ready(forward_reference(x, params))

    assert out.shape == (B, 1), out.shape
    if not jnp.allclose(out, ref, atol=2e-3, rtol=2e-3):
        raise AssertionError(f"mismatch: pallas={out} ref={ref}")
    print("KERNEL_OK")
</pallas_src>

<mosaic_0001>
module attributes {stable_mosaic.version = 11 : i64} {
  func.func @fused_tcn_kernel(%arg0: memref<32x16xf32, #tpu.memory_space<vmem>>, %arg1: memref<288x32xf32, #tpu.memory_space<vmem>>, %arg2: memref<24x128xf32, #tpu.memory_space<vmem>>, %arg3: memref<352x32xf32, #tpu.memory_space<vmem>>, %arg4: memref<704x64xf32, #tpu.memory_space<vmem>>, %arg5: memref<832x128xf32, #tpu.memory_space<vmem>>, %arg6: memref<384x128xf32, #tpu.memory_space<vmem>>, %arg7: memref<2x1xf32, #tpu.memory_space<vmem>>) attributes {dimension_semantics = [], scalar_prefetch = 0 : i64, scratch_operands = 0 : i64, tpu.core_type = #tpu.core_type<tc>} {
    %c0 = arith.constant 0 : index
    %c0_0 = arith.constant 0 : index
    %0 = vector.load %arg0[%c0, %c0_0] : memref<32x16xf32, #tpu.memory_space<vmem>>, vector<32x16xf32>
    %c0_1 = arith.constant 0 : index
    %c0_2 = arith.constant 0 : index
    %1 = vector.load %arg2[%c0_1, %c0_2] : memref<24x128xf32, #tpu.memory_space<vmem>>, vector<1x128xf32>
    %2 = vector.extract_strided_slice %1 {offsets = [0, 0], sizes = [1, 16], strides = [1, 1]} : vector<1x128xf32> to vector<1x16xf32>
    %3 = vector.broadcast %2 : vector<1x16xf32> to vector<32x16xf32>
    %4 = arith.mulf %0, %3 : vector<32x16xf32>
    %c1 = arith.constant 1 : index
    %c0_3 = arith.constant 0 : index
    %5 = vector.load %arg2[%c1, %c0_3] : memref<24x128xf32, #tpu.memory_space<vmem>>, vector<1x128xf32>
    %6 = vector.extract_strided_slice %5 {offsets = [0, 0], sizes = [1, 16], strides = [1, 1]} : vector<1x128xf32> to vector<1x16xf32>
    %7 = vector.broadcast %6 : vector<1x16xf32> to vector<32x16xf32>
    %8 = arith.addf %4, %7 : vector<32x16xf32>
    %c0_4 = arith.constant 0 : index
    %c0_5 = arith.constant 0 : index
    %9 = vector.load %arg3[%c0_4, %c0_5] : memref<352x32xf32, #tpu.memory_space<vmem>>, vector<16x32xf32>
    %cst = arith.constant dense<0.000000e+00> : vector<32x32xf32>
    %10 = tpu.matmul %8, %9, %cst {dimension_numbers = #tpu.dot_dimension_numbers<[1], [0], [0], [1], [0, 0, 1, 1], [], []>} : vector<32x16xf32>, vector<16x32xf32>, vector<32x32xf32> -> vector<32x32xf32>
    %c16 = arith.constant 16 : index
    %c0_6 = arith.constant 0 : index
    %11 = vector.load %arg3[%c16, %c0_6] : memref<352x32xf32, #tpu.memory_space<vmem>>, vector<16x32xf32>
    %cst_7 = arith.constant dense<0.000000e+00> : vector<32x32xf32>
    %12 = tpu.matmul %8, %11, %cst_7 {dimension_numbers = #tpu.dot_dimension_numbers<[1], [0], [0], [1], [0, 0, 1, 1], [], []>} : vector<32x16xf32>, vector<16x32xf32>, vector<32x32xf32> -> vector<32x32xf32>
    %c0_8 = arith.constant 0 : index
    %c0_9 = arith.constant 0 : index
    %13 = vector.load %arg1[%c0_8, %c0_9] : memref<288x32xf32, #tpu.memory_space<vmem>>, vector<32x32xf32>
    %cst_10 = arith.constant dense<0.000000e+00> : vector<32x32xf32>
    %14 = tpu.matmul %13, %12, %cst_10 {dimension_numbers = #tpu.dot_dimension_numbers<[1], [0], [0], [1], [0, 0, 1, 1], [], []>} : vector<32x32xf32>, vector<32x32xf32>, vector<32x32xf32> -> vector<32x32xf32>
    %15 = arith.addf %10, %14 : vector<32x32xf32>
    %c32 = arith.constant 32 : index
    %c0_11 = arith.constant 0 : index
    %16 = vector.load %arg3[%c32, %c0_11] : memref<352x32xf32, #tpu.memory_space<vmem>>, vector<16x32xf32>
    %cst_12 = arith.constant dense<0.000000e+00> : vector<32x32xf32>
    %17 = tpu.matmul %8, %16, %cst_12 {dimension_numbers = #tpu.dot_dimension_numbers<[1], [0], [0], [1], [0, 0, 1, 1], [], []>} : vector<32x16xf32>, vector<16x32xf32>, vector<32x32xf32> -> vector<32x32xf32>
    %c32_13 = arith.constant 32 : index
    %c0_14 = arith.constant 0 : index
    %18 = vector.load %arg1[%c32_13, %c0_14] : memref<288x32xf32, #tpu.memory_space<vmem>>, vector<32x32xf32>
    %cst_15 = arith.constant dense<0.000000e+00> : vector<32x32xf32>
    %19 = tpu.matmul %18, %17, %cst_15 {dimension_numbers = #tpu.dot_dimension_numbers<[1], [0], [0], [1], [0, 0, 1, 1], [], []>} : vector<32x32xf32>, vector<32x32xf32>, vector<32x32xf32> -> vector<32x32xf32>
    %20 = arith.addf %15, %19 : vector<32x32xf32>
    %c48 = arith.constant 48 : index
    %c0_16 = arith.constant 0 : index
    %21 = vector.load %arg3[%c48, %c0_16] : memref<352x32xf32, #tpu.memory_space<vmem>>, vector<16x32xf32>
    %cst_17 = arith.constant dense<0.000000e+00> : vector<32x32xf32>
    %22 = tpu.matmul %8, %21, %cst_17 {dimension_numbers = #tpu.dot_dimension_numbers<[1], [0], [0], [1], [0, 0, 1, 1], [], []>} : vector<32x16xf32>, vector<16x32xf32>, vector<32x32xf32> -> vector<32x32xf32>
    %c64 = arith.constant 64 : index
    %c0_18 = arith.constant 0 : index
    %23 = vector.load %arg1[%c64, %c0_18] : memref<288x32xf32, #tpu.memory_space<vmem>>, vector<32x32xf32>
    %cst_19 = arith.constant dense<0.000000e+00> : vector<32x32xf32>
    %24 = tpu.matmul %23, %22, %cst_19 {dimension_numbers = #tpu.dot_dimension_numbers<[1], [0], [0], [1], [0, 0, 1, 1], [], []>} : vector<32x32xf32>, vector<32x32xf32>, vector<32x32xf32> -> vector<32x32xf32>
    %25 = arith.addf %20, %24 : vector<32x32xf32>
    %c64_20 = arith.constant 64 : index
    %c0_21 = arith.constant 0 : index
    %26 = vector.load %arg3[%c64_20, %c0_21] : memref<352x32xf32, #tpu.memory_space<vmem>>, vector<16x32xf32>
    %cst_22 = arith.constant dense<0.000000e+00> : vector<32x32xf32>
    %27 = tpu.matmul %8, %26, %cst_22 {dimension_numbers = #tpu.dot_dimension_numbers<[1], [0], [0], [1], [0, 0, 1, 1], [], []>} : vector<32x16xf32>, vector<16x32xf32>, vector<32x32xf32> -> vector<32x32xf32>
    %c96 = arith.constant 96 : index
    %c0_23 = arith.constant 0 : index
    %28 = vector.load %arg1[%c96, %c0_23] : memref<288x32xf32, #tpu.memory_space<vmem>>, vector<32x32xf32>
    %cst_24 = arith.constant dense<0.000000e+00> : vector<32x32xf32>
    %29 = tpu.matmul %28, %27, %cst_24 {dimension_numbers = #tpu.dot_dimension_numbers<[1], [0], [0], [1], [0, 0, 1, 1], [], []>} : vector<32x32xf32>, vector<32x32xf32>, vector<32x32xf32> -> vector<32x32xf32>
    %30 = arith.addf %25, %29 : vector<32x32xf32>
    %c80 = arith.constant 80 : index
    %c0_25 = arith.constant 0 : index
    %31 = vector.load %arg3[%c80, %c0_25] : memref<352x32xf32, #tpu.memory_space<vmem>>, vector<16x32xf32>
    %cst_26 = arith.constant dense<0.000000e+00> : vector<32x32xf32>
    %32 = tpu.matmul %8, %31, %cst_26 {dimension_numbers = #tpu.dot_dimension_numbers<[1], [0], [0], [1], [0, 0, 1, 1], [], []>} : vector<32x16xf32>, vector<16x32xf32>, vector<32x32xf32> -> vector<32x32xf32>
    %c128 = arith.constant 128 : index
    %c0_27 = arith.constant 0 : index
    %33 = vector.load %arg1[%c128, %c0_27] : memref<288x32xf32, #tpu.memory_space<vmem>>, vector<32x32xf32>
    %cst_28 = arith.constant dense<0.000000e+00> : vector<32x32xf32>
    %34 = tpu.matmul %33, %32, %cst_28 {dimension_numbers = #tpu.dot_dimension_numbers<[1], [0], [0], [1], [0, 0, 1, 1], [], []>} : vector<32x32xf32>, vector<32x32xf32>, vector<32x32xf32> -> vector<32x32xf32>
    %35 = arith.addf %30, %34 : vector<32x32xf32>
    %c96_29 = arith.constant 96 : index
    %c0_30 = arith.constant 0 : index
    %36 = vector.load %arg3[%c96_29, %c0_30] : memref<352x32xf32, #tpu.memory_space<vmem>>, vector<16x32xf32>
    %cst_31 = arith.constant dense<0.000000e+00> : vector<32x32xf32>
    %37 = tpu.matmul %8, %36, %cst_31 {dimension_numbers = #tpu.dot_dimension_numbers<[1], [0], [0], [1], [0, 0, 1, 1], [], []>} : vector<32x16xf32>, vector<16x32xf32>, vector<32x32xf32> -> vector<32x32xf32>
    %c160 = arith.constant 160 : index
    %c0_32 = arith.constant 0 : index
    %38 = vector.load %arg1[%c160, %c0_32] : memref<288x32xf32, #tpu.memory_space<vmem>>, vector<32x32xf32>
    %cst_33 = arith.constant dense<0.000000e+00> : vector<32x32xf32>
    %39 = tpu.matmul %38, %37, %cst_33 {dimension_numbers = #tpu.dot_dimension_numbers<[1], [0], [0], [1], [0, 0, 1, 1], [], []>} : vector<32x32xf32>, vector<32x32xf32>, vector<32x32xf32> -> vector<32x32xf32>
    %40 = arith.addf %35, %39 : vector<32x32xf32>
    %c2 = arith.constant 2 : index
    %c0_34 = arith.constant 0 : index
    %41 = vector.load %arg2[%c2, %c0_34] : memref<24x128xf32, #tpu.memory_space<vmem>>, vector<1x128xf32>
    %42 = vector.extract_strided_slice %41 {offsets = [0, 0], sizes = [1, 32], strides = [1, 1]} : vector<1x128xf32> to vector<1x32xf32>
    %43 = vector.broadcast %42 : vector<1x32xf32> to vector<32x32xf32>
    %44 = arith.mulf %40, %43 : vector<32x32xf32>
    %c3 = arith.constant 3 : index
    %c0_35 = arith.constant 0 : index
    %45 = vector.load %arg2[%c3, %c0_35] : memref<24x128xf32, #tpu.memory_space<vmem>>, vector<1x128xf32>
    %46 = vector.extract_strided_slice %45 {offsets = [0, 0], sizes = [1, 32], strides = [1, 1]} : vector<1x128xf32> to vector<1x32xf32>
    %47 = vector.broadcast %46 : vector<1x32xf32> to vector<32x32xf32>
    %48 = arith.addf %44, %47 : vector<32x32xf32>
    %cst_36 = arith.constant 0.000000e+00 : f32
    %49 = vector.broadcast %cst_36 : f32 to vector<32x32xf32>
    %50 = arith.maximumf %48, %49 : vector<32x32xf32>
    %c112 = arith.constant 112 : index
    %c0_37 = arith.constant 0 : index
    %51 = vector.load %arg3[%c112, %c0_37] : memref<352x32xf32, #tpu.memory_space<vmem>>, vector<32x32xf32>
    %cst_38 = arith.constant dense<0.000000e+00> : vector<32x32xf32>
    %52 = tpu.matmul %50, %51, %cst_38 {dimension_numbers = #tpu.dot_dimension_numbers<[1], [0], [0], [1], [0, 0, 1, 1], [], []>} : vector<32x32xf32>, vector<32x32xf32>, vector<32x32xf32> -> vector<32x32xf32>
    %c144 = arith.constant 144 : index
    %c0_39 = arith.constant 0 : index
    %53 = vector.load %arg3[%c144, %c0_39] : memref<352x32xf32, #tpu.memory_space<vmem>>, vector<32x32xf32>
    %cst_40 = arith.constant dense<0.000000e+00> : vector<32x32xf32>
    %54 = tpu.matmul %50, %53, %cst_40 {dimension_numbers = #tpu.dot_dimension_numbers<[1], [0], [0], [1], [0, 0, 1, 1], [], []>} : vector<32x32xf32>, vector<32x32xf32>, vector<32x32xf32> -> vector<32x32xf32>
    %c0_41 = arith.constant 0 : index
    %c0_42 = arith.constant 0 : index
    %55 = vector.load %arg1[%c0_41, %c0_42] : memref<288x32xf32, #tpu.memory_space<vmem>>, vector<32x32xf32>
    %cst_43 = arith.constant dense<0.000000e+00> : vector<32x32xf32>
    %56 = tpu.matmul %55, %54, %cst_43 {dimension_numbers = #tpu.dot_dimension_numbers<[1], [0], [0], [1], [0, 0, 1, 1], [], []>} : vector<32x32xf32>, vector<32x32xf32>, vector<32x32xf32> -> vector<32x32xf32>
    %57 = arith.addf %52, %56 : vector<32x32xf32>
    %c176 = arith.constant 176 : index
    %c0_44 = arith.constant 0 : index
    %58 = vector.load %arg3[%c176, %c0_44] : memref<352x32xf32, #tpu.memory_space<vmem>>, vector<32x32xf32>
    %cst_45 = arith.constant dense<0.000000e+00> : vector<32x32xf32>
    %59 = tpu.matmul %50, %58, %cst_45 {dimension_numbers = #tpu.dot_dimension_numbers<[1], [0], [0], [1], [0, 0, 1, 1], [], []>} : vector<32x32xf32>, vector<32x32xf32>, vector<32x32xf32> -> vector<32x32xf32>
    %c32_46 = arith.constant 32 : index
    %c0_47 = arith.constant 0 : index
    %60 = vector.load %arg1[%c32_46, %c0_47] : memref<288x32xf32, #tpu.memory_space<vmem>>, vector<32x32xf32>
    %cst_48 = arith.constant dense<0.000000e+00> : vector<32x32xf32>
    %61 = tpu.matmul %60, %59, %cst_48 {dimension_numbers = #tpu.dot_dimension_numbers<[1], [0], [0], [1], [0, 0, 1, 1], [], []>} : vector<32x32xf32>, vector<32x32xf32>, vector<32x32xf32> -> vector<32x32xf32>
    %62 = arith.addf %57, %61 : vector<32x32xf32>
    %c208 = arith.constant 208 : index
    %c0_49 = arith.constant 0 : index
    %63 = vector.load %arg3[%c208, %c0_49] : memref<352x32xf32, #tpu.memory_space<vmem>>, vector<32x32xf32>
    %cst_50 = arith.constant dense<0.000000e+00> : vector<32x32xf32>
    %64 = tpu.matmul %50, %63, %cst_50 {dimension_numbers = #tpu.dot_dimension_numbers<[1], [0], [0], [1], [0, 0, 1, 1], [], []>} : vector<32x32xf32>, vector<32x32xf32>, vector<32x32xf32> -> vector<32x32xf32>
    %c64_51 = arith.constant 64 : index
    %c0_52 = arith.constant 0 : index
    %65 = vector.load %arg1[%c64_51, %c0_52] : memref<288x32xf32, #tpu.memory_space<vmem>>, vector<32x32xf32>
    %cst_53 = arith.constant dense<0.000000e+00> : vector<32x32xf32>
    %66 = tpu.matmul %65, %64, %cst_53 {dimension_numbers = #tpu.dot_dimension_numbers<[1], [0], [0], [1], [0, 0, 1, 1], [], []>} : vector<32x32xf32>, vector<32x32xf32>, vector<32x32xf32> -> vector<32x32xf32>
    %67 = arith.addf %62, %66 : vector<32x32xf32>
    %c240 = arith.constant 240 : index
    %c0_54 = arith.constant 0 : index
    %68 = vector.load %arg3[%c240, %c0_54] : memref<352x32xf32, #tpu.memory_space<vmem>>, vector<32x32xf32>
    %cst_55 = arith.constant dense<0.000000e+00> : vector<32x32xf32>
    %69 = tpu.matmul %50, %68, %cst_55 {dimension_numbers = #tpu.dot_dimension_numbers<[1], [0], [0], [1], [0, 0, 1, 1], [], []>} : vector<32x32xf32>, vector<32x32xf32>, vector<32x32xf32> -> vector<32x32xf32>
    %c96_56 = arith.constant 96 : index
    %c0_57 = arith.constant 0 : index
    %70 = vector.load %arg1[%c96_56, %c0_57] : memref<288x32xf32, #tpu.memory_space<vmem>>, vector<32x32xf32>
    %cst_58 = arith.constant dense<0.000000e+00> : vector<32x32xf32>
    %71 = tpu.matmul %70, %69, %cst_58 {dimension_numbers = #tpu.dot_dimension_numbers<[1], [0], [0], [1], [0, 0, 1, 1], [], []>} : vector<32x32xf32>, vector<32x32xf32>, vector<32x32xf32> -> vector<32x32xf32>
    %72 = arith.addf %67, %71 : vector<32x32xf32>
    %c272 = arith.constant 272 : index
    %c0_59 = arith.constant 0 : index
    %73 = vector.load %arg3[%c272, %c0_59] : memref<352x32xf32, #tpu.memory_space<vmem>>, vector<32x32xf32>
    %cst_60 = arith.constant dense<0.000000e+00> : vector<32x32xf32>
    %74 = tpu.matmul %50, %73, %cst_60 {dimension_numbers = #tpu.dot_dimension_numbers<[1], [0], [0], [1], [0, 0, 1, 1], [], []>} : vector<32x32xf32>, vector<32x32xf32>, vector<32x32xf32> -> vector<32x32xf32>
    %c128_61 = arith.constant 128 : index
    %c0_62 = arith.constant 0 : index
    %75 = vector.load %arg1[%c128_61, %c0_62] : memref<288x32xf32, #tpu.memory_space<vmem>>, vector<32x32xf32>
    %cst_63 = arith.constant dense<0.000000e+00> : vector<32x32xf32>
    %76 = tpu.matmul %75, %74, %cst_63 {dimension_numbers = #tpu.dot_dimension_numbers<[1], [0], [0], [1], [0, 0, 1, 1], [], []>} : vector<32x32xf32>, vector<32x32xf32>, vector<32x32xf32> -> vector<32x32xf32>
    %77 = arith.addf %72, %76 : vector<32x32xf32>
    %c304 = arith.constant 304 : index
    %c0_64 = arith.constant 0 : index
    %78 = vector.load %arg3[%c304, %c0_64] : memref<352x32xf32, #tpu.memory_space<vmem>>, vector<32x32xf32>
    %cst_65 = arith.constant dense<0.000000e+00> : vector<32x32xf32>
    %79 = tpu.matmul %50, %78, %cst_65 {dimension_numbers = #tpu.dot_dimension_numbers<[1], [0], [0], [1], [0, 0, 1, 1], [], []>} : vector<32x32xf32>, vector<32x32xf32>, vector<32x32xf32> -> vector<32x32xf32>
    %c160_66 = arith.constant 160 : index
    %c0_67 = arith.constant 0 : index
    %80 = vector.load %arg1[%c160_66, %c0_67] : memref<288x32xf32, #tpu.memory_space<vmem>>, vector<32x32xf32>
    %cst_68 = arith.constant dense<0.000000e+00> : vector<32x32xf32>
    %81 = tpu.matmul %80, %79, %cst_68 {dimension_numbers = #tpu.dot_dimension_numbers<[1], [0], [0], [1], [0, 0, 1, 1], [], []>} : vector<32x32xf32>, vector<32x32xf32>, vector<32x32xf32> -> vector<32x32xf32>
    %82 = arith.addf %77, %81 : vector<32x32xf32>
    %c4 = arith.constant 4 : index
    %c0_69 = arith.constant 0 : index
    %83 = vector.load %arg2[%c4, %c0_69] : memref<24x128xf32, #tpu.memory_space<vmem>>, vector<1x128xf32>
    %84 = vector.extract_strided_slice %83 {offsets = [0, 0], sizes = [1, 32], strides = [1, 1]} : vector<1x128xf32> to vector<1x32xf32>
    %85 = vector.broadcast %84 : vector<1x32xf32> to vector<32x32xf32>
    %86 = arith.mulf %82, %85 : vector<32x32xf32>
    %c5 = arith.constant 5 : index
    %c0_70 = arith.constant 0 : index
    %87 = vector.load %arg2[%c5, %c0_70] : memref<24x128xf32, #tpu.memory_space<vmem>>, vector<1x128xf32>
    %88 = vector.extract_strided_slice %87 {offsets = [0, 0], sizes = [1, 32], strides = [1, 1]} : vector<1x128xf32> to vector<1x32xf32>
    %89 = vector.broadcast %88 : vector<1x32xf32> to vector<32x32xf32>
    %90 = arith.addf %86, %89 : vector<32x32xf32>
    %c336 = arith.constant 336 : index
    %c0_71 = arith.constant 0 : index
    %91 = vector.load %arg3[%c336, %c0_71] : memref<352x32xf32, #tpu.memory_space<vmem>>, vector<16x32xf32>
    %cst_72 = arith.constant dense<0.000000e+00> : vector<32x32xf32>
    %92 = tpu.matmul %8, %91, %cst_72 {dimension_numbers = #tpu.dot_dimension_numbers<[1], [0], [0], [1], [0, 0, 1, 1], [], []>} : vector<32x16xf32>, vector<16x32xf32>, vector<32x32xf32> -> vector<32x32xf32>
    %c6 = arith.constant 6 : index
    %c0_73 = arith.constant 0 : index
    %93 = vector.load %arg2[%c6, %c0_73] : memref<24x128xf32, #tpu.memory_space<vmem>>, vector<1x128xf32>
    %94 = vector.extract_strided_slice %93 {offsets = [0, 0], sizes = [1, 32], strides = [1, 1]} : vector<1x128xf32> to vector<1x32xf32>
    %95 = vector.broadcast %94 : vector<1x32xf32> to vector<32x32xf32>
    %96 = arith.addf %92, %95 : vector<32x32xf32>
    %97 = arith.addf %90, %96 : vector<32x32xf32>
    %cst_74 = arith.constant 0.000000e+00 : f32
    %98 = vector.broadcast %cst_74 : f32 to vector<32x32xf32>
    %99 = arith.maximumf %97, %98 : vector<32x32xf32>
    %c0_75 = arith.constant 0 : index
    %c0_76 = arith.constant 0 : index
    %100 = vector.load %arg4[%c0_75, %c0_76] : memref<704x64xf32, #tpu.memory_space<vmem>>, vector<32x64xf32>
    %cst_77 = arith.constant dense<0.000000e+00> : vector<32x64xf32>
    %101 = tpu.matmul %99, %100, %cst_77 {dimension_numbers = #tpu.dot_dimension_numbers<[1], [0], [0], [1], [0, 0, 1, 1], [], []>} : vector<32x32xf32>, vector<32x64xf32>, vector<32x64xf32> -> vector<32x64xf32>
    %c32_78 = arith.constant 32 : index
    %c0_79 = arith.constant 0 : index
    %102 = vector.load %arg4[%c32_78, %c0_79] : memref<704x64xf32, #tpu.memory_space<vmem>>, vector<32x64xf32>
    %cst_80 = arith.constant dense<0.000000e+00> : vector<32x64xf32>
    %103 = tpu.matmul %99, %102, %cst_80 {dimension_numbers = #tpu.dot_dimension_numbers<[1], [0], [0], [1], [0, 0, 1, 1], [], []>} : vector<32x32xf32>, vector<32x64xf32>, vector<32x64xf32> -> vector<32x64xf32>
    %c32_81 = arith.constant 32 : index
    %c0_82 = arith.constant 0 : index
    %104 = vector.load %arg1[%c32_81, %c0_82] : memref<288x32xf32, #tpu.memory_space<vmem>>, vector<32x32xf32>
    %cst_83 = arith.constant dense<0.000000e+00> : vector<32x64xf32>
    %105 = tpu.matmul %104, %103, %cst_83 {dimension_numbers = #tpu.dot_dimension_numbers<[1], [0], [0], [1], [0, 0, 1, 1], [], []>} : vector<32x32xf32>, vector<32x64xf32>, vector<32x64xf32> -> vector<32x64xf32>
    %106 = arith.addf %101, %105 : vector<32x64xf32>
    %c64_84 = arith.constant 64 : index
    %c0_85 = arith.constant 0 : index
    %107 = vector.load %arg4[%c64_84, %c0_85] : memref<704x64xf32, #tpu.memory_space<vmem>>, vector<32x64xf32>
    %cst_86 = arith.constant dense<0.000000e+00> : vector<32x64xf32>
    %108 = tpu.matmul %99, %107, %cst_86 {dimension_numbers = #tpu.dot_dimension_numbers<[1], [0], [0], [1], [0, 0, 1, 1], [], []>} : vector<32x32xf32>, vector<32x64xf32>, vector<32x64xf32> -> vector<32x64xf32>
    %c96_87 = arith.constant 96 : index
    %c0_88 = arith.constant 0 : index
    %109 = vector.load %arg1[%c96_87, %c0_88] : memref<288x32xf32, #tpu.memory_space<vmem>>, vector<32x32xf32>
    %cst_89 = arith.constant dense<0.000000e+00> : vector<32x64xf32>
    %110 = tpu.matmul %109, %108, %cst_89 {dimension_numbers = #tpu.dot_dimension_numbers<[1], [0], [0], [1], [0, 0, 1, 1], [], []>} : vector<32x32xf32>, vector<32x64xf32>, vector<32x64xf32> -> vector<32x64xf32>
    %111 = arith.addf %106, %110 : vector<32x64xf32>
    %c96_90 = arith.constant 96 : index
    %c0_91 = arith.constant 0 : index
    %112 = vector.load %arg4[%c96_90, %c0_91] : memref<704x64xf32, #tpu.memory_space<vmem>>, vector<32x64xf32>
    %cst_92 = arith.constant dense<0.000000e+00> : vector<32x64xf32>
    %113 = tpu.matmul %99, %112, %cst_92 {dimension_numbers = #tpu.dot_dimension_numbers<[1], [0], [0], [1], [0, 0, 1, 1], [], []>} : vector<32x32xf32>, vector<32x64xf32>, vector<32x64xf32> -> vector<32x64xf32>
    %c160_93 = arith.constant 160 : index
    %c0_94 = arith.constant 0 : index
    %114 = vector.load %arg1[%c160_93, %c0_94] : memref<288x32xf32, #tpu.memory_space<vmem>>, vector<32x32xf32>
    %cst_95 = arith.constant dense<0.000000e+00> : vector<32x64xf32>
    %115 = tpu.matmul %114, %113, %cst_95 {dimension_numbers = #tpu.dot_dimension_numbers<[1], [0], [0], [1], [0, 0, 1, 1], [], []>} : vector<32x32xf32>, vector<32x64xf32>, vector<32x64xf32> -> vector<32x64xf32>
    %116 = arith.addf %111, %115 : vector<32x64xf32>
    %c128_96 = arith.constant 128 : index
    %c0_97 = arith.constant 0 : index
    %117 = vector.load %arg4[%c128_96, %c0_97] : memref<704x64xf32, #tpu.memory_space<vmem>>, vector<32x64xf32>
    %cst_98 = arith.constant dense<0.000000e+00> : vector<32x64xf32>
    %118 = tpu.matmul %99, %117, %cst_98 {dimension_numbers = #tpu.dot_dimension_numbers<[1], [0], [0], [1], [0, 0, 1, 1], [], []>} : vector<32x32xf32>, vector<32x64xf32>, vector<32x64xf32> -> vector<32x64xf32>
    %c192 = arith.constant 192 : index
    %c0_99 = arith.constant 0 : index
    %119 = vector.load %arg1[%c192, %c0_99] : memref<288x32xf32, #tpu.memory_space<vmem>>, vector<32x32xf32>
    %cst_100 = arith.constant dense<0.000000e+00> : vector<32x64xf32>
    %120 = tpu.matmul %119, %118, %cst_100 {dimension_numbers = #tpu.dot_dimension_numbers<[1], [0], [0], [1], [0, 0, 1, 1], [], []>} : vector<32x32xf32>, vector<32x64xf32>, vector<32x64xf32> -> vector<32x64xf32>
    %121 = arith.addf %116, %120 : vector<32x64xf32>
    %c160_101 = arith.constant 160 : index
    %c0_102 = arith.constant 0 : index
    %122 = vector.load %arg4[%c160_101, %c0_102] : memref<704x64xf32, #tpu.memory_space<vmem>>, vector<32x64xf32>
    %cst_103 = arith.constant dense<0.000000e+00> : vector<32x64xf32>
    %123 = tpu.matmul %99, %122, %cst_103 {dimension_numbers = #tpu.dot_dimension_numbers<[1], [0], [0], [1], [0, 0, 1, 1], [], []>} : vector<32x32xf32>, vector<32x64xf32>, vector<32x64xf32> -> vector<32x64xf32>
    %c224 = arith.constant 224 : index
    %c0_104 = arith.constant 0 : index
    %124 = vector.load %arg1[%c224, %c0_104] : memref<288x32xf32, #tpu.memory_space<vmem>>, vector<32x32xf32>
    %cst_105 = arith.constant dense<0.000000e+00> : vector<32x64xf32>
    %125 = tpu.matmul %124, %123, %cst_105 {dimension_numbers = #tpu.dot_dimension_numbers<[1], [0], [0], [1], [0, 0, 1, 1], [], []>} : vector<32x32xf32>, vector<32x64xf32>, vector<32x64xf32> -> vector<32x64xf32>
    %126 = arith.addf %121, %125 : vector<32x64xf32>
    %c192_106 = arith.constant 192 : index
    %c0_107 = arith.constant 0 : index
    %127 = vector.load %arg4[%c192_106, %c0_107] : memref<704x64xf32, #tpu.memory_space<vmem>>, vector<32x64xf32>
    %cst_108 = arith.constant dense<0.000000e+00> : vector<32x64xf32>
    %128 = tpu.matmul %99, %127, %cst_108 {dimension_numbers = #tpu.dot_dimension_numbers<[1], [0], [0], [1], [0, 0, 1, 1], [], []>} : vector<32x32xf32>, vector<32x64xf32>, vector<32x64xf32> -> vector<32x64xf32>
    %c256 = arith.constant 256 : index
    %c0_109 = arith.constant 0 : index
    %129 = vector.load %arg1[%c256, %c0_109] : memref<288x32xf32, #tpu.memory_space<vmem>>, vector<32x32xf32>
    %cst_110 = arith.constant dense<0.000000e+00> : vector<32x64xf32>
    %130 = tpu.matmul %129, %128, %cst_110 {dimension_numbers = #tpu.dot_dimension_numbers<[1], [0], [0], [1], [0, 0, 1, 1], [], []>} : vector<32x32xf32>, vector<32x64xf32>, vector<32x64xf32> -> vector<32x64xf32>
    %131 = arith.addf %126, %130 : vector<32x64xf32>
    %c7 = arith.constant 7 : index
    %c0_111 = arith.constant 0 : index
    %132 = vector.load %arg2[%c7, %c0_111] : memref<24x128xf32, #tpu.memory_space<vmem>>, vector<1x128xf32>
    %133 = vector.extract_strided_slice %132 {offsets = [0, 0], sizes = [1, 64], strides = [1, 1]} : vector<1x128xf32> to vector<1x64xf32>
    %134 = vector.broadcast %133 : vector<1x64xf32> to vector<32x64xf32>
    %135 = arith.mulf %131, %134 : vector<32x64xf32>
    %c8 = arith.constant 8 : index
    %c0_112 = arith.constant 0 : index
    %136 = vector.load %arg2[%c8, %c0_112] : memref<24x128xf32, #tpu.memory_space<vmem>>, vector<1x128xf32>
    %137 = vector.extract_strided_slice %136 {offsets = [0, 0], sizes = [1, 64], strides = [1, 1]} : vector<1x128xf32> to vector<1x64xf32>
    %138 = vector.broadcast %137 : vector<1x64xf32> to vector<32x64xf32>
    %139 = arith.addf %135, %138 : vector<32x64xf32>
    %cst_113 = arith.constant 0.000000e+00 : f32
    %140 = vector.broadcast %cst_113 : f32 to vector<32x64xf32>
    %141 = arith.maximumf %139, %140 : vector<32x64xf32>
    %c224_114 = arith.constant 224 : index
    %c0_115 = arith.constant 0 : index
    %142 = vector.load %arg4[%c224_114, %c0_115] : memref<704x64xf32, #tpu.memory_space<vmem>>, vector<64x64xf32>
    %cst_116 = arith.constant dense<0.000000e+00> : vector<32x64xf32>
    %143 = tpu.matmul %141, %142, %cst_116 {dimension_numbers = #tpu.dot_dimension_numbers<[1], [0], [0], [1], [0, 0, 1, 1], [], []>} : vector<32x64xf32>, vector<64x64xf32>, vector<32x64xf32> -> vector<32x64xf32>
    %c288 = arith.constant 288 : index
    %c0_117 = arith.constant 0 : index
    %144 = vector.load %arg4[%c288, %c0_117] : memref<704x64xf32, #tpu.memory_space<vmem>>, vector<64x64xf32>
    %cst_118 = arith.constant dense<0.000000e+00> : vector<32x64xf32>
    %145 = tpu.matmul %141, %144, %cst_118 {dimension_numbers = #tpu.dot_dimension_numbers<[1], [0], [0], [1], [0, 0, 1, 1], [], []>} : vector<32x64xf32>, vector<64x64xf32>, vector<32x64xf32> -> vector<32x64xf32>
    %c32_119 = arith.constant 32 : index
    %c0_120 = arith.constant 0 : index
    %146 = vector.load %arg1[%c32_119, %c0_120] : memref<288x32xf32, #tpu.memory_space<vmem>>, vector<32x32xf32>
    %cst_121 = arith.constant dense<0.000000e+00> : vector<32x64xf32>
    %147 = tpu.matmul %146, %145, %cst_121 {dimension_numbers = #tpu.dot_dimension_numbers<[1], [0], [0], [1], [0, 0, 1, 1], [], []>} : vector<32x32xf32>, vector<32x64xf32>, vector<32x64xf32> -> vector<32x64xf32>
    %148 = arith.addf %143, %147 : vector<32x64xf32>
    %c352 = arith.constant 352 : index
    %c0_122 = arith.constant 0 : index
    %149 = vector.load %arg4[%c352, %c0_122] : memref<704x64xf32, #tpu.memory_space<vmem>>, vector<64x64xf32>
    %cst_123 = arith.constant dense<0.000000e+00> : vector<32x64xf32>
    %150 = tpu.matmul %141, %149, %cst_123 {dimension_numbers = #tpu.dot_dimension_numbers<[1], [0], [0], [1], [0, 0, 1, 1], [], []>} : vector<32x64xf32>, vector<64x64xf32>, vector<32x64xf32> -> vector<32x64xf32>
    %c96_124 = arith.constant 96 : index
    %c0_125 = arith.constant 0 : index
    %151 = vector.load %arg1[%c96_124, %c0_125] : memref<288x32xf32, #tpu.memory_space<vmem>>, vector<32x32xf32>
    %cst_126 = arith.constant dense<0.000000e+00> : vector<32x64xf32>
    %152 = tpu.matmul %151, %150, %cst_126 {dimension_numbers = #tpu.dot_dimension_numbers<[1], [0], [0], [1], [0, 0, 1, 1], [], []>} : vector<32x32xf32>, vector<32x64xf32>, vector<32x64xf32> -> vector<32x64xf32>
    %153 = arith.addf %148, %152 : vector<32x64xf32>
    %c416 = arith.constant 416 : index
    %c0_127 = arith.constant 0 : index
    %154 = vector.load %arg4[%c416, %c0_127] : memref<704x64xf32, #tpu.memory_space<vmem>>, vector<64x64xf32>
    %cst_128 = arith.constant dense<0.000000e+00> : vector<32x64xf32>
    %155 = tpu.matmul %141, %154, %cst_128 {dimension_numbers = #tpu.dot_dimension_numbers<[1], [0], [0], [1], [0, 0, 1, 1], [], []>} : vector<32x64xf32>, vector<64x64xf32>, vector<32x64xf32> -> vector<32x64xf32>
    %c160_129 = arith.constant 160 : index
    %c0_130 = arith.constant 0 : index
    %156 = vector.load %arg1[%c160_129, %c0_130] : memref<288x32xf32, #tpu.memory_space<vmem>>, vector<32x32xf32>
    %cst_131 = arith.constant dense<0.000000e+00> : vector<32x64xf32>
    %157 = tpu.matmul %156, %155, %cst_131 {dimension_numbers = #tpu.dot_dimension_numbers<[1], [0], [0], [1], [0, 0, 1, 1], [], []>} : vector<32x32xf32>, vector<32x64xf32>, vector<32x64xf32> -> vector<32x64xf32>
    %158 = arith.addf %153, %157 : vector<32x64xf32>
    %c480 = arith.constant 480 : index
    %c0_132 = arith.constant 0 : index
    %159 = vector.load %arg4[%c480, %c0_132] : memref<704x64xf32, #tpu.memory_space<vmem>>, vector<64x64xf32>
    %cst_133 = arith.constant dense<0.000000e+00> : vector<32x64xf32>
    %160 = tpu.matmul %141, %159, %cst_133 {dimension_numbers = #tpu.dot_dimension_numbers<[1], [0], [0], [1], [0, 0, 1, 1], [], []>} : vector<32x64xf32>, vector<64x64xf32>, vector<32x64xf32> -> vector<32x64xf32>
    %c192_134 = arith.constant 192 : index
    %c0_135 = arith.constant 0 : index
    %161 = vector.load %arg1[%c192_134, %c0_135] : memref<288x32xf32, #tpu.memory_space<vmem>>, vector<32x32xf32>
    %cst_136 = arith.constant dense<0.000000e+00> : vector<32x64xf32>
    %162 = tpu.matmul %161, %160, %cst_136 {dimension_numbers = #tpu.dot_dimension_numbers<[1], [0], [0], [1], [0, 0, 1, 1], [], []>} : vector<32x32xf32>, vector<32x64xf32>, vector<32x64xf32> -> vector<32x64xf32>
    %163 = arith.addf %158, %162 : vector<32x64xf32>
    %c544 = arith.constant 544 : index
    %c0_137 = arith.constant 0 : index
    %164 = vector.load %arg4[%c544, %c0_137] : memref<704x64xf32, #tpu.memory_space<vmem>>, vector<64x64xf32>
    %cst_138 = arith.constant dense<0.000000e+00> : vector<32x64xf32>
    %165 = tpu.matmul %141, %164, %cst_138 {dimension_numbers = #tpu.dot_dimension_numbers<[1], [0], [0], [1], [0, 0, 1, 1], [], []>} : vector<32x64xf32>, vector<64x64xf32>, vector<32x64xf32> -> vector<32x64xf32>
    %c224_139 = arith.constant 224 : index
    %c0_140 = arith.constant 0 : index
    %166 = vector.load %arg1[%c224_139, %c0_140] : memref<288x32xf32, #tpu.memory_space<vmem>>, vector<32x32xf32>
    %cst_141 = arith.constant dense<0.000000e+00> : vector<32x64xf32>
    %167 = tpu.matmul %166, %165, %cst_141 {dimension_numbers = #tpu.dot_dimension_numbers<[1], [0], [0], [1], [0, 0, 1, 1], [], []>} : vector<32x32xf32>, vector<32x64xf32>, vector<32x64xf32> -> vector<32x64xf32>
    %168 = arith.addf %163, %167 : vector<32x64xf32>
    %c608 = arith.constant 608 : index
    %c0_142 = arith.constant 0 : index
    %169 = vector.load %arg4[%c608, %c0_142] : memref<704x64xf32, #tpu.memory_space<vmem>>, vector<64x64xf32>
    %cst_143 = arith.constant dense<0.000000e+00> : vector<32x64xf32>
    %170 = tpu.matmul %141, %169, %cst_143 {dimension_numbers = #tpu.dot_dimension_numbers<[1], [0], [0], [1], [0, 0, 1, 1], [], []>} : vector<32x64xf32>, vector<64x64xf32>, vector<32x64xf32> -> vector<32x64xf32>
    %c256_144 = arith.constant 256 : index
    %c0_145 = arith.constant 0 : index
    %171 = vector.load %arg1[%c256_144, %c0_145] : memref<288x32xf32, #tpu.memory_space<vmem>>, vector<32x32xf32>
    %cst_146 = arith.constant dense<0.000000e+00> : vector<32x64xf32>
    %172 = tpu.matmul %171, %170, %cst_146 {dimension_numbers = #tpu.dot_dimension_numbers<[1], [0], [0], [1], [0, 0, 1, 1], [], []>} : vector<32x32xf32>, vector<32x64xf32>, vector<32x64xf32> -> vector<32x64xf32>
    %173 = arith.addf %168, %172 : vector<32x64xf32>
    %c9 = arith.constant 9 : index
    %c0_147 = arith.constant 0 : index
    %174 = vector.load %arg2[%c9, %c0_147] : memref<24x128xf32, #tpu.memory_space<vmem>>, vector<1x128xf32>
    %175 = vector.extract_strided_slice %174 {offsets = [0, 0], sizes = [1, 64], strides = [1, 1]} : vector<1x128xf32> to vector<1x64xf32>
    %176 = vector.broadcast %175 : vector<1x64xf32> to vector<32x64xf32>
    %177 = arith.mulf %173, %176 : vector<32x64xf32>
    %c10 = arith.constant 10 : index
    %c0_148 = arith.constant 0 : index
    %178 = vector.load %arg2[%c10, %c0_148] : memref<24x128xf32, #tpu.memory_space<vmem>>, vector<1x128xf32>
    %179 = vector.extract_strided_slice %178 {offsets = [0, 0], sizes = [1, 64], strides = [1, 1]} : vector<1x128xf32> to vector<1x64xf32>
    %180 = vector.broadcast %179 : vector<1x64xf32> to vector<32x64xf32>
    %181 = arith.addf %177, %180 : vector<32x64xf32>
    %c672 = arith.constant 672 : index
    %c0_149 = arith.constant 0 : index
    %182 = vector.load %arg4[%c672, %c0_149] : memref<704x64xf32, #tpu.memory_space<vmem>>, vector<32x64xf32>
    %cst_150 = arith.constant dense<0.000000e+00> : vector<32x64xf32>
    %183 = tpu.matmul %99, %182, %cst_150 {dimension_numbers = #tpu.dot_dimension_numbers<[1], [0], [0], [1], [0, 0, 1, 1], [], []>} : vector<32x32xf32>, vector<32x64xf32>, vector<32x64xf32> -> vector<32x64xf32>
    %c11 = arith.constant 11 : index
    %c0_151 = arith.constant 0 : index
    %184 = vector.load %arg2[%c11, %c0_151] : memref<24x128xf32, #tpu.memory_space<vmem>>, vector<1x128xf32>
    %185 = vector.extract_strided_slice %184 {offsets = [0, 0], sizes = [1, 64], strides = [1, 1]} : vector<1x128xf32> to vector<1x64xf32>
    %186 = vector.broadcast %185 : vector<1x64xf32> to vector<32x64xf32>
    %187 = arith.addf %183, %186 : vector<32x64xf32>
    %188 = arith.addf %181, %187 : vector<32x64xf32>
    %cst_152 = arith.constant 0.000000e+00 : f32
    %189 = vector.broadcast %cst_152 : f32 to vector<32x64xf32>
    %190 = arith.maximumf %188, %189 : vector<32x64xf32>
    %c0_153 = arith.constant 0 : index
    %c0_154 = arith.constant 0 : index
    %191 = vector.load %arg5[%c0_153, %c0_154] : memref<832x128xf32, #tpu.memory_space<vmem>>, vector<64x128xf32>
    %cst_155 = arith.constant dense<0.000000e+00> : vector<32x128xf32>
    %192 = tpu.matmul %190, %191, %cst_155 {dimension_numbers = #tpu.dot_dimension_numbers<[1], [0], [0], [1], [0, 0, 1, 1], [], []>} : vector<32x64xf32>, vector<64x128xf32>, vector<32x128xf32> -> vector<32x128xf32>
    %c64_156 = arith.constant 64 : index
    %c0_157 = arith.constant 0 : index
    %193 = vector.load %arg5[%c64_156, %c0_157] : memref<832x128xf32, #tpu.memory_space<vmem>>, vector<64x128xf32>
    %cst_158 = arith.constant dense<0.000000e+00> : vector<32x128xf32>
    %194 = tpu.matmul %190, %193, %cst_158 {dimension_numbers = #tpu.dot_dimension_numbers<[1], [0], [0], [1], [0, 0, 1, 1], [], []>} : vector<32x64xf32>, vector<64x128xf32>, vector<32x128xf32> -> vector<32x128xf32>
    %c96_159 = arith.constant 96 : index
    %c0_160 = arith.constant 0 : index
    %195 = vector.load %arg1[%c96_159, %c0_160] : memref<288x32xf32, #tpu.memory_space<vmem>>, vector<32x32xf32>
    %cst_161 = arith.constant dense<0.000000e+00> : vector<32x128xf32>
    %196 = tpu.matmul %195, %194, %cst_161 {dimension_numbers = #tpu.dot_dimension_numbers<[1], [0], [0], [1], [0, 0, 1, 1], [], []>} : vector<32x32xf32>, vector<32x128xf32>, vector<32x128xf32> -> vector<32x128xf32>
    %197 = arith.addf %192, %196 : vector<32x128xf32>
    %c128_162 = arith.constant 128 : index
    %c0_163 = arith.constant 0 : index
    %198 = vector.load %arg5[%c128_162, %c0_163] : memref<832x128xf32, #tpu.memory_space<vmem>>, vector<64x128xf32>
    %cst_164 = arith.constant dense<0.000000e+00> : vector<32x128xf32>
    %199 = tpu.matmul %190, %198, %cst_164 {dimension_numbers = #tpu.dot_dimension_numbers<[1], [0], [0], [1], [0, 0, 1, 1], [], []>} : vector<32x64xf32>, vector<64x128xf32>, vector<32x128xf32> -> vector<32x128xf32>
    %c192_165 = arith.constant 192 : index
    %c0_166 = arith.constant 0 : index
    %200 = vector.load %arg1[%c192_165, %c0_166] : memref<288x32xf32, #tpu.memory_space<vmem>>, vector<32x32xf32>
    %cst_167 = arith.constant dense<0.000000e+00> : vector<32x128xf32>
    %201 = tpu.matmul %200, %199, %cst_167 {dimension_numbers = #tpu.dot_dimension_numbers<[1], [0], [0], [1], [0, 0, 1, 1], [], []>} : vector<32x32xf32>, vector<32x128xf32>, vector<32x128xf32> -> vector<32x128xf32>
    %202 = arith.addf %197, %201 : vector<32x128xf32>
    %c192_168 = arith.constant 192 : index
    %c0_169 = arith.constant 0 : index
    %203 = vector.load %arg5[%c192_168, %c0_169] : memref<832x128xf32, #tpu.memory_space<vmem>>, vector<64x128xf32>
    %cst_170 = arith.constant dense<0.000000e+00> : vector<32x128xf32>
    %204 = tpu.matmul %190, %203, %cst_170 {dimension_numbers = #tpu.dot_dimension_numbers<[1], [0], [0], [1], [0, 0, 1, 1], [], []>} : vector<32x64xf32>, vector<64x128xf32>, vector<32x128xf32> -> vector<32x128xf32>
    %c256_171 = arith.constant 256 : index
    %c0_172 = arith.constant 0 : index
    %205 = vector.load %arg1[%c256_171, %c0_172] : memref<288x32xf32, #tpu.memory_space<vmem>>, vector<32x32xf32>
    %cst_173 = arith.constant dense<0.000000e+00> : vector<32x128xf32>
    %206 = tpu.matmul %205, %204, %cst_173 {dimension_numbers = #tpu.dot_dimension_numbers<[1], [0], [0], [1], [0, 0, 1, 1], [], []>} : vector<32x32xf32>, vector<32x128xf32>, vector<32x128xf32> -> vector<32x128xf32>
    %207 = arith.addf %202, %206 : vector<32x128xf32>
    %c12 = arith.constant 12 : index
    %c0_174 = arith.constant 0 : index
    %208 = vector.load %arg2[%c12, %c0_174] : memref<24x128xf32, #tpu.memory_space<vmem>>, vector<1x128xf32>
    %209 = vector.broadcast %208 : vector<1x128xf32> to vector<32x128xf32>
    %210 = arith.mulf %207, %209 : vector<32x128xf32>
    %c13 = arith.constant 13 : index
    %c0_175 = arith.constant 0 : index
    %211 = vector.load %arg2[%c13, %c0_175] : memref<24x128xf32, #tpu.memory_space<vmem>>, vector<1x128xf32>
    %212 = vector.broadcast %211 : vector<1x128xf32> to vector<32x128xf32>
    %213 = arith.addf %210, %212 : vector<32x128xf32>
    %cst_176 = arith.constant 0.000000e+00 : f32
    %214 = vector.broadcast %cst_176 : f32 to vector<32x128xf32>
    %215 = arith.maximumf %213, %214 : vector<32x128xf32>
    %c256_177 = arith.constant 256 : index
    %c0_178 = arith.constant 0 : index
    %216 = vector.load %arg5[%c256_177, %c0_178] : memref<832x128xf32, #tpu.memory_space<vmem>>, vector<128x128xf32>
    %cst_179 = arith.constant dense<0.000000e+00> : vector<32x128xf32>
    %217 = tpu.matmul %215, %216, %cst_179 {dimension_numbers = #tpu.dot_dimension_numbers<[1], [0], [0], [1], [0, 0, 1, 1], [], []>} : vector<32x128xf32>, vector<128x128xf32>, vector<32x128xf32> -> vector<32x128xf32>
    %c384 = arith.constant 384 : index
    %c0_180 = arith.constant 0 : index
    %218 = vector.load %arg5[%c384, %c0_180] : memref<832x128xf32, #tpu.memory_space<vmem>>, vector<128x128xf32>
    %cst_181 = arith.constant dense<0.000000e+00> : vector<32x128xf32>
    %219 = tpu.matmul %215, %218, %cst_181 {dimension_numbers = #tpu.dot_dimension_numbers<[1], [0], [0], [1], [0, 0, 1, 1], [], []>} : vector<32x128xf32>, vector<128x128xf32>, vector<32x128xf32> -> vector<32x128xf32>
    %c96_182 = arith.constant 96 : index
    %c0_183 = arith.constant 0 : index
    %220 = vector.load %arg1[%c96_182, %c0_183] : memref<288x32xf32, #tpu.memory_space<vmem>>, vector<32x32xf32>
    %cst_184 = arith.constant dense<0.000000e+00> : vector<32x128xf32>
    %221 = tpu.matmul %220, %219, %cst_184 {dimension_numbers = #tpu.dot_dimension_numbers<[1], [0], [0], [1], [0, 0, 1, 1], [], []>} : vector<32x32xf32>, vector<32x128xf32>, vector<32x128xf32> -> vector<32x128xf32>
    %222 = arith.addf %217, %221 : vector<32x128xf32>
    %c512 = arith.constant 512 : index
    %c0_185 = arith.constant 0 : index
    %223 = vector.load %arg5[%c512, %c0_185] : memref<832x128xf32, #tpu.memory_space<vmem>>, vector<128x128xf32>
    %cst_186 = arith.constant dense<0.000000e+00> : vector<32x128xf32>
    %224 = tpu.matmul %215, %223, %cst_186 {dimension_numbers = #tpu.dot_dimension_numbers<[1], [0], [0], [1], [0, 0, 1, 1], [], []>} : vector<32x128xf32>, vector<128x128xf32>, vector<32x128xf32> -> vector<32x128xf32>
    %c192_187 = arith.constant 192 : index
    %c0_188 = arith.constant 0 : index
    %225 = vector.load %arg1[%c192_187, %c0_188] : memref<288x32xf32, #tpu.memory_space<vmem>>, vector<32x32xf32>
    %cst_189 = arith.constant dense<0.000000e+00> : vector<32x128xf32>
    %226 = tpu.matmul %225, %224, %cst_189 {dimension_numbers = #tpu.dot_dimension_numbers<[1], [0], [0], [1], [0, 0, 1, 1], [], []>} : vector<32x32xf32>, vector<32x128xf32>, vector<32x128xf32> -> vector<32x128xf32>
    %227 = arith.addf %222, %226 : vector<32x128xf32>
    %c640 = arith.constant 640 : index
    %c0_190 = arith.constant 0 : index
    %228 = vector.load %arg5[%c640, %c0_190] : memref<832x128xf32, #tpu.memory_space<vmem>>, vector<128x128xf32>
    %cst_191 = arith.constant dense<0.000000e+00> : vector<32x128xf32>
    %229 = tpu.matmul %215, %228, %cst_191 {dimension_numbers = #tpu.dot_dimension_numbers<[1], [0], [0], [1], [0, 0, 1, 1], [], []>} : vector<32x128xf32>, vector<128x128xf32>, vector<32x128xf32> -> vector<32x128xf32>
    %c256_192 = arith.constant 256 : index
    %c0_193 = arith.constant 0 : index
    %230 = vector.load %arg1[%c256_192, %c0_193] : memref<288x32xf32, #tpu.memory_space<vmem>>, vector<32x32xf32>
    %cst_194 = arith.constant dense<0.000000e+00> : vector<32x128xf32>
    %231 = tpu.matmul %230, %229, %cst_194 {dimension_numbers = #tpu.dot_dimension_numbers<[1], [0], [0], [1], [0, 0, 1, 1], [], []>} : vector<32x32xf32>, vector<32x128xf32>, vector<32x128xf32> -> vector<32x128xf32>
    %232 = arith.addf %227, %231 : vector<32x128xf32>
    %c14 = arith.constant 14 : index
    %c0_195 = arith.constant 0 : index
    %233 = vector.load %arg2[%c14, %c0_195] : memref<24x128xf32, #tpu.memory_space<vmem>>, vector<1x128xf32>
    %234 = vector.broadcast %233 : vector<1x128xf32> to vector<32x128xf32>
    %235 = arith.mulf %232, %234 : vector<32x128xf32>
    %c15 = arith.constant 15 : index
    %c0_196 = arith.constant 0 : index
    %236 = vector.load %arg2[%c15, %c0_196] : memref<24x128xf32, #tpu.memory_space<vmem>>, vector<1x128xf32>
    %237 = vector.broadcast %236 : vector<1x128xf32> to vector<32x128xf32>
    %238 = arith.addf %235, %237 : vector<32x128xf32>
    %c768 = arith.constant 768 : index
    %c0_197 = arith.constant 0 : index
    %239 = vector.load %arg5[%c768, %c0_197] : memref<832x128xf32, #tpu.memory_space<vmem>>, vector<64x128xf32>
    %cst_198 = arith.constant dense<0.000000e+00> : vector<32x128xf32>
    %240 = tpu.matmul %190, %239, %cst_198 {dimension_numbers = #tpu.dot_dimension_numbers<[1], [0], [0], [1], [0, 0, 1, 1], [], []>} : vector<32x64xf32>, vector<64x128xf32>, vector<32x128xf32> -> vector<32x128xf32>
    %c16_199 = arith.constant 16 : index
    %c0_200 = arith.constant 0 : index
    %241 = vector.load %arg2[%c16_199, %c0_200] : memref<24x128xf32, #tpu.memory_space<vmem>>, vector<1x128xf32>
    %242 = vector.broadcast %241 : vector<1x128xf32> to vector<32x128xf32>
    %243 = arith.addf %240, %242 : vector<32x128xf32>
    %244 = arith.addf %238, %243 : vector<32x128xf32>
    %cst_201 = arith.constant 0.000000e+00 : f32
    %245 = vector.broadcast %cst_201 : f32 to vector<32x128xf32>
    %246 = arith.maximumf %244, %245 : vector<32x128xf32>
    %c0_202 = arith.constant 0 : index
    %c0_203 = arith.constant 0 : index
    %247 = vector.load %arg6[%c0_202, %c0_203] : memref<384x128xf32, #tpu.memory_space<vmem>>, vector<128x128xf32>
    %cst_204 = arith.constant dense<0.000000e+00> : vector<32x128xf32>
    %248 = tpu.matmul %246, %247, %cst_204 {dimension_numbers = #tpu.dot_dimension_numbers<[1], [0], [0], [1], [0, 0, 1, 1], [], []>} : vector<32x128xf32>, vector<128x128xf32>, vector<32x128xf32> -> vector<32x128xf32>
    %c17 = arith.constant 17 : index
    %c0_205 = arith.constant 0 : index
    %249 = vector.load %arg2[%c17, %c0_205] : memref<24x128xf32, #tpu.memory_space<vmem>>, vector<1x128xf32>
    %250 = vector.broadcast %249 : vector<1x128xf32> to vector<32x128xf32>
    %251 = arith.addf %248, %250 : vector<32x128xf32>
    %252 = math.tanh %251 : vector<32x128xf32>
    %c18 = arith.constant 18 : index
    %c0_206 = arith.constant 0 : index
    %253 = vector.load %arg2[%c18, %c0_206] : memref<24x128xf32, #tpu.memory_space<vmem>>, vector<1x128xf32>
    %254 = vector.broadcast %253 : vector<1x128xf32> to vector<32x128xf32>
    %255 = arith.mulf %252, %254 : vector<32x128xf32>
    %cst_207 = arith.constant dense<0.000000e+00> : vector<32xf32>
    %256 = vector.multi_reduction <add>, %255, %cst_207 [1] : vector<32x128xf32> to vector<32xf32>
    %257 = vector.shape_cast %256 : vector<32xf32> to vector<32x1xf32>
    %c19 = arith.constant 19 : index
    %c0_208 = arith.constant 0 : index
    %258 = vector.load %arg2[%c19, %c0_208] : memref<24x128xf32, #tpu.memory_space<vmem>>, vector<1x128xf32>
    %259 = vector.extract_strided_slice %258 {offsets = [0, 0], sizes = [1, 1], strides = [1, 1]} : vector<1x128xf32> to vector<1x1xf32>
    %260 = vector.broadcast %259 : vector<1x1xf32> to vector<32x1xf32>
    %261 = arith.addf %257, %260 : vector<32x1xf32>
    %262 = vector.shape_cast %261 : vector<32x1xf32> to vector<2x16x1xf32>
    %cst_209 = arith.constant dense<0xFF800000> : vector<2x1xf32>
    %263 = vector.multi_reduction <maximumf>, %262, %cst_209 [1] : vector<2x16x1xf32> to vector<2x1xf32>
    %264 = vector.shape_cast %263 : vector<2x1xf32> to vector<2x1x1xf32>
    %265 = vector.broadcast %264 : vector<2x1x1xf32> to vector<2x16x1xf32>
    %266 = arith.subf %262, %265 : vector<2x16x1xf32>
    %267 = math.exp %266 : vector<2x16x1xf32>
    %268 = vector.shape_cast %246 : vector<32x128xf32> to vector<2x16x128xf32>
    %269 = vector.broadcast %267 : vector<2x16x1xf32> to vector<2x16x128xf32>
    %270 = arith.mulf %269, %268 : vector<2x16x128xf32>
    %cst_210 = arith.constant dense<0.000000e+00> : vector<2x128xf32>
    %271 = vector.multi_reduction <add>, %270, %cst_210 [1] : vector<2x16x128xf32> to vector<2x128xf32>
    %cst_211 = arith.constant dense<0.000000e+00> : vector<2x1xf32>
    %272 = vector.multi_reduction <add>, %267, %cst_211 [1] : vector<2x16x1xf32> to vector<2x1xf32>
    %273 = vector.broadcast %272 : vector<2x1xf32> to vector<2x128xf32>
    %274 = arith.divf %271, %273 : vector<2x128xf32>
    %c128_212 = arith.constant 128 : index
    %c0_213 = arith.constant 0 : index
    %275 = vector.load %arg6[%c128_212, %c0_213] : memref<384x128xf32, #tpu.memory_space<vmem>>, vector<128x128xf32>
    %cst_214 = arith.constant dense<0.000000e+00> : vector<2x128xf32>
    %276 = tpu.matmul %274, %275, %cst_214 {dimension_numbers = #tpu.dot_dimension_numbers<[1], [0], [0], [1], [0, 0, 1, 1], [], []>} : vector<2x128xf32>, vector<128x128xf32>, vector<2x128xf32> -> vector<2x128xf32>
    %c20 = arith.constant 20 : index
    %c0_215 = arith.constant 0 : index
    %277 = vector.load %arg2[%c20, %c0_215] : memref<24x128xf32, #tpu.memory_space<vmem>>, vector<1x128xf32>
    %278 = vector.broadcast %277 : vector<1x128xf32> to vector<2x128xf32>
    %279 = arith.addf %276, %278 : vector<2x128xf32>
    %cst_216 = arith.constant 0.000000e+00 : f32
    %280 = vector.broadcast %cst_216 : f32 to vector<2x128xf32>
    %281 = arith.maximumf %279, %280 : vector<2x128xf32>
    %c256_217 = arith.constant 256 : index
    %c0_218 = arith.constant 0 : index
    %282 = vector.load %arg6[%c256_217, %c0_218] : memref<384x128xf32, #tpu.memory_space<vmem>>, vector<128x128xf32>
    %cst_219 = arith.constant dense<0.000000e+00> : vector<2x128xf32>
    %283 = tpu.matmul %281, %282, %cst_219 {dimension_numbers = #tpu.dot_dimension_numbers<[1], [0], [0], [1], [0, 0, 1, 1], [], []>} : vector<2x128xf32>, vector<128x128xf32>, vector<2x128xf32> -> vector<2x128xf32>
    %c21 = arith.constant 21 : index
    %c0_220 = arith.constant 0 : index
    %284 = vector.load %arg2[%c21, %c0_220] : memref<24x128xf32, #tpu.memory_space<vmem>>, vector<1x128xf32>
    %285 = vector.broadcast %284 : vector<1x128xf32> to vector<2x128xf32>
    %286 = arith.addf %283, %285 : vector<2x128xf32>
    %cst_221 = arith.constant 0.000000e+00 : f32
    %287 = vector.broadcast %cst_221 : f32 to vector<2x128xf32>
    %288 = arith.maximumf %286, %287 : vector<2x128xf32>
    %c22 = arith.constant 22 : index
    %c0_222 = arith.constant 0 : index
    %289 = vector.load %arg2[%c22, %c0_222] : memref<24x128xf32, #tpu.memory_space<vmem>>, vector<1x128xf32>
    %290 = vector.broadcast %289 : vector<1x128xf32> to vector<2x128xf32>
    %291 = arith.mulf %288, %290 : vector<2x128xf32>
    %cst_223 = arith.constant dense<0.000000e+00> : vector<2xf32>
    %292 = vector.multi_reduction <add>, %291, %cst_223 [1] : vector<2x128xf32> to vector<2xf32>
    %293 = vector.shape_cast %292 : vector<2xf32> to vector<2x1xf32>
    %c23 = arith.constant 23 : index
    %c0_224 = arith.constant 0 : index
    %294 = vector.load %arg2[%c23, %c0_224] : memref<24x128xf32, #tpu.memory_space<vmem>>, vector<1x128xf32>
    %295 = vector.extract_strided_slice %294 {offsets = [0, 0], sizes = [1, 1], strides = [1, 1]} : vector<1x128xf32> to vector<1x1xf32>
    %296 = vector.broadcast %295 : vector<1x1xf32> to vector<2x1xf32>
    %297 = arith.addf %293, %296 : vector<2x1xf32>
    %298 = arith.negf %297 : vector<2x1xf32>
    %299 = math.exp %298 : vector<2x1xf32>
    %cst_225 = arith.constant 1.000000e+00 : f32
    %300 = vector.broadcast %cst_225 : f32 to vector<2x1xf32>
    %301 = arith.addf %300, %299 : vector<2x1xf32>
    %302 = arith.divf %300, %301 : vector<2x1xf32>
    %c0_226 = arith.constant 0 : index
    %c0_227 = arith.constant 0 : index
    %303 = vector.load %arg7[%c0_226, %c0_227] : memref<2x1xf32, #tpu.memory_space<vmem>>, vector<2x1xf32>
    tpu.vector_store %arg7[%c0_226, %c0_227], %302 {strides = array<i32>} : memref<2x1xf32, #tpu.memory_space<vmem>>, vector<2x1xf32>,
    return
  }
}

</mosaic_0001>

<llo_original>
// kernel: forward.1
$region0: #{forward.1}
  #allocation0 [shape = 'u32[]', space=smem, size = 0x4, offset = 0x4, fixed_abs, tag = 'smem constant byte address 0x4 - core index']
  #allocation1 [shape = 'u32[72,128]{1,0:T(1,128)}', space=vmem, size = 0x9000, scoped, tag = 'internal scratch']
  %s0 = inlined_call_operand.vmem [shape: f32[32,16], index: 0, kind: input, shape index: {}]
  %s1 = inlined_call_operand.hbm [shape: f32[288,32], index: 1, kind: input, shape index: {}]
  %s2 = inlined_call_operand.vmem [shape: f32[24,128], index: 2, kind: input, shape index: {}]
  %s3 = inlined_call_operand.hbm [shape: f32[352,32], index: 3, kind: input, shape index: {}]
  %s4 = inlined_call_operand.hbm [shape: f32[704,64], index: 4, kind: input, shape index: {}]
  %s5 = inlined_call_operand.hbm [shape: f32[832,128], index: 5, kind: input, shape index: {}]
  %s6 = inlined_call_operand.hbm [shape: f32[384,128], index: 6, kind: input, shape index: {}]
  %s7 = inlined_call_operand.vmem [shape: f32[2,1], index: 7, kind: output, shape index: {}]
  %s8 = sld [smem:[#allocation0]]
  $region58: #{forward.1} parent=0
    _
  %s10 = ssub.s32 1, %s8
  %s11 = scalar_select 0, %s10, %s8
  $region1: #{forward.1} parent=0
    #allocation2 [shape = 'u8[147456]{0}', space=vmem, size = 0x24000, scoped, tag = 'input window, operand 1, single buffered']
    #allocation3 [shape = 's32[1]{0}', space=sflag, size = 0x4, scoped, tag = 'scoped memory for forward.1']
    #allocation4 [shape = 'u8[180224]{0}', space=vmem, size = 0x2c000, scoped, tag = 'input window, operand 3, single buffered']
    #allocation5 [shape = 's32[1]{0}', space=sflag, size = 0x4, scoped, tag = 'scoped memory for forward.1']
    #allocation6 [shape = 'u8[360448]{0}', space=vmem, size = 0x58000, scoped, tag = 'input window, operand 4, single buffered']
    #allocation7 [shape = 'u8[425984]{0}', space=vmem, size = 0x68000, scoped, tag = 'input window, operand 5, single buffered']
    #allocation8 [shape = 's32[1]{0}', space=sflag, size = 0x4, scoped, tag = 'scoped memory for forward.1']
    #allocation9 [shape = 'u8[196608]{0}', space=vmem, size = 0x30000, scoped, tag = 'input window, operand 6, single buffered']
    %12 = vsyncpa [#allocation3], 0
    %13 = vsyncpa [#allocation5], 0
    %14 = vsyncpa [#allocation8], 0
    // Predicated region
    $region2: #{forward.1} parent=1 // pred_check
      _
    $region3: #{forward.1} parent=1 // pred_check_branch
      %16 = sbr.rel (0) target = $region5
    $region4: #{forward.1} parent=1 // pred_region
      _
    $region5: #{forward.1} parent=1 // pred_fallthru
      _
    // Predicated region
    $region6: #{forward.1} parent=1 // pred_check
      _
    $region7: #{forward.1} parent=1 // pred_check_branch
      %18 = sbr.rel (0) target = $region9
    $region8: #{forward.1} parent=1 // pred_region
      %20 = vsyncadd [#allocation3], 0
      %s21 = sshll.u32 %s1, 4
      %s22 = int_to_ptr.hbm [resolvable:$true] %s21
      %s23 = sshll.u32 [#allocation2], 4
      %s24 = int_to_ptr.vmem [resolvable:$true] %s23
      %29 = dma.hbm_to_vmem [thread:$0]  %s22, 4608, %s24, [#allocation3], 128, 128, 8
    $region9: #{forward.1} parent=1 // pred_fallthru
      _
    // Predicated region
    $region10: #{forward.1} parent=1 // pred_check
      _
    $region11: #{forward.1} parent=1 // pred_check_branch
      %31 = sbr.rel (0) target = $region13
    $region12: #{forward.1} parent=1 // pred_region
      _
    $region13: #{forward.1} parent=1 // pred_fallthru
      _
    // Predicated region
    $region14: #{forward.1} parent=1 // pred_check
      _
    $region15: #{forward.1} parent=1 // pred_check_branch
      %33 = sbr.rel (0) target = $region17
    $region16: #{forward.1} parent=1 // pred_region
      %35 = vsyncadd [#allocation5], 0
      %s36 = sshll.u32 %s3, 4
      %s37 = int_to_ptr.hbm [resolvable:$true] %s36
      %s38 = sshll.u32 [#allocation4], 4
      %s39 = int_to_ptr.vmem [resolvable:$true] %s38
      %44 = dma.hbm_to_vmem [thread:$0]  %s37, 5632, %s39, [#allocation5], 128, 128, 8
    $region17: #{forward.1} parent=1 // pred_fallthru
      _
    // Predicated region
    $region18: #{forward.1} parent=1 // pred_check
      _
    $region19: #{forward.1} parent=1 // pred_check_branch
      %46 = sbr.rel (0) target = $region21
    $region20: #{forward.1} parent=1 // pred_region
      %48 = vsyncadd [#allocation5], 0
      %s49 = sshll.u32 %s4, 4
      %s50 = int_to_ptr.hbm [resolvable:$true] %s49
      %s51 = sshll.u32 [#allocation6], 4
      %s52 = int_to_ptr.vmem [resolvable:$true] %s51
      %57 = dma.hbm_to_vmem [thread:$0]  %s50, 11264, %s52, [#allocation5], 128, 128, 8
    $region21: #{forward.1} parent=1 // pred_fallthru
      _
    // Predicated region
    $region22: #{forward.1} parent=1 // pred_check
      _
    $region23: #{forward.1} parent=1 // pred_check_branch
      %59 = sbr.rel (0) target = $region25
    $region24: #{forward.1} parent=1 // pred_region
      %61 = vsyncadd [#allocation8], 0
      %s62 = sshll.u32 %s5, 4
      %s63 = int_to_ptr.hbm [resolvable:$true] %s62
      %s64 = sshll.u32 [#allocation7], 4
      %s65 = int_to_ptr.vmem [resolvable:$true] %s64
      %70 = dma.hbm_to_vmem [thread:$0]  %s63, 13312, %s65, [#allocation8], 128, 128, 8
    $region25: #{forward.1} parent=1 // pred_fallthru
      _
    // Predicated region
    $region26: #{forward.1} parent=1 // pred_check
      _
    $region27: #{forward.1} parent=1 // pred_check_branch
      %72 = sbr.rel (0) target = $region29
    $region28: #{forward.1} parent=1 // pred_region
      %74 = vsyncadd [#allocation8], 0
      %s75 = sshll.u32 %s6, 4
      %s76 = int_to_ptr.hbm [resolvable:$true] %s75
      %s77 = sshll.u32 [#allocation9], 4
      %s78 = int_to_ptr.vmem [resolvable:$true] %s77
      %83 = dma.hbm_to_vmem [thread:$0]  %s76, 6144, %s78, [#allocation8], 128, 128, 8
    $region29: #{forward.1} parent=1 // pred_fallthru
      _
    // Predicated region
    $region30: #{forward.1} parent=1 // pred_check
      _
    $region31: #{forward.1} parent=1 // pred_check_branch
      %85 = sbr.rel (0) target = $region33
    $region32: #{forward.1} parent=1 // pred_region
      %87 = dma.done [#allocation3], 4608
    $region33: #{forward.1} parent=1 // pred_fallthru
      _
    // Predicated region
    $region34: #{forward.1} parent=1 // pred_check
      _
    $region35: #{forward.1} parent=1 // pred_check_branch
      %89 = sbr.rel (0) target = $region37
    $region36: #{forward.1} parent=1 // pred_region
      %91 = dma.done [#allocation5], 5632
    $region37: #{forward.1} parent=1 // pred_fallthru
      _
    // Predicated region
    $region38: #{forward.1} parent=1 // pred_check
      _
    $region39: #{forward.1} parent=1 // pred_check_branch
      %93 = sbr.rel (0) target = $region41
    $region40: #{forward.1} parent=1 // pred_region
      %95 = dma.done [#allocation5], 11264
    $region41: #{forward.1} parent=1 // pred_fallthru
      _
    // Predicated region
    $region42: #{forward.1} parent=1 // pred_check
      _
    $region43: #{forward.1} parent=1 // pred_check_branch
      %97 = sbr.rel (0) target = $region45
    $region44: #{forward.1} parent=1 // pred_region
      %99 = dma.done [#allocation8], 13312
    $region45: #{forward.1} parent=1 // pred_fallthru
      _
    // Predicated region
    $region46: #{forward.1} parent=1 // pred_check
      _
    $region47: #{forward.1} parent=1 // pred_check_branch
      %101 = sbr.rel (0) target = $region49
    $region48: #{forward.1} parent=1 // pred_region
      %103 = dma.done [#allocation8], 6144
    $region49: #{forward.1} parent=1 // pred_fallthru
      _
    %v104 = vld [vmem:[%s0] sm:$0xff]
    %v105 = vld [vmem:[%s0 + $0x8] sm:$0xff]
    %v106 = vld [vmem:[%s0 + $0x10] sm:$0xff]
    %v107 = vld [vmem:[%s0 + $0x18] sm:$0xff]
    %v108 = vld [vmem:[%s2] sm:$0x1]
    %v109 = vperm.slane %v108, 0
    %v110 = vmul.f32 %v104, %v109
    %v111 = vmul.f32 %v105, %v109
    %v112 = vmul.f32 %v106, %v109
    %v113 = vmul.f32 %v107, %v109
    %v114 = vld [vmem:[%s2 + $0x1] sm:$0x1]
    %v115 = vperm.slane %v114, 0
    %v116 = vadd.f32 %v110, %v115
    %v117 = vadd.f32 %v111, %v115
    %v118 = vadd.f32 %v112, %v115
    %v119 = vadd.f32 %v113, %v115
    %v120 = vld [vmem:[#allocation4] sm:$0xff]
    %v121 = vld [vmem:[#allocation4 + $0x8] sm:$0xff]
    %v122 = vld [vmem:[#allocation4 + $0x10] sm:$0xff]
    %v123 = vld [vmem:[#allocation4 + $0x18] sm:$0xff]
    %vm124 = vcmask 130048
    %v126 = vsel %vm124, %v116, 0
    %v129 = vsel %vm124, %v117, 0
    %v132 = vsel %vm124, %v118, 0
    %v135 = vsel %vm124, %v119, 0
    %137 = vmatpush.msra.mxu0 0.0
    %138 = vmatpush.msra.mxu0 0.0
    %139 = vmatpush.msra.mxu0 0.0
    %140 = vmatpush.msra.mxu0 0.0
    %141 = vmatpush.msra.mxu0 0.0
    %142 = vmatpush.msra.mxu0 0.0
    %143 = vmatpush.msra.mxu0 0.0
    %144 = vmatpush.msra.mxu0 0.0
    %145 = vmatpush.msra.mxu0 0.0
    %146 = vmatpush.msra.mxu0 0.0
    %147 = vmatpush.msra.mxu0 0.0
    %148 = vmatpush.msra.mxu0 0.0
    %149 = vmatpush.msra.mxu0 0.0
    %150 = vmatpush.msra.mxu0 0.0
    %151 = vmatpush.msra.mxu0 %v123
    %152 = vmatpush.msra.mxu0 %v122
    %153 = vmatmul.f32.gmra.mxu0 %v126
    %v154 = vpop.f32.mrf.mxu0
    %v155 = vadd.f32 0.0, %v154
    %156 = vmatmul.f32.gmra.mxu0 %v129
    %v157 = vpop.f32.mrf.mxu0
    %v158 = vadd.f32 0.0, %v157
    %159 = vmatmul.f32.gmra.mxu0 %v132
    %v160 = vpop.f32.mrf.mxu0
    %v161 = vadd.f32 0.0, %v160
    %162 = vmatmul.f32.gmra.mxu0 %v135
    %v163 = vpop.f32.mrf.mxu0
    %v164 = vadd.f32 0.0, %v163
    %165 = vdwg.mxu0
    %v166 = vld [vmem:[#allocation2] sm:$0xff]
    %v167 = vld [vmem:[#allocation2 + $0x8] sm:$0xff]
    %v168 = vld [vmem:[#allocation2 + $0x10] sm:$0xff]
    %v169 = vld [vmem:[#allocation2 + $0x18] sm:$0xff]
    %vm170 = vcmask 261120
    %v172 = vsel %vm170, %v166, 0
    %v175 = vsel %vm170, %v167, 0
    %v178 = vsel %vm170, %v168, 0
    %v181 = vsel %vm170, %v169, 0
    %183 = vmatpush.msra.mxu0 0.0
    %184 = vmatpush.msra.mxu0 0.0
    %185 = vmatpush.msra.mxu0 0.0
    %186 = vmatpush.msra.mxu0 0.0
    %187 = vmatpush.msra.mxu0 0.0
    %188 = vmatpush.msra.mxu0 0.0
    %189 = vmatpush.msra.mxu0 0.0
    %190 = vmatpush.msra.mxu0 0.0
    %191 = vmatpush.msra.mxu0 0.0
    %192 = vmatpush.msra.mxu0 0.0
    %193 = vmatpush.msra.mxu0 0.0
    %194 = vmatpush.msra.mxu0 0.0
    %195 = vmatpush.msra.mxu0 %v164
    %196 = vmatpush.msra.mxu0 %v161
    %197 = vmatpush.msra.mxu0 %v158
    %198 = vmatpush.msra.mxu0 %v155
    %199 = vmatmul.f32.gmra.mxu0 %v172
    %v200 = vpop.f32.mrf.mxu0
    %v201 = vadd.f32 0.0, %v200
    %202 = vmatmul.f32.gmra.mxu0 %v175
    %v203 = vpop.f32.mrf.mxu0
    %v204 = vadd.f32 0.0, %v203
    %205 = vmatmul.f32.gmra.mxu0 %v178
    %v206 = vpop.f32.mrf.mxu0
    %v207 = vadd.f32 0.0, %v206
    %208 = vmatmul.f32.gmra.mxu0 %v181
    %v209 = vpop.f32.mrf.mxu0
    %v210 = vadd.f32 0.0, %v209
    %211 = vdwg.mxu0
    %212 = vmatpush.msra.mxu0 0.0
    %213 = vmatpush.msra.mxu0 0.0
    %214 = vmatpush.msra.mxu0 0.0
    %215 = vmatpush.msra.mxu0 0.0
    %216 = vmatpush.msra.mxu0 0.0
    %217 = vmatpush.msra.mxu0 0.0
    %218 = vmatpush.msra.mxu0 0.0
    %219 = vmatpush.msra.mxu0 0.0
    %220 = vmatpush.msra.mxu0 0.0
    %221 = vmatpush.msra.mxu0 0.0
    %222 = vmatpush.msra.mxu0 0.0
    %223 = vmatpush.msra.mxu0 0.0
    %224 = vmatpush.msra.mxu0 0.0
    %225 = vmatpush.msra.mxu0 0.0
    %226 = vmatpush.msra.mxu0 %v121
    %227 = vmatpush.msra.mxu0 %v120
    %228 = vmatmul.f32.gmra.mxu0 %v126
    %v229 = vpop.f32.mrf.mxu0
    %v230 = vadd.f32 %v201, %v229
    %231 = vmatmul.f32.gmra.mxu0 %v129
    %v232 = vpop.f32.mrf.mxu0
    %v233 = vadd.f32 %v204, %v232
    %234 = vmatmul.f32.gmra.mxu0 %v132
    %v235 = vpop.f32.mrf.mxu0
    %v236 = vadd.f32 %v207, %v235
    %237 = vmatmul.f32.gmra.mxu0 %v135
    %v238 = vpop.f32.mrf.mxu0
    %v239 = vadd.f32 %v210, %v238
    %240 = vdwg.mxu0
    %v241 = vld [vmem:[#allocation4 + $0x20] sm:$0xff]
    %v242 = vld [vmem:[#allocation4 + $0x28] sm:$0xff]
    %243 = vmatpush.msra.mxu0 0.0
    %244 = vmatpush.msra.mxu0 0.0
    %245 = vmatpush.msra.mxu0 0.0
    %246 = vmatpush.msra.mxu0 0.0
    %247 = vmatpush.msra.mxu0 0.0
    %248 = vmatpush.msra.mxu0 0.0
    %249 = vmatpush.msra.mxu0 0.0
    %250 = vmatpush.msra.mxu0 0.0
    %251 = vmatpush.msra.mxu0 0.0
    %252 = vmatpush.msra.mxu0 0.0
    %253 = vmatpush.msra.mxu0 0.0
    %254 = vmatpush.msra.mxu0 0.0
    %255 = vmatpush.msra.mxu0 0.0
    %256 = vmatpush.msra.mxu0 0.0
    %257 = vmatpush.msra.mxu0 %v242
    %258 = vmatpush.msra.mxu0 %v241
    %259 = vmatmul.f32.gmra.mxu0 %v126
    %v260 = vpop.f32.mrf.mxu0
    %v261 = vadd.f32 0.0, %v260
    %262 = vmatmul.f32.gmra.mxu0 %v129
    %v263 = vpop.f32.mrf.mxu0
    %v264 = vadd.f32 0.0, %v263
    %265 = vmatmul.f32.gmra.mxu0 %v132
    %v266 = vpop.f32.mrf.mxu0
    %v267 = vadd.f32 0.0, %v266
    %268 = vmatmul.f32.gmra.mxu0 %v135
    %v269 = vpop.f32.mrf.mxu0
    %v270 = vadd.f32 0.0, %v269
    %271 = vdwg.mxu0
    %v272 = vld [vmem:[#allocation2 + $0x20] sm:$0xff]
    %v273 = vld [vmem:[#allocation2 + $0x28] sm:$0xff]
    %v274 = vld [vmem:[#allocation2 + $0x30] sm:$0xff]
    %v275 = vld [vmem:[#allocation2 + $0x38] sm:$0xff]
    %v277 = vsel %vm170, %v272, 0
    %v280 = vsel %vm170, %v273, 0
    %v283 = vsel %vm170, %v274, 0
    %v286 = vsel %vm170, %v275, 0
    %288 = vmatpush.msra.mxu0 0.0
    %289 = vmatpush.msra.mxu0 0.0
    %290 = vmatpush.msra.mxu0 0.0
    %291 = vmatpush.msra.mxu0 0.0
    %292 = vmatpush.msra.mxu0 0.0
    %293 = vmatpush.msra.mxu0 0.0
    %294 = vmatpush.msra.mxu0 0.0
    %295 = vmatpush.msra.mxu0 0.0
    %296 = vmatpush.msra.mxu0 0.0
    %297 = vmatpush.msra.mxu0 0.0
    %298 = vmatpush.msra.mxu0 0.0
    %299 = vmatpush.msra.mxu0 0.0
    %300 = vmatpush.msra.mxu0 %v270
    %301 = vmatpush.msra.mxu0 %v267
    %302 = vmatpush.msra.mxu0 %v264
    %303 = vmatpush.msra.mxu0 %v261
    %304 = vmatmul.f32.gmra.mxu0 %v277
    %v305 = vpop.f32.mrf.mxu0
    %v306 = vadd.f32 0.0, %v305
    %307 = vmatmul.f32.gmra.mxu0 %v280
    %v308 = vpop.f32.mrf.mxu0
    %v309 = vadd.f32 0.0, %v308
    %310 = vmatmul.f32.gmra.mxu0 %v283
    %v311 = vpop.f32.mrf.mxu0
    %v312 = vadd.f32 0.0, %v311
    %313 = vmatmul.f32.gmra.mxu0 %v286
    %v314 = vpop.f32.mrf.mxu0
    %v315 = vadd.f32 0.0, %v314
    %316 = vdwg.mxu0
    %v317 = vadd.f32 %v230, %v306
    %v318 = vadd.f32 %v233, %v309
    %v319 = vadd.f32 %v236, %v312
    %v320 = vadd.f32 %v239, %v315
    %v321 = vld [vmem:[#allocation4 + $0x30] sm:$0xff]
    %v322 = vld [vmem:[#allocation4 + $0x38] sm:$0xff]
    %323 = vmatpush.msra.mxu0 0.0
    %324 = vmatpush.msra.mxu0 0.0
    %325 = vmatpush.msra.mxu0 0.0
    %326 = vmatpush.msra.mxu0 0.0
    %327 = vmatpush.msra.mxu0 0.0
    %328 = vmatpush.msra.mxu0 0.0
    %329 = vmatpush.msra.mxu0 0.0
    %330 = vmatpush.msra.mxu0 0.0
    %331 = vmatpush.msra.mxu0 0.0
    %332 = vmatpush.msra.mxu0 0.0
    %333 = vmatpush.msra.mxu0 0.0
    %334 = vmatpush.msra.mxu0 0.0
    %335 = vmatpush.msra.mxu0 0.0
    %336 = vmatpush.msra.mxu0 0.0
    %337 = vmatpush.msra.mxu0 %v322
    %338 = vmatpush.msra.mxu0 %v321
    %339 = vmatmul.f32.gmra.mxu0 %v126
    %v340 = vpop.f32.mrf.mxu0
    %v341 = vadd.f32 0.0, %v340
    %342 = vmatmul.f32.gmra.mxu0 %v129
    %v343 = vpop.f32.mrf.mxu0
    %v344 = vadd.f32 0.0, %v343
    %345 = vmatmul.f32.gmra.mxu0 %v132
    %v346 = vpop.f32.mrf.mxu0
    %v347 = vadd.f32 0.0, %v346
    %348 = vmatmul.f32.gmra.mxu0 %v135
    %v349 = vpop.f32.mrf.mxu0
    %v350 = vadd.f32 0.0, %v349
    %351 = vdwg.mxu0
    %v352 = vld [vmem:[#allocation2 + $0x40] sm:$0xff]
    %v353 = vld [vmem:[#allocation2 + $0x48] sm:$0xff]
    %v354 = vld [vmem:[#allocation2 + $0x50] sm:$0xff]
    %v355 = vld [vmem:[#allocation2 + $0x58] sm:$0xff]
    %v357 = vsel %vm170, %v352, 0
    %v360 = vsel %vm170, %v353, 0
    %v363 = vsel %vm170, %v354, 0
    %v366 = vsel %vm170, %v355, 0
    %368 = vmatpush.msra.mxu0 0.0
    %369 = vmatpush.msra.mxu0 0.0
    %370 = vmatpush.msra.mxu0 0.0
    %371 = vmatpush.msra.mxu0 0.0
    %372 = vmatpush.msra.mxu0 0.0
    %373 = vmatpush.msra.mxu0 0.0
    %374 = vmatpush.msra.mxu0 0.0
    %375 = vmatpush.msra.mxu0 0.0
    %376 = vmatpush.msra.mxu0 0.0
    %377 = vmatpush.msra.mxu0 0.0
    %378 = vmatpush.msra.mxu0 0.0
    %379 = vmatpush.msra.mxu0 0.0
    %380 = vmatpush.msra.mxu0 %v350
    %381 = vmatpush.msra.mxu0 %v347
    %382 = vmatpush.msra.mxu0 %v344
    %383 = vmatpush.msra.mxu0 %v341
    %384 = vmatmul.f32.gmra.mxu0 %v357
    %v385 = vpop.f32.mrf.mxu0
    %v386 = vadd.f32 0.0, %v385
    %387 = vmatmul.f32.gmra.mxu0 %v360
    %v388 = vpop.f32.mrf.mxu0
    %v389 = vadd.f32 0.0, %v388
    %390 = vmatmul.f32.gmra.mxu0 %v363
    %v391 = vpop.f32.mrf.mxu0
    %v392 = vadd.f32 0.0, %v391
    %393 = vmatmul.f32.gmra.mxu0 %v366
    %v394 = vpop.f32.mrf.mxu0
    %v395 = vadd.f32 0.0, %v394
    %396 = vdwg.mxu0
    %v397 = vadd.f32 %v317, %v386
    %v398 = vadd.f32 %v318, %v389
    %v399 = vadd.f32 %v319, %v392
    %v400 = vadd.f32 %v320, %v395
    %v401 = vld [vmem:[#allocation4 + $0x40] sm:$0xff]
    %v402 = vld [vmem:[#allocation4 + $0x48] sm:$0xff]
    %403 = vmatpush.msra.mxu0 0.0
    %404 = vmatpush.msra.mxu0 0.0
    %405 = vmatpush.msra.mxu0 0.0
    %406 = vmatpush.msra.mxu0 0.0
    %407 = vmatpush.msra.mxu0 0.0
    %408 = vmatpush.msra.mxu0 0.0
    %409 = vmatpush.msra.mxu0 0.0
    %410 = vmatpush.msra.mxu0 0.0
    %411 = vmatpush.msra.mxu0 0.0
    %412 = vmatpush.msra.mxu0 0.0
    %413 = vmatpush.msra.mxu0 0.0
    %414 = vmatpush.msra.mxu0 0.0
    %415 = vmatpush.msra.mxu0 0.0
    %416 = vmatpush.msra.mxu0 0.0
    %417 = vmatpush.msra.mxu0 %v402
    %418 = vmatpush.msra.mxu0 %v401
    %419 = vmatmul.f32.gmra.mxu0 %v126
    %v420 = vpop.f32.mrf.mxu0
    %v421 = vadd.f32 0.0, %v420
    %422 = vmatmul.f32.gmra.mxu0 %v129
    %v423 = vpop.f32.mrf.mxu0
    %v424 = vadd.f32 0.0, %v423
    %425 = vmatmul.f32.gmra.mxu0 %v132
    %v426 = vpop.f32.mrf.mxu0
    %v427 = vadd.f32 0.0, %v426
    %428 = vmatmul.f32.gmra.mxu0 %v135
    %v429 = vpop.f32.mrf.mxu0
    %v430 = vadd.f32 0.0, %v429
    %431 = vdwg.mxu0
    %v432 = vld [vmem:[#allocation2 + $0x60] sm:$0xff]
    %v433 = vld [vmem:[#allocation2 + $0x68] sm:$0xff]
    %v434 = vld [vmem:[#allocation2 + $0x70] sm:$0xff]
    %v435 = vld [vmem:[#allocation2 + $0x78] sm:$0xff]
    %v437 = vsel %vm170, %v432, 0
    %v440 = vsel %vm170, %v433, 0
    %v443 = vsel %vm170, %v434, 0
    %v446 = vsel %vm170, %v435, 0
    %448 = vmatpush.msra.mxu0 0.0
    %449 = vmatpush.msra.mxu0 0.0
    %450 = vmatpush.msra.mxu0 0.0
    %451 = vmatpush.msra.mxu0 0.0
    %452 = vmatpush.msra.mxu0 0.0
    %453 = vmatpush.msra.mxu0 0.0
    %454 = vmatpush.msra.mxu0 0.0
    %455 = vmatpush.msra.mxu0 0.0
    %456 = vmatpush.msra.mxu0 0.0
    %457 = vmatpush.msra.mxu0 0.0
    %458 = vmatpush.msra.mxu0 0.0
    %459 = vmatpush.msra.mxu0 0.0
    %460 = vmatpush.msra.mxu0 %v430
    %461 = vmatpush.msra.mxu0 %v427
    %462 = vmatpush.msra.mxu0 %v424
    %463 = vmatpush.msra.mxu0 %v421
    %464 = vmatmul.f32.gmra.mxu0 %v437
    %v465 = vpop.f32.mrf.mxu0
    %v466 = vadd.f32 0.0, %v465
    %467 = vmatmul.f32.gmra.mxu0 %v440
    %v468 = vpop.f32.mrf.mxu0
    %v469 = vadd.f32 0.0, %v468
    %470 = vmatmul.f32.gmra.mxu0 %v443
    %v471 = vpop.f32.mrf.mxu0
    %v472 = vadd.f32 0.0, %v471
    %473 = vmatmul.f32.gmra.mxu0 %v446
    %v474 = vpop.f32.mrf.mxu0
    %v475 = vadd.f32 0.0, %v474
    %476 = vdwg.mxu0
    %v477 = vadd.f32 %v397, %v466
    %v478 = vadd.f32 %v398, %v469
    %v479 = vadd.f32 %v399, %v472
    %v480 = vadd.f32 %v400, %v475
    %v481 = vld [vmem:[#allocation4 + $0x50] sm:$0xff]
    %v482 = vld [vmem:[#allocation4 + $0x58] sm:$0xff]
    %483 = vmatpush.msra.mxu0 0.0
    %484 = vmatpush.msra.mxu0 0.0
    %485 = vmatpush.msra.mxu0 0.0
    %486 = vmatpush.msra.mxu0 0.0
    %487 = vmatpush.msra.mxu0 0.0
    %488 = vmatpush.msra.mxu0 0.0
    %489 = vmatpush.msra.mxu0 0.0
    %490 = vmatpush.msra.mxu0 0.0
    %491 = vmatpush.msra.mxu0 0.0
    %492 = vmatpush.msra.mxu0 0.0
    %493 = vmatpush.msra.mxu0 0.0
    %494 = vmatpush.msra.mxu0 0.0
    %495 = vmatpush.msra.mxu0 0.0
    %496 = vmatpush.msra.mxu0 0.0
    %497 = vmatpush.msra.mxu0 %v482
    %498 = vmatpush.msra.mxu0 %v481
    %499 = vmatmul.f32.gmra.mxu0 %v126
    %v500 = vpop.f32.mrf.mxu0
    %v501 = vadd.f32 0.0, %v500
    %502 = vmatmul.f32.gmra.mxu0 %v129
    %v503 = vpop.f32.mrf.mxu0
    %v504 = vadd.f32 0.0, %v503
    %505 = vmatmul.f32.gmra.mxu0 %v132
    %v506 = vpop.f32.mrf.mxu0
    %v507 = vadd.f32 0.0, %v506
    %508 = vmatmul.f32.gmra.mxu0 %v135
    %v509 = vpop.f32.mrf.mxu0
    %v510 = vadd.f32 0.0, %v509
    %511 = vdwg.mxu0
    %v512 = vld [vmem:[#allocation2 + $0x80] sm:$0xff]
    %v513 = vld [vmem:[#allocation2 + $0x88] sm:$0xff]
    %v514 = vld [vmem:[#allocation2 + $0x90] sm:$0xff]
    %v515 = vld [vmem:[#allocation2 + $0x98] sm:$0xff]
    %v517 = vsel %vm170, %v512, 0
    %v520 = vsel %vm170, %v513, 0
    %v523 = vsel %vm170, %v514, 0
    %v526 = vsel %vm170, %v515, 0
    %528 = vmatpush.msra.mxu0 0.0
    %529 = vmatpush.msra.mxu0 0.0
    %530 = vmatpush.msra.mxu0 0.0
    %531 = vmatpush.msra.mxu0 0.0
    %532 = vmatpush.msra.mxu0 0.0
    %533 = vmatpush.msra.mxu0 0.0
    %534 = vmatpush.msra.mxu0 0.0
    %535 = vmatpush.msra.mxu0 0.0
    %536 = vmatpush.msra.mxu0 0.0
    %537 = vmatpush.msra.mxu0 0.0
    %538 = vmatpush.msra.mxu0 0.0
    %539 = vmatpush.msra.mxu0 0.0
    %540 = vmatpush.msra.mxu0 %v510
    %541 = vmatpush.msra.mxu0 %v507
    %542 = vmatpush.msra.mxu0 %v504
    %543 = vmatpush.msra.mxu0 %v501
    %544 = vmatmul.f32.gmra.mxu0 %v517
    %v545 = vpop.f32.mrf.mxu0
    %v546 = vadd.f32 0.0, %v545
    %547 = vmatmul.f32.gmra.mxu0 %v520
    %v548 = vpop.f32.mrf.mxu0
    %v549 = vadd.f32 0.0, %v548
    %550 = vmatmul.f32.gmra.mxu0 %v523
    %v551 = vpop.f32.mrf.mxu0
    %v552 = vadd.f32 0.0, %v551
    %553 = vmatmul.f32.gmra.mxu0 %v526
    %v554 = vpop.f32.mrf.mxu0
    %v555 = vadd.f32 0.0, %v554
    %556 = vdwg.mxu0
    %v557 = vadd.f32 %v477, %v546
    %v558 = vadd.f32 %v478, %v549
    %v559 = vadd.f32 %v479, %v552
    %v560 = vadd.f32 %v480, %v555
    %v561 = vld [vmem:[#allocation4 + $0x60] sm:$0xff]
    %v562 = vld [vmem:[#allocation4 + $0x68] sm:$0xff]
    %563 = vmatpush.msra.mxu0 0.0
    %564 = vmatpush.msra.mxu0 0.0
    %565 = vmatpush.msra.mxu0 0.0
    %566 = vmatpush.msra.mxu0 0.0
    %567 = vmatpush.msra.mxu0 0.0
    %568 = vmatpush.msra.mxu0 0.0
    %569 = vmatpush.msra.mxu0 0.0
    %570 = vmatpush.msra.mxu0 0.0
    %571 = vmatpush.msra.mxu0 0.0
    %572 = vmatpush.msra.mxu0 0.0
    %573 = vmatpush.msra.mxu0 0.0
    %574 = vmatpush.msra.mxu0 0.0
    %575 = vmatpush.msra.mxu0 0.0
    %576 = vmatpush.msra.mxu0 0.0
    %577 = vmatpush.msra.mxu0 %v562
    %578 = vmatpush.msra.mxu0 %v561
    %579 = vmatmul.f32.gmra.mxu0 %v126
    %v580 = vpop.f32.mrf.mxu0
    %v581 = vadd.f32 0.0, %v580
    %582 = vmatmul.f32.gmra.mxu0 %v129
    %v583 = vpop.f32.mrf.mxu0
    %v584 = vadd.f32 0.0, %v583
    %585 = vmatmul.f32.gmra.mxu0 %v132
    %v586 = vpop.f32.mrf.mxu0
    %v587 = vadd.f32 0.0, %v586
    %588 = vmatmul.f32.gmra.mxu0 %v135
    %v589 = vpop.f32.mrf.mxu0
    %v590 = vadd.f32 0.0, %v589
    %591 = vdwg.mxu0
    %v592 = vld [vmem:[#allocation2 + $0xa0] sm:$0xff]
    %v593 = vld [vmem:[#allocation2 + $0xa8] sm:$0xff]
    %v594 = vld [vmem:[#allocation2 + $0xb0] sm:$0xff]
    %v595 = vld [vmem:[#allocation2 + $0xb8] sm:$0xff]
    %v597 = vsel %vm170, %v592, 0
    %v600 = vsel %vm170, %v593, 0
    %v603 = vsel %vm170, %v594, 0
    %v606 = vsel %vm170, %v595, 0
    %608 = vmatpush.msra.mxu0 0.0
    %609 = vmatpush.msra.mxu0 0.0
    %610 = vmatpush.msra.mxu0 0.0
    %611 = vmatpush.msra.mxu0 0.0
    %612 = vmatpush.msra.mxu0 0.0
    %613 = vmatpush.msra.mxu0 0.0
    %614 = vmatpush.msra.mxu0 0.0
    %615 = vmatpush.msra.mxu0 0.0
    %616 = vmatpush.msra.mxu0 0.0
    %617 = vmatpush.msra.mxu0 0.0
    %618 = vmatpush.msra.mxu0 0.0
    %619 = vmatpush.msra.mxu0 0.0
    %620 = vmatpush.msra.mxu0 %v590
    %621 = vmatpush.msra.mxu0 %v587
    %622 = vmatpush.msra.mxu0 %v584
    %623 = vmatpush.msra.mxu0 %v581
    %624 = vmatmul.f32.gmra.mxu0 %v597
    %v625 = vpop.f32.mrf.mxu0
    %v626 = vadd.f32 0.0, %v625
    %627 = vmatmul.f32.gmra.mxu0 %v600
    %v628 = vpop.f32.mrf.mxu0
    %v629 = vadd.f32 0.0, %v628
    %630 = vmatmul.f32.gmra.mxu0 %v603
    %v631 = vpop.f32.mrf.mxu0
    %v632 = vadd.f32 0.0, %v631
    %633 = vmatmul.f32.gmra.mxu0 %v606
    %v634 = vpop.f32.mrf.mxu0
    %v635 = vadd.f32 0.0, %v634
    %636 = vdwg.mxu0
    %v637 = vadd.f32 %v557, %v626
    %v638 = vadd.f32 %v558, %v629
    %v639 = vadd.f32 %v559, %v632
    %v640 = vadd.f32 %v560, %v635
    %v641 = vld [vmem:[%s2 + $0x2] sm:$0x1]
    %v642 = vperm.slane %v641, 0
    %v643 = vmul.f32 %v637, %v642
    %v644 = vmul.f32 %v638, %v642
    %v645 = vmul.f32 %v639, %v642
    %v646 = vmul.f32 %v640, %v642
    %v647 = vld [vmem:[%s2 + $0x3] sm:$0x1]
    %v648 = vperm.slane %v647, 0
    %v649 = vadd.f32 %v643, %v648
    %v650 = vadd.f32 %v644, %v648
    %v651 = vadd.f32 %v645, %v648
    %v652 = vadd.f32 %v646, %v648
    %v653 = vmax.f32 %v649, 0.0
    %v654 = vmax.f32 %v650, 0.0
    %v655 = vmax.f32 %v651, 0.0
    %v656 = vmax.f32 %v652, 0.0
    %v657 = vld [vmem:[#allocation4 + $0x70] sm:$0xff]
    %v658 = vld [vmem:[#allocation4 + $0x78] sm:$0xff]
    %v659 = vld [vmem:[#allocation4 + $0x80] sm:$0xff]
    %v660 = vld [vmem:[#allocation4 + $0x88] sm:$0xff]
    %v661 = vld [vmem:[#allocation4 + $0x90] sm:$0xff]
    %v662 = vld [vmem:[#allocation4 + $0x98] sm:$0xff]
    %v663 = vld [vmem:[#allocation4 + $0xa0] sm:$0xff]
    %v664 = vld [vmem:[#allocation4 + $0xa8] sm:$0xff]
    %v666 = vsel %vm170, %v653, 0
    %v669 = vsel %vm170, %v654, 0
    %v672 = vsel %vm170, %v655, 0
    %v675 = vsel %vm170, %v656, 0
    %677 = vmatpush.msra.mxu0 0.0
    %678 = vmatpush.msra.mxu0 0.0
    %679 = vmatpush.msra.mxu0 0.0
    %680 = vmatpush.msra.mxu0 0.0
    %681 = vmatpush.msra.mxu0 0.0
    %682 = vmatpush.msra.mxu0 0.0
    %683 = vmatpush.msra.mxu0 0.0
    %684 = vmatpush.msra.mxu0 0.0
    %685 = vmatpush.msra.mxu0 0.0
    %686 = vmatpush.msra.mxu0 0.0
    %687 = vmatpush.msra.mxu0 0.0
    %688 = vmatpush.msra.mxu0 0.0
    %689 = vmatpush.msra.mxu0 %v664
    %690 = vmatpush.msra.mxu0 %v663
    %691 = vmatpush.msra.mxu0 %v662
    %692 = vmatpush.msra.mxu0 %v661
    %693 = vmatmul.f32.gmra.mxu0 %v666
    %v694 = vpop.f32.mrf.mxu0
    %v695 = vadd.f32 0.0, %v694
    %696 = vmatmul.f32.gmra.mxu0 %v669
    %v697 = vpop.f32.mrf.mxu0
    %v698 = vadd.f32 0.0, %v697
    %699 = vmatmul.f32.gmra.mxu0 %v672
    %v700 = vpop.f32.mrf.mxu0
    %v701 = vadd.f32 0.0, %v700
    %702 = vmatmul.f32.gmra.mxu0 %v675
    %v703 = vpop.f32.mrf.mxu0
    %v704 = vadd.f32 0.0, %v703
    %705 = vdwg.mxu0
    %706 = vmatpush.msra.mxu0 0.0
    %707 = vmatpush.msra.mxu0 0.0
    %708 = vmatpush.msra.mxu0 0.0
    %709 = vmatpush.msra.mxu0 0.0
    %710 = vmatpush.msra.mxu0 0.0
    %711 = vmatpush.msra.mxu0 0.0
    %712 = vmatpush.msra.mxu0 0.0
    %713 = vmatpush.msra.mxu0 0.0
    %714 = vmatpush.msra.mxu0 0.0
    %715 = vmatpush.msra.mxu0 0.0
    %716 = vmatpush.msra.mxu0 0.0
    %717 = vmatpush.msra.mxu0 0.0
    %718 = vmatpush.msra.mxu0 %v704
    %719 = vmatpush.msra.mxu0 %v701
    %720 = vmatpush.msra.mxu0 %v698
    %721 = vmatpush.msra.mxu0 %v695
    %722 = vmatmul.f32.gmra.mxu0 %v172
    %v723 = vpop.f32.mrf.mxu0
    %v724 = vadd.f32 0.0, %v723
    %725 = vmatmul.f32.gmra.mxu0 %v175
    %v726 = vpop.f32.mrf.mxu0
    %v727 = vadd.f32 0.0, %v726
    %728 = vmatmul.f32.gmra.mxu0 %v178
    %v729 = vpop.f32.mrf.mxu0
    %v730 = vadd.f32 0.0, %v729
    %731 = vmatmul.f32.gmra.mxu0 %v181
    %v732 = vpop.f32.mrf.mxu0
    %v733 = vadd.f32 0.0, %v732
    %734 = vdwg.mxu0
    %735 = vmatpush.msra.mxu0 0.0
    %736 = vmatpush.msra.mxu0 0.0
    %737 = vmatpush.msra.mxu0 0.0
    %738 = vmatpush.msra.mxu0 0.0
    %739 = vmatpush.msra.mxu0 0.0
    %740 = vmatpush.msra.mxu0 0.0
    %741 = vmatpush.msra.mxu0 0.0
    %742 = vmatpush.msra.mxu0 0.0
    %743 = vmatpush.msra.mxu0 0.0
    %744 = vmatpush.msra.mxu0 0.0
    %745 = vmatpush.msra.mxu0 0.0
    %746 = vmatpush.msra.mxu0 0.0
    %747 = vmatpush.msra.mxu0 %v660
    %748 = vmatpush.msra.mxu0 %v659
    %749 = vmatpush.msra.mxu0 %v658
    %750 = vmatpush.msra.mxu0 %v657
    %751 = vmatmul.f32.gmra.mxu0 %v666
    %v752 = vpop.f32.mrf.mxu0
    %v753 = vadd.f32 %v724, %v752
    %754 = vmatmul.f32.gmra.mxu0 %v669
    %v755 = vpop.f32.mrf.mxu0
    %v756 = vadd.f32 %v727, %v755
    %757 = vmatmul.f32.gmra.mxu0 %v672
    %v758 = vpop.f32.mrf.mxu0
    %v759 = vadd.f32 %v730, %v758
    %760 = vmatmul.f32.gmra.mxu0 %v675
    %v761 = vpop.f32.mrf.mxu0
    %v762 = vadd.f32 %v733, %v761
    %763 = vdwg.mxu0
    %v764 = vld [vmem:[#allocation4 + $0xb0] sm:$0xff]
    %v765 = vld [vmem:[#allocation4 + $0xb8] sm:$0xff]
    %v766 = vld [vmem:[#allocation4 + $0xc0] sm:$0xff]
    %v767 = vld [vmem:[#allocation4 + $0xc8] sm:$0xff]
    %768 = vmatpush.msra.mxu0 0.0
    %769 = vmatpush.msra.mxu0 0.0
    %770 = vmatpush.msra.mxu0 0.0
    %771 = vmatpush.msra.mxu0 0.0
    %772 = vmatpush.msra.mxu0 0.0
    %773 = vmatpush.msra.mxu0 0.0
    %774 = vmatpush.msra.mxu0 0.0
    %775 = vmatpush.msra.mxu0 0.0
    %776 = vmatpush.msra.mxu0 0.0
    %777 = vmatpush.msra.mxu0 0.0
    %778 = vmatpush.msra.mxu0 0.0
    %779 = vmatpush.msra.mxu0 0.0
    %780 = vmatpush.msra.mxu0 %v767
    %781 = vmatpush.msra.mxu0 %v766
    %782 = vmatpush.msra.mxu0 %v765
    %783 = vmatpush.msra.mxu0 %v764
    %784 = vmatmul.f32.gmra.mxu0 %v666
    %v785 = vpop.f32.mrf.mxu0
    %v786 = vadd.f32 0.0, %v785
    %787 = vmatmul.f32.gmra.mxu0 %v669
    %v788 = vpop.f32.mrf.mxu0
    %v789 = vadd.f32 0.0, %v788
    %790 = vmatmul.f32.gmra.mxu0 %v672
    %v791 = vpop.f32.mrf.mxu0
    %v792 = vadd.f32 0.0, %v791
    %793 = vmatmul.f32.gmra.mxu0 %v675
    %v794 = vpop.f32.mrf.mxu0
    %v795 = vadd.f32 0.0, %v794
    %796 = vdwg.mxu0
    %797 = vmatpush.msra.mxu0 0.0
    %798 = vmatpush.msra.mxu0 0.0
    %799 = vmatpush.msra.mxu0 0.0
    %800 = vmatpush.msra.mxu0 0.0
    %801 = vmatpush.msra.mxu0 0.0
    %802 = vmatpush.msra.mxu0 0.0
    %803 = vmatpush.msra.mxu0 0.0
    %804 = vmatpush.msra.mxu0 0.0
    %805 = vmatpush.msra.mxu0 0.0
    %806 = vmatpush.msra.mxu0 0.0
    %807 = vmatpush.msra.mxu0 0.0
    %808 = vmatpush.msra.mxu0 0.0
    %809 = vmatpush.msra.mxu0 %v795
    %810 = vmatpush.msra.mxu0 %v792
    %811 = vmatpush.msra.mxu0 %v789
    %812 = vmatpush.msra.mxu0 %v786
    %813 = vmatmul.f32.gmra.mxu0 %v277
    %v814 = vpop.f32.mrf.mxu0
    %v815 = vadd.f32 0.0, %v814
    %816 = vmatmul.f32.gmra.mxu0 %v280
    %v817 = vpop.f32.mrf.mxu0
    %v818 = vadd.f32 0.0, %v817
    %819 = vmatmul.f32.gmra.mxu0 %v283
    %v820 = vpop.f32.mrf.mxu0
    %v821 = vadd.f32 0.0, %v820
    %822 = vmatmul.f32.gmra.mxu0 %v286
    %v823 = vpop.f32.mrf.mxu0
    %v824 = vadd.f32 0.0, %v823
    %825 = vdwg.mxu0
    %v826 = vadd.f32 %v753, %v815
    %v827 = vadd.f32 %v756, %v818
    %v828 = vadd.f32 %v759, %v821
    %v829 = vadd.f32 %v762, %v824
    %v830 = vld [vmem:[#allocation4 + $0xd0] sm:$0xff]
    %v831 = vld [vmem:[#allocation4 + $0xd8] sm:$0xff]
    %v832 = vld [vmem:[#allocation4 + $0xe0] sm:$0xff]
    %v833 = vld [vmem:[#allocation4 + $0xe8] sm:$0xff]
    %834 = vmatpush.msra.mxu0 0.0
    %835 = vmatpush.msra.mxu0 0.0
    %836 = vmatpush.msra.mxu0 0.0
    %837 = vmatpush.msra.mxu0 0.0
    %838 = vmatpush.msra.mxu0 0.0
    %839 = vmatpush.msra.mxu0 0.0
    %840 = vmatpush.msra.mxu0 0.0
    %841 = vmatpush.msra.mxu0 0.0
    %842 = vmatpush.msra.mxu0 0.0
    %843 = vmatpush.msra.mxu0 0.0
    %844 = vmatpush.msra.mxu0 0.0
    %845 = vmatpush.msra.mxu0 0.0
    %846 = vmatpush.msra.mxu0 %v833
    %847 = vmatpush.msra.mxu0 %v832
    %848 = vmatpush.msra.mxu0 %v831
    %849 = vmatpush.msra.mxu0 %v830
    %850 = vmatmul.f32.gmra.mxu0 %v666
    %v851 = vpop.f32.mrf.mxu0
    %v852 = vadd.f32 0.0, %v851
    %853 = vmatmul.f32.gmra.mxu0 %v669
    %v854 = vpop.f32.mrf.mxu0
    %v855 = vadd.f32 0.0, %v854
    %856 = vmatmul.f32.gmra.mxu0 %v672
    %v857 = vpop.f32.mrf.mxu0
    %v858 = vadd.f32 0.0, %v857
    %859 = vmatmul.f32.gmra.mxu0 %v675
    %v860 = vpop.f32.mrf.mxu0
    %v861 = vadd.f32 0.0, %v860
    %862 = vdwg.mxu0
    %863 = vmatpush.msra.mxu0 0.0
    %864 = vmatpush.msra.mxu0 0.0
    %865 = vmatpush.msra.mxu0 0.0
    %866 = vmatpush.msra.mxu0 0.0
    %867 = vmatpush.msra.mxu0 0.0
    %868 = vmatpush.msra.mxu0 0.0
    %869 = vmatpush.msra.mxu0 0.0
    %870 = vmatpush.msra.mxu0 0.0
    %871 = vmatpush.msra.mxu0 0.0
    %872 = vmatpush.msra.mxu0 0.0
    %873 = vmatpush.msra.mxu0 0.0
    %874 = vmatpush.msra.mxu0 0.0
    %875 = vmatpush.msra.mxu0 %v861
    %876 = vmatpush.msra.mxu0 %v858
    %877 = vmatpush.msra.mxu0 %v855
    %878 = vmatpush.msra.mxu0 %v852
    %879 = vmatmul.f32.gmra.mxu0 %v357
    %v880 = vpop.f32.mrf.mxu0
    %v881 = vadd.f32 0.0, %v880
    %882 = vmatmul.f32.gmra.mxu0 %v360
    %v883 = vpop.f32.mrf.mxu0
    %v884 = vadd.f32 0.0, %v883
    %885 = vmatmul.f32.gmra.mxu0 %v363
    %v886 = vpop.f32.mrf.mxu0
    %v887 = vadd.f32 0.0, %v886
    %888 = vmatmul.f32.gmra.mxu0 %v366
    %v889 = vpop.f32.mrf.mxu0
    %v890 = vadd.f32 0.0, %v889
    %891 = vdwg.mxu0
    %v892 = vadd.f32 %v826, %v881
    %v893 = vadd.f32 %v827, %v884
    %v894 = vadd.f32 %v828, %v887
    %v895 = vadd.f32 %v829, %v890
    %v896 = vld [vmem:[#allocation4 + $0xf0] sm:$0xff]
    %v897 = vld [vmem:[#allocation4 + $0xf8] sm:$0xff]
    %v898 = vld [vmem:[#allocation4 + $0x100] sm:$0xff]
    %v899 = vld [vmem:[#allocation4 + $0x108] sm:$0xff]
    %900 = vmatpush.msra.mxu0 0.0
    %901 = vmatpush.msra.mxu0 0.0
    %902 = vmatpush.msra.mxu0 0.0
    %903 = vmatpush.msra.mxu0 0.0
    %904 = vmatpush.msra.mxu0 0.0
    %905 = vmatpush.msra.mxu0 0.0
    %906 = vmatpush.msra.mxu0 0.0
    %907 = vmatpush.msra.mxu0 0.0
    %908 = vmatpush.msra.mxu0 0.0
    %909 = vmatpush.msra.mxu0 0.0
    %910 = vmatpush.msra.mxu0 0.0
    %911 = vmatpush.msra.mxu0 0.0
    %912 = vmatpush.msra.mxu0 %v899
    %913 = vmatpush.msra.mxu0 %v898
    %914 = vmatpush.msra.mxu0 %v897
    %915 = vmatpush.msra.mxu0 %v896
    %916 = vmatmul.f32.gmra.mxu0 %v666
    %v917 = vpop.f32.mrf.mxu0
    %v918 = vadd.f32 0.0, %v917
    %919 = vmatmul.f32.gmra.mxu0 %v669
    %v920 = vpop.f32.mrf.mxu0
    %v921 = vadd.f32 0.0, %v920
    %922 = vmatmul.f32.gmra.mxu0 %v672
    %v923 = vpop.f32.mrf.mxu0
    %v924 = vadd.f32 0.0, %v923
    %925 = vmatmul.f32.gmra.mxu0 %v675
    %v926 = vpop.f32.mrf.mxu0
    %v927 = vadd.f32 0.0, %v926
    %928 = vdwg.mxu0
    %929 = vmatpush.msra.mxu0 0.0
    %930 = vmatpush.msra.mxu0 0.0
    %931 = vmatpush.msra.mxu0 0.0
    %932 = vmatpush.msra.mxu0 0.0
    %933 = vmatpush.msra.mxu0 0.0
    %934 = vmatpush.msra.mxu0 0.0
    %935 = vmatpush.msra.mxu0 0.0
    %936 = vmatpush.msra.mxu0 0.0
    %937 = vmatpush.msra.mxu0 0.0
    %938 = vmatpush.msra.mxu0 0.0
    %939 = vmatpush.msra.mxu0 0.0
    %940 = vmatpush.msra.mxu0 0.0
    %941 = vmatpush.msra.mxu0 %v927
    %942 = vmatpush.msra.mxu0 %v924
    %943 = vmatpush.msra.mxu0 %v921
    %944 = vmatpush.msra.mxu0 %v918
    %945 = vmatmul.f32.gmra.mxu0 %v437
    %v946 = vpop.f32.mrf.mxu0
    %v947 = vadd.f32 0.0, %v946
    %948 = vmatmul.f32.gmra.mxu0 %v440
    %v949 = vpop.f32.mrf.mxu0
    %v950 = vadd.f32 0.0, %v949
    %951 = vmatmul.f32.gmra.mxu0 %v443
    %v952 = vpop.f32.mrf.mxu0
    %v953 = vadd.f32 0.0, %v952
    %954 = vmatmul.f32.gmra.mxu0 %v446
    %v955 = vpop.f32.mrf.mxu0
    %v956 = vadd.f32 0.0, %v955
    %957 = vdwg.mxu0
    %v958 = vadd.f32 %v892, %v947
    %v959 = vadd.f32 %v893, %v950
    %v960 = vadd.f32 %v894, %v953
    %v961 = vadd.f32 %v895, %v956
    %v962 = vld [vmem:[#allocation4 + $0x110] sm:$0xff]
    %v963 = vld [vmem:[#allocation4 + $0x118] sm:$0xff]
    %v964 = vld [vmem:[#allocation4 + $0x120] sm:$0xff]
    %v965 = vld [vmem:[#allocation4 + $0x128] sm:$0xff]
    %966 = vmatpush.msra.mxu0 0.0
    %967 = vmatpush.msra.mxu0 0.0
    %968 = vmatpush.msra.mxu0 0.0
    %969 = vmatpush.msra.mxu0 0.0
    %970 = vmatpush.msra.mxu0 0.0
    %971 = vmatpush.msra.mxu0 0.0
    %972 = vmatpush.msra.mxu0 0.0
    %973 = vmatpush.msra.mxu0 0.0
    %974 = vmatpush.msra.mxu0 0.0
    %975 = vmatpush.msra.mxu0 0.0
    %976 = vmatpush.msra.mxu0 0.0
    %977 = vmatpush.msra.mxu0 0.0
    %978 = vmatpush.msra.mxu0 %v965
    %979 = vmatpush.msra.mxu0 %v964
    %980 = vmatpush.msra.mxu0 %v963
    %981 = vmatpush.msra.mxu0 %v962
    %982 = vmatmul.f32.gmra.mxu0 %v666
    %v983 = vpop.f32.mrf.mxu0
    %v984 = vadd.f32 0.0, %v983
    %985 = vmatmul.f32.gmra.mxu0 %v669
    %v986 = vpop.f32.mrf.mxu0
    %v987 = vadd.f32 0.0, %v986
    %988 = vmatmul.f32.gmra.mxu0 %v672
    %v989 = vpop.f32.mrf.mxu0
    %v990 = vadd.f32 0.0, %v989
    %991 = vmatmul.f32.gmra.mxu0 %v675
    %v992 = vpop.f32.mrf.mxu0
    %v993 = vadd.f32 0.0, %v992
    %994 = vdwg.mxu0
    %995 = vmatpush.msra.mxu0 0.0
    %996 = vmatpush.msra.mxu0 0.0
    %997 = vmatpush.msra.mxu0 0.0
    %998 = vmatpush.msra.mxu0 0.0
    %999 = vmatpush.msra.mxu0 0.0
    %1000 = vmatpush.msra.mxu0 0.0
    %1001 = vmatpush.msra.mxu0 0.0
    %1002 = vmatpush.msra.mxu0 0.0
    %1003 = vmatpush.msra.mxu0 0.0
    %1004 = vmatpush.msra.mxu0 0.0
    %1005 = vmatpush.msra.mxu0 0.0
    %1006 = vmatpush.msra.mxu0 0.0
    %1007 = vmatpush.msra.mxu0 %v993
    %1008 = vmatpush.msra.mxu0 %v990
    %1009 = vmatpush.msra.mxu0 %v987
    %1010 = vmatpush.msra.mxu0 %v984
    %1011 = vmatmul.f32.gmra.mxu0 %v517
    %v1012 = vpop.f32.mrf.mxu0
    %v1013 = vadd.f32 0.0, %v1012
    %1014 = vmatmul.f32.gmra.mxu0 %v520
    %v1015 = vpop.f32.mrf.mxu0
    %v1016 = vadd.f32 0.0, %v1015
    %1017 = vmatmul.f32.gmra.mxu0 %v523
    %v1018 = vpop.f32.mrf.mxu0
    %v1019 = vadd.f32 0.0, %v1018
    %1020 = vmatmul.f32.gmra.mxu0 %v526
    %v1021 = vpop.f32.mrf.mxu0
    %v1022 = vadd.f32 0.0, %v1021
    %1023 = vdwg.mxu0
    %v1024 = vadd.f32 %v958, %v1013
    %v1025 = vadd.f32 %v959, %v1016
    %v1026 = vadd.f32 %v960, %v1019
    %v1027 = vadd.f32 %v961, %v1022
    %v1028 = vld [vmem:[#allocation4 + $0x130] sm:$0xff]
    %v1029 = vld [vmem:[#allocation4 + $0x138] sm:$0xff]
    %v1030 = vld [vmem:[#allocation4 + $0x140] sm:$0xff]
    %v1031 = vld [vmem:[#allocation4 + $0x148] sm:$0xff]
    %1032 = vmatpush.msra.mxu0 0.0
    %1033 = vmatpush.msra.mxu0 0.0
    %1034 = vmatpush.msra.mxu0 0.0
    %1035 = vmatpush.msra.mxu0 0.0
    %1036 = vmatpush.msra.mxu0 0.0
    %1037 = vmatpush.msra.mxu0 0.0
    %1038 = vmatpush.msra.mxu0 0.0
    %1039 = vmatpush.msra.mxu0 0.0
    %1040 = vmatpush.msra.mxu0 0.0
    %1041 = vmatpush.msra.mxu0 0.0
    %1042 = vmatpush.msra.mxu0 0.0
    %1043 = vmatpush.msra.mxu0 0.0
    %1044 = vmatpush.msra.mxu0 %v1031
    %1045 = vmatpush.msra.mxu0 %v1030
    %1046 = vmatpush.msra.mxu0 %v1029
    %1047 = vmatpush.msra.mxu0 %v1028
    %1048 = vmatmul.f32.gmra.mxu0 %v666
    %v1049 = vpop.f32.mrf.mxu0
    %v1050 = vadd.f32 0.0, %v1049
    %1051 = vmatmul.f32.gmra.mxu0 %v669
    %v1052 = vpop.f32.mrf.mxu0
    %v1053 = vadd.f32 0.0, %v1052
    %1054 = vmatmul.f32.gmra.mxu0 %v672
    %v1055 = vpop.f32.mrf.mxu0
    %v1056 = vadd.f32 0.0, %v1055
    %1057 = vmatmul.f32.gmra.mxu0 %v675
    %v1058 = vpop.f32.mrf.mxu0
    %v1059 = vadd.f32 0.0, %v1058
    %1060 = vdwg.mxu0
    %1061 = vmatpush.msra.mxu0 0.0
    %1062 = vmatpush.msra.mxu0 0.0
    %1063 = vmatpush.msra.mxu0 0.0
    %1064 = vmatpush.msra.mxu0 0.0
    %1065 = vmatpush.msra.mxu0 0.0
    %1066 = vmatpush.msra.mxu0 0.0
    %1067 = vmatpush.msra.mxu0 0.0
    %1068 = vmatpush.msra.mxu0 0.0
    %1069 = vmatpush.msra.mxu0 0.0
    %1070 = vmatpush.msra.mxu0 0.0
    %1071 = vmatpush.msra.mxu0 0.0
    %1072 = vmatpush.msra.mxu0 0.0
    %1073 = vmatpush.msra.mxu0 %v1059
    %1074 = vmatpush.msra.mxu0 %v1056
    %1075 = vmatpush.msra.mxu0 %v1053
    %1076 = vmatpush.msra.mxu0 %v1050
    %1077 = vmatmul.f32.gmra.mxu0 %v597
    %v1078 = vpop.f32.mrf.mxu0
    %v1079 = vadd.f32 0.0, %v1078
    %1080 = vmatmul.f32.gmra.mxu0 %v600
    %v1081 = vpop.f32.mrf.mxu0
    %v1082 = vadd.f32 0.0, %v1081
    %1083 = vmatmul.f32.gmra.mxu0 %v603
    %v1084 = vpop.f32.mrf.mxu0
    %v1085 = vadd.f32 0.0, %v1084
    %1086 = vmatmul.f32.gmra.mxu0 %v606
    %v1087 = vpop.f32.mrf.mxu0
    %v1088 = vadd.f32 0.0, %v1087
    %1089 = vdwg.mxu0
    %v1090 = vadd.f32 %v1024, %v1079
    %v1091 = vadd.f32 %v1025, %v1082
    %v1092 = vadd.f32 %v1026, %v1085
    %v1093 = vadd.f32 %v1027, %v1088
    %v1094 = vld [vmem:[%s2 + $0x4] sm:$0x1]
    %v1095 = vperm.slane %v1094, 0
    %v1096 = vmul.f32 %v1090, %v1095
    %v1097 = vmul.f32 %v1091, %v1095
    %v1098 = vmul.f32 %v1092, %v1095
    %v1099 = vmul.f32 %v1093, %v1095
    %v1100 = vld [vmem:[%s2 + $0x5] sm:$0x1]
    %v1101 = vperm.slane %v1100, 0
    %v1102 = vadd.f32 %v1096, %v1101
    %v1103 = vadd.f32 %v1097, %v1101
    %v1104 = vadd.f32 %v1098, %v1101
    %v1105 = vadd.f32 %v1099, %v1101
    %v1106 = vld [vmem:[#allocation4 + $0x150] sm:$0xff]
    %v1107 = vld [vmem:[#allocation4 + $0x158] sm:$0xff]
    %v1108 = vld [vmem:[%s2 + $0x6] sm:$0x1]
    %v1109 = vperm.slane %v1108, 0
    %1110 = vmatpush.msra.mxu0 0.0
    %1111 = vmatpush.msra.mxu0 0.0
    %1112 = vmatpush.msra.mxu0 0.0
    %1113 = vmatpush.msra.mxu0 0.0
    %1114 = vmatpush.msra.mxu0 0.0
    %1115 = vmatpush.msra.mxu0 0.0
    %1116 = vmatpush.msra.mxu0 0.0
    %1117 = vmatpush.msra.mxu0 0.0
    %1118 = vmatpush.msra.mxu0 0.0
    %1119 = vmatpush.msra.mxu0 0.0
    %1120 = vmatpush.msra.mxu0 0.0
    %1121 = vmatpush.msra.mxu0 0.0
    %1122 = vmatpush.msra.mxu0 0.0
    %1123 = vmatpush.msra.mxu0 0.0
    %1124 = vmatpush.msra.mxu0 %v1107
    %1125 = vmatpush.msra.mxu0 %v1106
    %1126 = vmatmul.f32.gmra.mxu0 %v126
    %v1127 = vpop.f32.mrf.mxu0
    %v1128 = vadd.f32 %v1109, %v1127
    %1129 = vmatmul.f32.gmra.mxu0 %v129
    %v1130 = vpop.f32.mrf.mxu0
    %v1131 = vadd.f32 %v1109, %v1130
    %1132 = vmatmul.f32.gmra.mxu0 %v132
    %v1133 = vpop.f32.mrf.mxu0
    %v1134 = vadd.f32 %v1109, %v1133
    %1135 = vmatmul.f32.gmra.mxu0 %v135
    %v1136 = vpop.f32.mrf.mxu0
    %v1137 = vadd.f32 %v1109, %v1136
    %1138 = vdwg.mxu0
    %v1139 = vadd.f32 %v1102, %v1128
    %v1140 = vadd.f32 %v1103, %v1131
    %v1141 = vadd.f32 %v1104, %v1134
    %v1142 = vadd.f32 %v1105, %v1137
    %v1143 = vmax.f32 %v1139, 0.0
    %v1144 = vmax.f32 %v1140, 0.0
    %v1145 = vmax.f32 %v1141, 0.0
    %v1146 = vmax.f32 %v1142, 0.0
    %v1147 = vld [vmem:[#allocation6] sm:$0xff]
    %v1148 = vld [vmem:[#allocation6 + $0x8] sm:$0xff]
    %v1149 = vld [vmem:[#allocation6 + $0x10] sm:$0xff]
    %v1150 = vld [vmem:[#allocation6 + $0x18] sm:$0xff]
    %v1151 = vld [vmem:[#allocation6 + $0x20] sm:$0xff]
    %v1152 = vld [vmem:[#allocation6 + $0x28] sm:$0xff]
    %v1153 = vld [vmem:[#allocation6 + $0x30] sm:$0xff]
    %v1154 = vld [vmem:[#allocation6 + $0x38] sm:$0xff]
    %v1156 = vsel %vm170, %v1143, 0
    %v1159 = vsel %vm170, %v1144, 0
    %v1162 = vsel %vm170, %v1145, 0
    %v1165 = vsel %vm170, %v1146, 0
    %1167 = vmatpush.msra.mxu0 0.0
    %1168 = vmatpush.msra.mxu0 0.0
    %1169 = vmatpush.msra.mxu0 0.0
    %1170 = vmatpush.msra.mxu0 0.0
    %1171 = vmatpush.msra.mxu0 0.0
    %1172 = vmatpush.msra.mxu0 0.0
    %1173 = vmatpush.msra.mxu0 0.0
    %1174 = vmatpush.msra.mxu0 0.0
    %1175 = vmatpush.msra.mxu0 0.0
    %1176 = vmatpush.msra.mxu0 0.0
    %1177 = vmatpush.msra.mxu0 0.0
    %1178 = vmatpush.msra.mxu0 0.0
    %1179 = vmatpush.msra.mxu0 %v1154
    %1180 = vmatpush.msra.mxu0 %v1153
    %1181 = vmatpush.msra.mxu0 %v1152
    %1182 = vmatpush.msra.mxu0 %v1151
    %1183 = vmatmul.f32.gmra.mxu0 %v1156
    %v1184 = vpop.f32.mrf.mxu0
    %v1185 = vadd.f32 0.0, %v1184
    %1186 = vmatmul.f32.gmra.mxu0 %v1159
    %v1187 = vpop.f32.mrf.mxu0
    %v1188 = vadd.f32 0.0, %v1187
    %1189 = vmatmul.f32.gmra.mxu0 %v1162
    %v1190 = vpop.f32.mrf.mxu0
    %v1191 = vadd.f32 0.0, %v1190
    %1192 = vmatmul.f32.gmra.mxu0 %v1165
    %v1193 = vpop.f32.mrf.mxu0
    %v1194 = vadd.f32 0.0, %v1193
    %1195 = vdwg.mxu0
    %1196 = vmatpush.msra.mxu0 0.0
    %1197 = vmatpush.msra.mxu0 0.0
    %1198 = vmatpush.msra.mxu0 0.0
    %1199 = vmatpush.msra.mxu0 0.0
    %1200 = vmatpush.msra.mxu0 0.0
    %1201 = vmatpush.msra.mxu0 0.0
    %1202 = vmatpush.msra.mxu0 0.0
    %1203 = vmatpush.msra.mxu0 0.0
    %1204 = vmatpush.msra.mxu0 0.0
    %1205 = vmatpush.msra.mxu0 0.0
    %1206 = vmatpush.msra.mxu0 0.0
    %1207 = vmatpush.msra.mxu0 0.0
    %1208 = vmatpush.msra.mxu0 %v1194
    %1209 = vmatpush.msra.mxu0 %v1191
    %1210 = vmatpush.msra.mxu0 %v1188
    %1211 = vmatpush.msra.mxu0 %v1185
    %1212 = vmatmul.f32.gmra.mxu0 %v277
    %v1213 = vpop.f32.mrf.mxu0
    %v1214 = vadd.f32 0.0, %v1213
    %1215 = vmatmul.f32.gmra.mxu0 %v280
    %v1216 = vpop.f32.mrf.mxu0
    %v1217 = vadd.f32 0.0, %v1216
    %1218 = vmatmul.f32.gmra.mxu0 %v283
    %v1219 = vpop.f32.mrf.mxu0
    %v1220 = vadd.f32 0.0, %v1219
    %1221 = vmatmul.f32.gmra.mxu0 %v286
    %v1222 = vpop.f32.mrf.mxu0
    %v1223 = vadd.f32 0.0, %v1222
    %1224 = vdwg.mxu0
    %1225 = vmatpush.msra.mxu0 0.0
    %1226 = vmatpush.msra.mxu0 0.0
    %1227 = vmatpush.msra.mxu0 0.0
    %1228 = vmatpush.msra.mxu0 0.0
    %1229 = vmatpush.msra.mxu0 0.0
    %1230 = vmatpush.msra.mxu0 0.0
    %1231 = vmatpush.msra.mxu0 0.0
    %1232 = vmatpush.msra.mxu0 0.0
    %1233 = vmatpush.msra.mxu0 0.0
    %1234 = vmatpush.msra.mxu0 0.0
    %1235 = vmatpush.msra.mxu0 0.0
    %1236 = vmatpush.msra.mxu0 0.0
    %1237 = vmatpush.msra.mxu0 %v1150
    %1238 = vmatpush.msra.mxu0 %v1149
    %1239 = vmatpush.msra.mxu0 %v1148
    %1240 = vmatpush.msra.mxu0 %v1147
    %1241 = vmatmul.f32.gmra.mxu0 %v1156
    %v1242 = vpop.f32.mrf.mxu0
    %v1243 = vadd.f32 %v1214, %v1242
    %1244 = vmatmul.f32.gmra.mxu0 %v1159
    %v1245 = vpop.f32.mrf.mxu0
    %v1246 = vadd.f32 %v1217, %v1245
    %1247 = vmatmul.f32.gmra.mxu0 %v1162
    %v1248 = vpop.f32.mrf.mxu0
    %v1249 = vadd.f32 %v1220, %v1248
    %1250 = vmatmul.f32.gmra.mxu0 %v1165
    %v1251 = vpop.f32.mrf.mxu0
    %v1252 = vadd.f32 %v1223, %v1251
    %1253 = vdwg.mxu0
    %v1254 = vld [vmem:[#allocation6 + $0x40] sm:$0xff]
    %v1255 = vld [vmem:[#allocation6 + $0x48] sm:$0xff]
    %v1256 = vld [vmem:[#allocation6 + $0x50] sm:$0xff]
    %v1257 = vld [vmem:[#allocation6 + $0x58] sm:$0xff]
    %1258 = vmatpush.msra.mxu0 0.0
    %1259 = vmatpush.msra.mxu0 0.0
    %1260 = vmatpush.msra.mxu0 0.0
    %1261 = vmatpush.msra.mxu0 0.0
    %1262 = vmatpush.msra.mxu0 0.0
    %1263 = vmatpush.msra.mxu0 0.0
    %1264 = vmatpush.msra.mxu0 0.0
    %1265 = vmatpush.msra.mxu0 0.0
    %1266 = vmatpush.msra.mxu0 0.0
    %1267 = vmatpush.msra.mxu0 0.0
    %1268 = vmatpush.msra.mxu0 0.0
    %1269 = vmatpush.msra.mxu0 0.0
    %1270 = vmatpush.msra.mxu0 %v1257
    %1271 = vmatpush.msra.mxu0 %v1256
    %1272 = vmatpush.msra.mxu0 %v1255
    %1273 = vmatpush.msra.mxu0 %v1254
    %1274 = vmatmul.f32.gmra.mxu0 %v1156
    %v1275 = vpop.f32.mrf.mxu0
    %v1276 = vadd.f32 0.0, %v1275
    %1277 = vmatmul.f32.gmra.mxu0 %v1159
    %v1278 = vpop.f32.mrf.mxu0
    %v1279 = vadd.f32 0.0, %v1278
    %1280 = vmatmul.f32.gmra.mxu0 %v1162
    %v1281 = vpop.f32.mrf.mxu0
    %v1282 = vadd.f32 0.0, %v1281
    %1283 = vmatmul.f32.gmra.mxu0 %v1165
    %v1284 = vpop.f32.mrf.mxu0
    %v1285 = vadd.f32 0.0, %v1284
    %1286 = vdwg.mxu0
    %1287 = vmatpush.msra.mxu0 0.0
    %1288 = vmatpush.msra.mxu0 0.0
    %1289 = vmatpush.msra.mxu0 0.0
    %1290 = vmatpush.msra.mxu0 0.0
    %1291 = vmatpush.msra.mxu0 0.0
    %1292 = vmatpush.msra.mxu0 0.0
    %1293 = vmatpush.msra.mxu0 0.0
    %1294 = vmatpush.msra.mxu0 0.0
    %1295 = vmatpush.msra.mxu0 0.0
    %1296 = vmatpush.msra.mxu0 0.0
    %1297 = vmatpush.msra.mxu0 0.0
    %1298 = vmatpush.msra.mxu0 0.0
    %1299 = vmatpush.msra.mxu0 %v1285
    %1300 = vmatpush.msra.mxu0 %v1282
    %1301 = vmatpush.msra.mxu0 %v1279
    %1302 = vmatpush.msra.mxu0 %v1276
    %1303 = vmatmul.f32.gmra.mxu0 %v437
    %v1304 = vpop.f32.mrf.mxu0
    %v1305 = vadd.f32 0.0, %v1304
    %1306 = vmatmul.f32.gmra.mxu0 %v440
    %v1307 = vpop.f32.mrf.mxu0
    %v1308 = vadd.f32 0.0, %v1307
    %1309 = vmatmul.f32.gmra.mxu0 %v443
    %v1310 = vpop.f32.mrf.mxu0
    %v1311 = vadd.f32 0.0, %v1310
    %1312 = vmatmul.f32.gmra.mxu0 %v446
    %v1313 = vpop.f32.mrf.mxu0
    %v1314 = vadd.f32 0.0, %v1313
    %1315 = vdwg.mxu0
    %v1316 = vadd.f32 %v1243, %v1305
    %v1317 = vadd.f32 %v1246, %v1308
    %v1318 = vadd.f32 %v1249, %v1311
    %v1319 = vadd.f32 %v1252, %v1314
    %v1320 = vld [vmem:[#allocation6 + $0x60] sm:$0xff]
    %v1321 = vld [vmem:[#allocation6 + $0x68] sm:$0xff]
    %v1322 = vld [vmem:[#allocation6 + $0x70] sm:$0xff]
    %v1323 = vld [vmem:[#allocation6 + $0x78] sm:$0xff]
    %1324 = vmatpush.msra.mxu0 0.0
    %1325 = vmatpush.msra.mxu0 0.0
    %1326 = vmatpush.msra.mxu0 0.0
    %1327 = vmatpush.msra.mxu0 0.0
    %1328 = vmatpush.msra.mxu0 0.0
    %1329 = vmatpush.msra.mxu0 0.0
    %1330 = vmatpush.msra.mxu0 0.0
    %1331 = vmatpush.msra.mxu0 0.0
    %1332 = vmatpush.msra.mxu0 0.0
    %1333 = vmatpush.msra.mxu0 0.0
    %1334 = vmatpush.msra.mxu0 0.0
    %1335 = vmatpush.msra.mxu0 0.0
    %1336 = vmatpush.msra.mxu0 %v1323
    %1337 = vmatpush.msra.mxu0 %v1322
    %1338 = vmatpush.msra.mxu0 %v1321
    %1339 = vmatpush.msra.mxu0 %v1320
    %1340 = vmatmul.f32.gmra.mxu0 %v1156
    %v1341 = vpop.f32.mrf.mxu0
    %v1342 = vadd.f32 0.0, %v1341
    %1343 = vmatmul.f32.gmra.mxu0 %v1159
    %v1344 = vpop.f32.mrf.mxu0
    %v1345 = vadd.f32 0.0, %v1344
    %1346 = vmatmul.f32.gmra.mxu0 %v1162
    %v1347 = vpop.f32.mrf.mxu0
    %v1348 = vadd.f32 0.0, %v1347
    %1349 = vmatmul.f32.gmra.mxu0 %v1165
    %v1350 = vpop.f32.mrf.mxu0
    %v1351 = vadd.f32 0.0, %v1350
    %1352 = vdwg.mxu0
    %1353 = vmatpush.msra.mxu0 0.0
    %1354 = vmatpush.msra.mxu0 0.0
    %1355 = vmatpush.msra.mxu0 0.0
    %1356 = vmatpush.msra.mxu0 0.0
    %1357 = vmatpush.msra.mxu0 0.0
    %1358 = vmatpush.msra.mxu0 0.0
    %1359 = vmatpush.msra.mxu0 0.0
    %1360 = vmatpush.msra.mxu0 0.0
    %1361 = vmatpush.msra.mxu0 0.0
    %1362 = vmatpush.msra.mxu0 0.0
    %1363 = vmatpush.msra.mxu0 0.0
    %1364 = vmatpush.msra.mxu0 0.0
    %1365 = vmatpush.msra.mxu0 %v1351
    %1366 = vmatpush.msra.mxu0 %v1348
    %1367 = vmatpush.msra.mxu0 %v1345
    %1368 = vmatpush.msra.mxu0 %v1342
    %1369 = vmatmul.f32.gmra.mxu0 %v597
    %v1370 = vpop.f32.mrf.mxu0
    %v1371 = vadd.f32 0.0, %v1370
    %1372 = vmatmul.f32.gmra.mxu0 %v600
    %v1373 = vpop.f32.mrf.mxu0
    %v1374 = vadd.f32 0.0, %v1373
    %1375 = vmatmul.f32.gmra.mxu0 %v603
    %v1376 = vpop.f32.mrf.mxu0
    %v1377 = vadd.f32 0.0, %v1376
    %1378 = vmatmul.f32.gmra.mxu0 %v606
    %v1379 = vpop.f32.mrf.mxu0
    %v1380 = vadd.f32 0.0, %v1379
    %1381 = vdwg.mxu0
    %v1382 = vadd.f32 %v1316, %v1371
    %v1383 = vadd.f32 %v1317, %v1374
    %v1384 = vadd.f32 %v1318, %v1377
    %v1385 = vadd.f32 %v1319, %v1380
    %v1386 = vld [vmem:[#allocation6 + $0x80] sm:$0xff]
    %v1387 = vld [vmem:[#allocation6 + $0x88] sm:$0xff]
    %v1388 = vld [vmem:[#allocation6 + $0x90] sm:$0xff]
    %v1389 = vld [vmem:[#allocation6 + $0x98] sm:$0xff]
    %1390 = vmatpush.msra.mxu0 0.0
    %1391 = vmatpush.msra.mxu0 0.0
    %1392 = vmatpush.msra.mxu0 0.0
    %1393 = vmatpush.msra.mxu0 0.0
    %1394 = vmatpush.msra.mxu0 0.0
    %1395 = vmatpush.msra.mxu0 0.0
    %1396 = vmatpush.msra.mxu0 0.0
    %1397 = vmatpush.msra.mxu0 0.0
    %1398 = vmatpush.msra.mxu0 0.0
    %1399 = vmatpush.msra.mxu0 0.0
    %1400 = vmatpush.msra.mxu0 0.0
    %1401 = vmatpush.msra.mxu0 0.0
    %1402 = vmatpush.msra.mxu0 %v1389
    %1403 = vmatpush.msra.mxu0 %v1388
    %1404 = vmatpush.msra.mxu0 %v1387
    %1405 = vmatpush.msra.mxu0 %v1386
    %1406 = vmatmul.f32.gmra.mxu0 %v1156
    %v1407 = vpop.f32.mrf.mxu0
    %v1408 = vadd.f32 0.0, %v1407
    %1409 = vmatmul.f32.gmra.mxu0 %v1159
    %v1410 = vpop.f32.mrf.mxu0
    %v1411 = vadd.f32 0.0, %v1410
    %1412 = vmatmul.f32.gmra.mxu0 %v1162
    %v1413 = vpop.f32.mrf.mxu0
    %v1414 = vadd.f32 0.0, %v1413
    %1415 = vmatmul.f32.gmra.mxu0 %v1165
    %v1416 = vpop.f32.mrf.mxu0
    %v1417 = vadd.f32 0.0, %v1416
    %1418 = vdwg.mxu0
    %v1419 = vld [vmem:[#allocation2 + $0xc0] sm:$0xff]
    %v1420 = vld [vmem:[#allocation2 + $0xc8] sm:$0xff]
    %v1421 = vld [vmem:[#allocation2 + $0xd0] sm:$0xff]
    %v1422 = vld [vmem:[#allocation2 + $0xd8] sm:$0xff]
    %v1424 = vsel %vm170, %v1419, 0
    %v1427 = vsel %vm170, %v1420, 0
    %v1430 = vsel %vm170, %v1421, 0
    %v1433 = vsel %vm170, %v1422, 0
    %1435 = vmatpush.msra.mxu0 0.0
    %1436 = vmatpush.msra.mxu0 0.0
    %1437 = vmatpush.msra.mxu0 0.0
    %1438 = vmatpush.msra.mxu0 0.0
    %1439 = vmatpush.msra.mxu0 0.0
    %1440 = vmatpush.msra.mxu0 0.0
    %1441 = vmatpush.msra.mxu0 0.0
    %1442 = vmatpush.msra.mxu0 0.0
    %1443 = vmatpush.msra.mxu0 0.0
    %1444 = vmatpush.msra.mxu0 0.0
    %1445 = vmatpush.msra.mxu0 0.0
    %1446 = vmatpush.msra.mxu0 0.0
    %1447 = vmatpush.msra.mxu0 %v1417
    %1448 = vmatpush.msra.mxu0 %v1414
    %1449 = vmatpush.msra.mxu0 %v1411
    %1450 = vmatpush.msra.mxu0 %v1408
    %1451 = vmatmul.f32.gmra.mxu0 %v1424
    %v1452 = vpop.f32.mrf.mxu0
    %v1453 = vadd.f32 0.0, %v1452
    %1454 = vmatmul.f32.gmra.mxu0 %v1427
    %v1455 = vpop.f32.mrf.mxu0
    %v1456 = vadd.f32 0.0, %v1455
    %1457 = vmatmul.f32.gmra.mxu0 %v1430
    %v1458 = vpop.f32.mrf.mxu0
    %v1459 = vadd.f32 0.0, %v1458
    %1460 = vmatmul.f32.gmra.mxu0 %v1433
    %v1461 = vpop.f32.mrf.mxu0
    %v1462 = vadd.f32 0.0, %v1461
    %1463 = vdwg.mxu0
    %v1464 = vadd.f32 %v1382, %v1453
    %v1465 = vadd.f32 %v1383, %v1456
    %v1466 = vadd.f32 %v1384, %v1459
    %v1467 = vadd.f32 %v1385, %v1462
    %v1468 = vld [vmem:[#allocation6 + $0xa0] sm:$0xff]
    %v1469 = vld [vmem:[#allocation6 + $0xa8] sm:$0xff]
    %v1470 = vld [vmem:[#allocation6 + $0xb0] sm:$0xff]
    %v1471 = vld [vmem:[#allocation6 + $0xb8] sm:$0xff]
    %1472 = vmatpush.msra.mxu0 0.0
    %1473 = vmatpush.msra.mxu0 0.0
    %1474 = vmatpush.msra.mxu0 0.0
    %1475 = vmatpush.msra.mxu0 0.0
    %1476 = vmatpush.msra.mxu0 0.0
    %1477 = vmatpush.msra.mxu0 0.0
    %1478 = vmatpush.msra.mxu0 0.0
    %1479 = vmatpush.msra.mxu0 0.0
    %1480 = vmatpush.msra.mxu0 0.0
    %1481 = vmatpush.msra.mxu0 0.0
    %1482 = vmatpush.msra.mxu0 0.0
    %1483 = vmatpush.msra.mxu0 0.0
    %1484 = vmatpush.msra.mxu0 %v1471
    %1485 = vmatpush.msra.mxu0 %v1470
    %1486 = vmatpush.msra.mxu0 %v1469
    %1487 = vmatpush.msra.mxu0 %v1468
    %1488 = vmatmul.f32.gmra.mxu0 %v1156
    %v1489 = vpop.f32.mrf.mxu0
    %v1490 = vadd.f32 0.0, %v1489
    %1491 = vmatmul.f32.gmra.mxu0 %v1159
    %v1492 = vpop.f32.mrf.mxu0
    %v1493 = vadd.f32 0.0, %v1492
    %1494 = vmatmul.f32.gmra.mxu0 %v1162
    %v1495 = vpop.f32.mrf.mxu0
    %v1496 = vadd.f32 0.0, %v1495
    %1497 = vmatmul.f32.gmra.mxu0 %v1165
    %v1498 = vpop.f32.mrf.mxu0
    %v1499 = vadd.f32 0.0, %v1498
    %1500 = vdwg.mxu0
    %v1501 = vld [vmem:[#allocation2 + $0xe0] sm:$0xff]
    %v1502 = vld [vmem:[#allocation2 + $0xe8] sm:$0xff]
    %v1503 = vld [vmem:[#allocation2 + $0xf0] sm:$0xff]
    %v1504 = vld [vmem:[#allocation2 + $0xf8] sm:$0xff]
    %v1506 = vsel %vm170, %v1501, 0
    %v1509 = vsel %vm170, %v1502, 0
    %v1512 = vsel %vm170, %v1503, 0
    %v1515 = vsel %vm170, %v1504, 0
    %1517 = vmatpush.msra.mxu0 0.0
    %1518 = vmatpush.msra.mxu0 0.0
    %1519 = vmatpush.msra.mxu0 0.0
    %1520 = vmatpush.msra.mxu0 0.0
    %1521 = vmatpush.msra.mxu0 0.0
    %1522 = vmatpush.msra.mxu0 0.0
    %1523 = vmatpush.msra.mxu0 0.0
    %1524 = vmatpush.msra.mxu0 0.0
    %1525 = vmatpush.msra.mxu0 0.0
    %1526 = vmatpush.msra.mxu0 0.0
    %1527 = vmatpush.msra.mxu0 0.0
    %1528 = vmatpush.msra.mxu0 0.0
    %1529 = vmatpush.msra.mxu0 %v1499
    %1530 = vmatpush.msra.mxu0 %v1496
    %1531 = vmatpush.msra.mxu0 %v1493
    %1532 = vmatpush.msra.mxu0 %v1490
    %1533 = vmatmul.f32.gmra.mxu0 %v1506
    %v1534 = vpop.f32.mrf.mxu0
    %v1535 = vadd.f32 0.0, %v1534
    %1536 = vmatmul.f32.gmra.mxu0 %v1509
    %v1537 = vpop.f32.mrf.mxu0
    %v1538 = vadd.f32 0.0, %v1537
    %1539 = vmatmul.f32.gmra.mxu0 %v1512
    %v1540 = vpop.f32.mrf.mxu0
    %v1541 = vadd.f32 0.0, %v1540
    %1542 = vmatmul.f32.gmra.mxu0 %v1515
    %v1543 = vpop.f32.mrf.mxu0
    %v1544 = vadd.f32 0.0, %v1543
    %1545 = vdwg.mxu0
    %v1546 = vadd.f32 %v1464, %v1535
    %v1547 = vadd.f32 %v1465, %v1538
    %v1548 = vadd.f32 %v1466, %v1541
    %v1549 = vadd.f32 %v1467, %v1544
    %v1550 = vld [vmem:[#allocation6 + $0xc0] sm:$0xff]
    %v1551 = vld [vmem:[#allocation6 + $0xc8] sm:$0xff]
    %v1552 = vld [vmem:[#allocation6 + $0xd0] sm:$0xff]
    %v1553 = vld [vmem:[#allocation6 + $0xd8] sm:$0xff]
    %1554 = vmatpush.msra.mxu0 0.0
    %1555 = vmatpush.msra.mxu0 0.0
    %1556 = vmatpush.msra.mxu0 0.0
    %1557 = vmatpush.msra.mxu0 0.0
    %1558 = vmatpush.msra.mxu0 0.0
    %1559 = vmatpush.msra.mxu0 0.0
    %1560 = vmatpush.msra.mxu0 0.0
    %1561 = vmatpush.msra.mxu0 0.0
    %1562 = vmatpush.msra.mxu0 0.0
    %1563 = vmatpush.msra.mxu0 0.0
    %1564 = vmatpush.msra.mxu0 0.0
    %1565 = vmatpush.msra.mxu0 0.0
    %1566 = vmatpush.msra.mxu0 %v1553
    %1567 = vmatpush.msra.mxu0 %v1552
    %1568 = vmatpush.msra.mxu0 %v1551
    %1569 = vmatpush.msra.mxu0 %v1550
    %1570 = vmatmul.f32.gmra.mxu0 %v1156
    %v1571 = vpop.f32.mrf.mxu0
    %v1572 = vadd.f32 0.0, %v1571
    %1573 = vmatmul.f32.gmra.mxu0 %v1159
    %v1574 = vpop.f32.mrf.mxu0
    %v1575 = vadd.f32 0.0, %v1574
    %1576 = vmatmul.f32.gmra.mxu0 %v1162
    %v1577 = vpop.f32.mrf.mxu0
    %v1578 = vadd.f32 0.0, %v1577
    %1579 = vmatmul.f32.gmra.mxu0 %v1165
    %v1580 = vpop.f32.mrf.mxu0
    %v1581 = vadd.f32 0.0, %v1580
    %1582 = vdwg.mxu0
    %v1583 = vld [vmem:[#allocation2 + $0x100] sm:$0xff]
    %v1584 = vld [vmem:[#allocation2 + $0x108] sm:$0xff]
    %v1585 = vld [vmem:[#allocation2 + $0x110] sm:$0xff]
    %v1586 = vld [vmem:[#allocation2 + $0x118] sm:$0xff]
    %v1588 = vsel %vm170, %v1583, 0
    %v1591 = vsel %vm170, %v1584, 0
    %v1594 = vsel %vm170, %v1585, 0
    %v1597 = vsel %vm170, %v1586, 0
    %1599 = vmatpush.msra.mxu0 0.0
    %1600 = vmatpush.msra.mxu0 0.0
    %1601 = vmatpush.msra.mxu0 0.0
    %1602 = vmatpush.msra.mxu0 0.0
    %1603 = vmatpush.msra.mxu0 0.0
    %1604 = vmatpush.msra.mxu0 0.0
    %1605 = vmatpush.msra.mxu0 0.0
    %1606 = vmatpush.msra.mxu0 0.0
    %1607 = vmatpush.msra.mxu0 0.0
    %1608 = vmatpush.msra.mxu0 0.0
    %1609 = vmatpush.msra.mxu0 0.0
    %1610 = vmatpush.msra.mxu0 0.0
    %1611 = vmatpush.msra.mxu0 %v1581
    %1612 = vmatpush.msra.mxu0 %v1578
    %1613 = vmatpush.msra.mxu0 %v1575
    %1614 = vmatpush.msra.mxu0 %v1572
    %1615 = vmatmul.f32.gmra.mxu0 %v1588
    %v1616 = vpop.f32.mrf.mxu0
    %v1617 = vadd.f32 0.0, %v1616
    %1618 = vmatmul.f32.gmra.mxu0 %v1591
    %v1619 = vpop.f32.mrf.mxu0
    %v1620 = vadd.f32 0.0, %v1619
    %1621 = vmatmul.f32.gmra.mxu0 %v1594
    %v1622 = vpop.f32.mrf.mxu0
    %v1623 = vadd.f32 0.0, %v1622
    %1624 = vmatmul.f32.gmra.mxu0 %v1597
    %v1625 = vpop.f32.mrf.mxu0
    %v1626 = vadd.f32 0.0, %v1625
    %1627 = vdwg.mxu0
    %v1628 = vadd.f32 %v1546, %v1617
    %v1629 = vadd.f32 %v1547, %v1620
    %v1630 = vadd.f32 %v1548, %v1623
    %v1631 = vadd.f32 %v1549, %v1626
    %v1632 = vld [vmem:[%s2 + $0x7] sm:$0x1]
    %v1633 = vperm.slane %v1632, 0
    %v1634 = vmul.f32 %v1628, %v1633
    %v1635 = vmul.f32 %v1629, %v1633
    %v1636 = vmul.f32 %v1630, %v1633
    %v1637 = vmul.f32 %v1631, %v1633
    %v1638 = vld [vmem:[%s2 + $0x8] sm:$0x1]
    %v1639 = vperm.slane %v1638, 0
    %v1640 = vadd.f32 %v1634, %v1639
    %v1641 = vadd.f32 %v1635, %v1639
    %v1642 = vadd.f32 %v1636, %v1639
    %v1643 = vadd.f32 %v1637, %v1639
    %v1644 = vmax.f32 %v1640, 0.0
    %v1645 = vmax.f32 %v1641, 0.0
    %v1646 = vmax.f32 %v1642, 0.0
    %v1647 = vmax.f32 %v1643, 0.0
    %v1648 = vld [vmem:[#allocation6 + $0xe0] sm:$0xff]
    %v1649 = vld [vmem:[#allocation6 + $0xe8] sm:$0xff]
    %v1650 = vld [vmem:[#allocation6 + $0xf0] sm:$0xff]
    %v1651 = vld [vmem:[#allocation6 + $0xf8] sm:$0xff]
    %v1652 = vld [vmem:[#allocation6 + $0x100] sm:$0xff]
    %v1653 = vld [vmem:[#allocation6 + $0x108] sm:$0xff]
    %v1654 = vld [vmem:[#allocation6 + $0x110] sm:$0xff]
    %v1655 = vld [vmem:[#allocation6 + $0x118] sm:$0xff]
    %v1656 = vld [vmem:[#allocation6 + $0x120] sm:$0xff]
    %v1657 = vld [vmem:[#allocation6 + $0x128] sm:$0xff]
    %v1658 = vld [vmem:[#allocation6 + $0x130] sm:$0xff]
    %v1659 = vld [vmem:[#allocation6 + $0x138] sm:$0xff]
    %v1660 = vld [vmem:[#allocation6 + $0x140] sm:$0xff]
    %v1661 = vld [vmem:[#allocation6 + $0x148] sm:$0xff]
    %v1662 = vld [vmem:[#allocation6 + $0x150] sm:$0xff]
    %v1663 = vld [vmem:[#allocation6 + $0x158] sm:$0xff]
    %vm1664 = vcmask 523264
    %v1666 = vsel %vm1664, %v1644, 0
    %v1669 = vsel %vm1664, %v1645, 0
    %v1672 = vsel %vm1664, %v1646, 0
    %v1675 = vsel %vm1664, %v1647, 0
    %1677 = vmatpush.msra.mxu0 0.0
    %1678 = vmatpush.msra.mxu0 0.0
    %1679 = vmatpush.msra.mxu0 0.0
    %1680 = vmatpush.msra.mxu0 0.0
    %1681 = vmatpush.msra.mxu0 0.0
    %1682 = vmatpush.msra.mxu0 0.0
    %1683 = vmatpush.msra.mxu0 0.0
    %1684 = vmatpush.msra.mxu0 0.0
    %1685 = vmatpush.msra.mxu0 %v1663
    %1686 = vmatpush.msra.mxu0 %v1662
    %1687 = vmatpush.msra.mxu0 %v1661
    %1688 = vmatpush.msra.mxu0 %v1660
    %1689 = vmatpush.msra.mxu0 %v1659
    %1690 = vmatpush.msra.mxu0 %v1658
    %1691 = vmatpush.msra.mxu0 %v1657
    %1692 = vmatpush.msra.mxu0 %v1656
    %1693 = vmatmul.f32.gmra.mxu0 %v1666
    %v1694 = vpop.f32.mrf.mxu0
    %v1695 = vadd.f32 0.0, %v1694
    %1696 = vmatmul.f32.gmra.mxu0 %v1669
    %v1697 = vpop.f32.mrf.mxu0
    %v1698 = vadd.f32 0.0, %v1697
    %1699 = vmatmul.f32.gmra.mxu0 %v1672
    %v1700 = vpop.f32.mrf.mxu0
    %v1701 = vadd.f32 0.0, %v1700
    %1702 = vmatmul.f32.gmra.mxu0 %v1675
    %v1703 = vpop.f32.mrf.mxu0
    %v1704 = vadd.f32 0.0, %v1703
    %1705 = vdwg.mxu0
    %1706 = vmatpush.msra.mxu0 0.0
    %1707 = vmatpush.msra.mxu0 0.0
    %1708 = vmatpush.msra.mxu0 0.0
    %1709 = vmatpush.msra.mxu0 0.0
    %1710 = vmatpush.msra.mxu0 0.0
    %1711 = vmatpush.msra.mxu0 0.0
    %1712 = vmatpush.msra.mxu0 0.0
    %1713 = vmatpush.msra.mxu0 0.0
    %1714 = vmatpush.msra.mxu0 0.0
    %1715 = vmatpush.msra.mxu0 0.0
    %1716 = vmatpush.msra.mxu0 0.0
    %1717 = vmatpush.msra.mxu0 0.0
    %1718 = vmatpush.msra.mxu0 %v1704
    %1719 = vmatpush.msra.mxu0 %v1701
    %1720 = vmatpush.msra.mxu0 %v1698
    %1721 = vmatpush.msra.mxu0 %v1695
    %1722 = vmatmul.f32.gmra.mxu0 %v277
    %v1723 = vpop.f32.mrf.mxu0
    %v1724 = vadd.f32 0.0, %v1723
    %1725 = vmatmul.f32.gmra.mxu0 %v280
    %v1726 = vpop.f32.mrf.mxu0
    %v1727 = vadd.f32 0.0, %v1726
    %1728 = vmatmul.f32.gmra.mxu0 %v283
    %v1729 = vpop.f32.mrf.mxu0
    %v1730 = vadd.f32 0.0, %v1729
    %1731 = vmatmul.f32.gmra.mxu0 %v286
    %v1732 = vpop.f32.mrf.mxu0
    %v1733 = vadd.f32 0.0, %v1732
    %1734 = vdwg.mxu0
    %1735 = vmatpush.msra.mxu0 0.0
    %1736 = vmatpush.msra.mxu0 0.0
    %1737 = vmatpush.msra.mxu0 0.0
    %1738 = vmatpush.msra.mxu0 0.0
    %1739 = vmatpush.msra.mxu0 0.0
    %1740 = vmatpush.msra.mxu0 0.0
    %1741 = vmatpush.msra.mxu0 0.0
    %1742 = vmatpush.msra.mxu0 0.0
    %1743 = vmatpush.msra.mxu0 %v1655
    %1744 = vmatpush.msra.mxu0 %v1654
    %1745 = vmatpush.msra.mxu0 %v1653
    %1746 = vmatpush.msra.mxu0 %v1652
    %1747 = vmatpush.msra.mxu0 %v1651
    %1748 = vmatpush.msra.mxu0 %v1650
    %1749 = vmatpush.msra.mxu0 %v1649
    %1750 = vmatpush.msra.mxu0 %v1648
    %1751 = vmatmul.f32.gmra.mxu0 %v1666
    %v1752 = vpop.f32.mrf.mxu0
    %v1753 = vadd.f32 %v1724, %v1752
    %1754 = vmatmul.f32.gmra.mxu0 %v1669
    %v1755 = vpop.f32.mrf.mxu0
    %v1756 = vadd.f32 %v1727, %v1755
    %1757 = vmatmul.f32.gmra.mxu0 %v1672
    %v1758 = vpop.f32.mrf.mxu0
    %v1759 = vadd.f32 %v1730, %v1758
    %1760 = vmatmul.f32.gmra.mxu0 %v1675
    %v1761 = vpop.f32.mrf.mxu0
    %v1762 = vadd.f32 %v1733, %v1761
    %1763 = vdwg.mxu0
    %v1764 = vld [vmem:[#allocation6 + $0x160] sm:$0xff]
    %v1765 = vld [vmem:[#allocation6 + $0x168] sm:$0xff]
    %v1766 = vld [vmem:[#allocation6 + $0x170] sm:$0xff]
    %v1767 = vld [vmem:[#allocation6 + $0x178] sm:$0xff]
    %v1768 = vld [vmem:[#allocation6 + $0x180] sm:$0xff]
    %v1769 = vld [vmem:[#allocation6 + $0x188] sm:$0xff]
    %v1770 = vld [vmem:[#allocation6 + $0x190] sm:$0xff]
    %v1771 = vld [vmem:[#allocation6 + $0x198] sm:$0xff]
    %1772 = vmatpush.msra.mxu0 0.0
    %1773 = vmatpush.msra.mxu0 0.0
    %1774 = vmatpush.msra.mxu0 0.0
    %1775 = vmatpush.msra.mxu0 0.0
    %1776 = vmatpush.msra.mxu0 0.0
    %1777 = vmatpush.msra.mxu0 0.0
    %1778 = vmatpush.msra.mxu0 0.0
    %1779 = vmatpush.msra.mxu0 0.0
    %1780 = vmatpush.msra.mxu0 %v1771
    %1781 = vmatpush.msra.mxu0 %v1770
    %1782 = vmatpush.msra.mxu0 %v1769
    %1783 = vmatpush.msra.mxu0 %v1768
    %1784 = vmatpush.msra.mxu0 %v1767
    %1785 = vmatpush.msra.mxu0 %v1766
    %1786 = vmatpush.msra.mxu0 %v1765
    %1787 = vmatpush.msra.mxu0 %v1764
    %1788 = vmatmul.f32.gmra.mxu0 %v1666
    %v1789 = vpop.f32.mrf.mxu0
    %v1790 = vadd.f32 0.0, %v1789
    %1791 = vmatmul.f32.gmra.mxu0 %v1669
    %v1792 = vpop.f32.mrf.mxu0
    %v1793 = vadd.f32 0.0, %v1792
    %1794 = vmatmul.f32.gmra.mxu0 %v1672
    %v1795 = vpop.f32.mrf.mxu0
    %v1796 = vadd.f32 0.0, %v1795
    %1797 = vmatmul.f32.gmra.mxu0 %v1675
    %v1798 = vpop.f32.mrf.mxu0
    %v1799 = vadd.f32 0.0, %v1798
    %1800 = vdwg.mxu0
    %1801 = vmatpush.msra.mxu0 0.0
    %1802 = vmatpush.msra.mxu0 0.0
    %1803 = vmatpush.msra.mxu0 0.0
    %1804 = vmatpush.msra.mxu0 0.0
    %1805 = vmatpush.msra.mxu0 0.0
    %1806 = vmatpush.msra.mxu0 0.0
    %1807 = vmatpush.msra.mxu0 0.0
    %1808 = vmatpush.msra.mxu0 0.0
    %1809 = vmatpush.msra.mxu0 0.0
    %1810 = vmatpush.msra.mxu0 0.0
    %1811 = vmatpush.msra.mxu0 0.0
    %1812 = vmatpush.msra.mxu0 0.0
    %1813 = vmatpush.msra.mxu0 %v1799
    %1814 = vmatpush.msra.mxu0 %v1796
    %1815 = vmatpush.msra.mxu0 %v1793
    %1816 = vmatpush.msra.mxu0 %v1790
    %1817 = vmatmul.f32.gmra.mxu0 %v437
    %v1818 = vpop.f32.mrf.mxu0
    %v1819 = vadd.f32 0.0, %v1818
    %1820 = vmatmul.f32.gmra.mxu0 %v440
    %v1821 = vpop.f32.mrf.mxu0
    %v1822 = vadd.f32 0.0, %v1821
    %1823 = vmatmul.f32.gmra.mxu0 %v443
    %v1824 = vpop.f32.mrf.mxu0
    %v1825 = vadd.f32 0.0, %v1824
    %1826 = vmatmul.f32.gmra.mxu0 %v446
    %v1827 = vpop.f32.mrf.mxu0
    %v1828 = vadd.f32 0.0, %v1827
    %1829 = vdwg.mxu0
    %v1830 = vadd.f32 %v1753, %v1819
    %v1831 = vadd.f32 %v1756, %v1822
    %v1832 = vadd.f32 %v1759, %v1825
    %v1833 = vadd.f32 %v1762, %v1828
    %v1834 = vld [vmem:[#allocation6 + $0x1a0] sm:$0xff]
    %v1835 = vld [vmem:[#allocation6 + $0x1a8] sm:$0xff]
    %v1836 = vld [vmem:[#allocation6 + $0x1b0] sm:$0xff]
    %v1837 = vld [vmem:[#allocation6 + $0x1b8] sm:$0xff]
    %v1838 = vld [vmem:[#allocation6 + $0x1c0] sm:$0xff]
    %v1839 = vld [vmem:[#allocation6 + $0x1c8] sm:$0xff]
    %v1840 = vld [vmem:[#allocation6 + $0x1d0] sm:$0xff]
    %v1841 = vld [vmem:[#allocation6 + $0x1d8] sm:$0xff]
    %1842 = vmatpush.msra.mxu0 0.0
    %1843 = vmatpush.msra.mxu0 0.0
    %1844 = vmatpush.msra.mxu0 0.0
    %1845 = vmatpush.msra.mxu0 0.0
    %1846 = vmatpush.msra.mxu0 0.0
    %1847 = vmatpush.msra.mxu0 0.0
    %1848 = vmatpush.msra.mxu0 0.0
    %1849 = vmatpush.msra.mxu0 0.0
    %1850 = vmatpush.msra.mxu0 %v1841
    %1851 = vmatpush.msra.mxu0 %v1840
    %1852 = vmatpush.msra.mxu0 %v1839
    %1853 = vmatpush.msra.mxu0 %v1838
    %1854 = vmatpush.msra.mxu0 %v1837
    %1855 = vmatpush.msra.mxu0 %v1836
    %1856 = vmatpush.msra.mxu0 %v1835
    %1857 = vmatpush.msra.mxu0 %v1834
    %1858 = vmatmul.f32.gmra.mxu0 %v1666
    %v1859 = vpop.f32.mrf.mxu0
    %v1860 = vadd.f32 0.0, %v1859
    %1861 = vmatmul.f32.gmra.mxu0 %v1669
    %v1862 = vpop.f32.mrf.mxu0
    %v1863 = vadd.f32 0.0, %v1862
    %1864 = vmatmul.f32.gmra.mxu0 %v1672
    %v1865 = vpop.f32.mrf.mxu0
    %v1866 = vadd.f32 0.0, %v1865
    %1867 = vmatmul.f32.gmra.mxu0 %v1675
    %v1868 = vpop.f32.mrf.mxu0
    %v1869 = vadd.f32 0.0, %v1868
    %1870 = vdwg.mxu0
    %1871 = vmatpush.msra.mxu0 0.0
    %1872 = vmatpush.msra.mxu0 0.0
    %1873 = vmatpush.msra.mxu0 0.0
    %1874 = vmatpush.msra.mxu0 0.0
    %1875 = vmatpush.msra.mxu0 0.0
    %1876 = vmatpush.msra.mxu0 0.0
    %1877 = vmatpush.msra.mxu0 0.0
    %1878 = vmatpush.msra.mxu0 0.0
    %1879 = vmatpush.msra.mxu0 0.0
    %1880 = vmatpush.msra.mxu0 0.0
    %1881 = vmatpush.msra.mxu0 0.0
    %1882 = vmatpush.msra.mxu0 0.0
    %1883 = vmatpush.msra.mxu0 %v1869
    %1884 = vmatpush.msra.mxu0 %v1866
    %1885 = vmatpush.msra.mxu0 %v1863
    %1886 = vmatpush.msra.mxu0 %v1860
    %1887 = vmatmul.f32.gmra.mxu0 %v597
    %v1888 = vpop.f32.mrf.mxu0
    %v1889 = vadd.f32 0.0, %v1888
    %1890 = vmatmul.f32.gmra.mxu0 %v600
    %v1891 = vpop.f32.mrf.mxu0
    %v1892 = vadd.f32 0.0, %v1891
    %1893 = vmatmul.f32.gmra.mxu0 %v603
    %v1894 = vpop.f32.mrf.mxu0
    %v1895 = vadd.f32 0.0, %v1894
    %1896 = vmatmul.f32.gmra.mxu0 %v606
    %v1897 = vpop.f32.mrf.mxu0
    %v1898 = vadd.f32 0.0, %v1897
    %1899 = vdwg.mxu0
    %v1900 = vadd.f32 %v1830, %v1889
    %v1901 = vadd.f32 %v1831, %v1892
    %v1902 = vadd.f32 %v1832, %v1895
    %v1903 = vadd.f32 %v1833, %v1898
    %v1904 = vld [vmem:[#allocation6 + $0x1e0] sm:$0xff]
    %v1905 = vld [vmem:[#allocation6 + $0x1e8] sm:$0xff]
    %v1906 = vld [vmem:[#allocation6 + $0x1f0] sm:$0xff]
    %v1907 = vld [vmem:[#allocation6 + $0x1f8] sm:$0xff]
    %v1908 = vld [vmem:[#allocation6 + $0x200] sm:$0xff]
    %v1909 = vld [vmem:[#allocation6 + $0x208] sm:$0xff]
    %v1910 = vld [vmem:[#allocation6 + $0x210] sm:$0xff]
    %v1911 = vld [vmem:[#allocation6 + $0x218] sm:$0xff]
    %1912 = vmatpush.msra.mxu0 0.0
    %1913 = vmatpush.msra.mxu0 0.0
    %1914 = vmatpush.msra.mxu0 0.0
    %1915 = vmatpush.msra.mxu0 0.0
    %1916 = vmatpush.msra.mxu0 0.0
    %1917 = vmatpush.msra.mxu0 0.0
    %1918 = vmatpush.msra.mxu0 0.0
    %1919 = vmatpush.msra.mxu0 0.0
    %1920 = vmatpush.msra.mxu0 %v1911
    %1921 = vmatpush.msra.mxu0 %v1910
    %1922 = vmatpush.msra.mxu0 %v1909
    %1923 = vmatpush.msra.mxu0 %v1908
    %1924 = vmatpush.msra.mxu0 %v1907
    %1925 = vmatpush.msra.mxu0 %v1906
    %1926 = vmatpush.msra.mxu0 %v1905
    %1927 = vmatpush.msra.mxu0 %v1904
    %1928 = vmatmul.f32.gmra.mxu0 %v1666
    %v1929 = vpop.f32.mrf.mxu0
    %v1930 = vadd.f32 0.0, %v1929
    %1931 = vmatmul.f32.gmra.mxu0 %v1669
    %v1932 = vpop.f32.mrf.mxu0
    %v1933 = vadd.f32 0.0, %v1932
    %1934 = vmatmul.f32.gmra.mxu0 %v1672
    %v1935 = vpop.f32.mrf.mxu0
    %v1936 = vadd.f32 0.0, %v1935
    %1937 = vmatmul.f32.gmra.mxu0 %v1675
    %v1938 = vpop.f32.mrf.mxu0
    %v1939 = vadd.f32 0.0, %v1938
    %1940 = vdwg.mxu0
    %1941 = vmatpush.msra.mxu0 0.0
    %1942 = vmatpush.msra.mxu0 0.0
    %1943 = vmatpush.msra.mxu0 0.0
    %1944 = vmatpush.msra.mxu0 0.0
    %1945 = vmatpush.msra.mxu0 0.0
    %1946 = vmatpush.msra.mxu0 0.0
    %1947 = vmatpush.msra.mxu0 0.0
    %1948 = vmatpush.msra.mxu0 0.0
    %1949 = vmatpush.msra.mxu0 0.0
    %1950 = vmatpush.msra.mxu0 0.0
    %1951 = vmatpush.msra.mxu0 0.0
    %1952 = vmatpush.msra.mxu0 0.0
    %1953 = vmatpush.msra.mxu0 %v1939
    %1954 = vmatpush.msra.mxu0 %v1936
    %1955 = vmatpush.msra.mxu0 %v1933
    %1956 = vmatpush.msra.mxu0 %v1930
    %1957 = vmatmul.f32.gmra.mxu0 %v1424
    %v1958 = vpop.f32.mrf.mxu0
    %v1959 = vadd.f32 0.0, %v1958
    %1960 = vmatmul.f32.gmra.mxu0 %v1427
    %v1961 = vpop.f32.mrf.mxu0
    %v1962 = vadd.f32 0.0, %v1961
    %1963 = vmatmul.f32.gmra.mxu0 %v1430
    %v1964 = vpop.f32.mrf.mxu0
    %v1965 = vadd.f32 0.0, %v1964
    %1966 = vmatmul.f32.gmra.mxu0 %v1433
    %v1967 = vpop.f32.mrf.mxu0
    %v1968 = vadd.f32 0.0, %v1967
    %1969 = vdwg.mxu0
    %v1970 = vadd.f32 %v1900, %v1959
    %v1971 = vadd.f32 %v1901, %v1962
    %v1972 = vadd.f32 %v1902, %v1965
    %v1973 = vadd.f32 %v1903, %v1968
    %v1974 = vld [vmem:[#allocation6 + $0x220] sm:$0xff]
    %v1975 = vld [vmem:[#allocation6 + $0x228] sm:$0xff]
    %v1976 = vld [vmem:[#allocation6 + $0x230] sm:$0xff]
    %v1977 = vld [vmem:[#allocation6 + $0x238] sm:$0xff]
    %v1978 = vld [vmem:[#allocation6 + $0x240] sm:$0xff]
    %v1979 = vld [vmem:[#allocation6 + $0x248] sm:$0xff]
    %v1980 = vld [vmem:[#allocation6 + $0x250] sm:$0xff]
    %v1981 = vld [vmem:[#allocation6 + $0x258] sm:$0xff]
    %1982 = vmatpush.msra.mxu0 0.0
    %1983 = vmatpush.msra.mxu0 0.0
    %1984 = vmatpush.msra.mxu0 0.0
    %1985 = vmatpush.msra.mxu0 0.0
    %1986 = vmatpush.msra.mxu0 0.0
    %1987 = vmatpush.msra.mxu0 0.0
    %1988 = vmatpush.msra.mxu0 0.0
    %1989 = vmatpush.msra.mxu0 0.0
    %1990 = vmatpush.msra.mxu0 %v1981
    %1991 = vmatpush.msra.mxu0 %v1980
    %1992 = vmatpush.msra.mxu0 %v1979
    %1993 = vmatpush.msra.mxu0 %v1978
    %1994 = vmatpush.msra.mxu0 %v1977
    %1995 = vmatpush.msra.mxu0 %v1976
    %1996 = vmatpush.msra.mxu0 %v1975
    %1997 = vmatpush.msra.mxu0 %v1974
    %1998 = vmatmul.f32.gmra.mxu0 %v1666
    %v1999 = vpop.f32.mrf.mxu0
    %v2000 = vadd.f32 0.0, %v1999
    %2001 = vmatmul.f32.gmra.mxu0 %v1669
    %v2002 = vpop.f32.mrf.mxu0
    %v2003 = vadd.f32 0.0, %v2002
    %2004 = vmatmul.f32.gmra.mxu0 %v1672
    %v2005 = vpop.f32.mrf.mxu0
    %v2006 = vadd.f32 0.0, %v2005
    %2007 = vmatmul.f32.gmra.mxu0 %v1675
    %v2008 = vpop.f32.mrf.mxu0
    %v2009 = vadd.f32 0.0, %v2008
    %2010 = vdwg.mxu0
    %2011 = vmatpush.msra.mxu0 0.0
    %2012 = vmatpush.msra.mxu0 0.0
    %2013 = vmatpush.msra.mxu0 0.0
    %2014 = vmatpush.msra.mxu0 0.0
    %2015 = vmatpush.msra.mxu0 0.0
    %2016 = vmatpush.msra.mxu0 0.0
    %2017 = vmatpush.msra.mxu0 0.0
    %2018 = vmatpush.msra.mxu0 0.0
    %2019 = vmatpush.msra.mxu0 0.0
    %2020 = vmatpush.msra.mxu0 0.0
    %2021 = vmatpush.msra.mxu0 0.0
    %2022 = vmatpush.msra.mxu0 0.0
    %2023 = vmatpush.msra.mxu0 %v2009
    %2024 = vmatpush.msra.mxu0 %v2006
    %2025 = vmatpush.msra.mxu0 %v2003
    %2026 = vmatpush.msra.mxu0 %v2000
    %2027 = vmatmul.f32.gmra.mxu0 %v1506
    %v2028 = vpop.f32.mrf.mxu0
    %v2029 = vadd.f32 0.0, %v2028
    %2030 = vmatmul.f32.gmra.mxu0 %v1509
    %v2031 = vpop.f32.mrf.mxu0
    %v2032 = vadd.f32 0.0, %v2031
    %2033 = vmatmul.f32.gmra.mxu0 %v1512
    %v2034 = vpop.f32.mrf.mxu0
    %v2035 = vadd.f32 0.0, %v2034
    %2036 = vmatmul.f32.gmra.mxu0 %v1515
    %v2037 = vpop.f32.mrf.mxu0
    %v2038 = vadd.f32 0.0, %v2037
    %2039 = vdwg.mxu0
    %v2040 = vadd.f32 %v1970, %v2029
    %v2041 = vadd.f32 %v1971, %v2032
    %v2042 = vadd.f32 %v1972, %v2035
    %v2043 = vadd.f32 %v1973, %v2038
    %v2044 = vld [vmem:[#allocation6 + $0x260] sm:$0xff]
    %v2045 = vld [vmem:[#allocation6 + $0x268] sm:$0xff]
    %v2046 = vld [vmem:[#allocation6 + $0x270] sm:$0xff]
    %v2047 = vld [vmem:[#allocation6 + $0x278] sm:$0xff]
    %v2048 = vld [vmem:[#allocation6 + $0x280] sm:$0xff]
    %v2049 = vld [vmem:[#allocation6 + $0x288] sm:$0xff]
    %v2050 = vld [vmem:[#allocation6 + $0x290] sm:$0xff]
    %v2051 = vld [vmem:[#allocation6 + $0x298] sm:$0xff]
    %2052 = vmatpush.msra.mxu0 0.0
    %2053 = vmatpush.msra.mxu0 0.0
    %2054 = vmatpush.msra.mxu0 0.0
    %2055 = vmatpush.msra.mxu0 0.0
    %2056 = vmatpush.msra.mxu0 0.0
    %2057 = vmatpush.msra.mxu0 0.0
    %2058 = vmatpush.msra.mxu0 0.0
    %2059 = vmatpush.msra.mxu0 0.0
    %2060 = vmatpush.msra.mxu0 %v2051
    %2061 = vmatpush.msra.mxu0 %v2050
    %2062 = vmatpush.msra.mxu0 %v2049
    %2063 = vmatpush.msra.mxu0 %v2048
    %2064 = vmatpush.msra.mxu0 %v2047
    %2065 = vmatpush.msra.mxu0 %v2046
    %2066 = vmatpush.msra.mxu0 %v2045
    %2067 = vmatpush.msra.mxu0 %v2044
    %2068 = vmatmul.f32.gmra.mxu0 %v1666
    %v2069 = vpop.f32.mrf.mxu0
    %v2070 = vadd.f32 0.0, %v2069
    %2071 = vmatmul.f32.gmra.mxu0 %v1669
    %v2072 = vpop.f32.mrf.mxu0
    %v2073 = vadd.f32 0.0, %v2072
    %2074 = vmatmul.f32.gmra.mxu0 %v1672
    %v2075 = vpop.f32.mrf.mxu0
    %v2076 = vadd.f32 0.0, %v2075
    %2077 = vmatmul.f32.gmra.mxu0 %v1675
    %v2078 = vpop.f32.mrf.mxu0
    %v2079 = vadd.f32 0.0, %v2078
    %2080 = vdwg.mxu0
    %2081 = vmatpush.msra.mxu0 0.0
    %2082 = vmatpush.msra.mxu0 0.0
    %2083 = vmatpush.msra.mxu0 0.0
    %2084 = vmatpush.msra.mxu0 0.0
    %2085 = vmatpush.msra.mxu0 0.0
    %2086 = vmatpush.msra.mxu0 0.0
    %2087 = vmatpush.msra.mxu0 0.0
    %2088 = vmatpush.msra.mxu0 0.0
    %2089 = vmatpush.msra.mxu0 0.0
    %2090 = vmatpush.msra.mxu0 0.0
    %2091 = vmatpush.msra.mxu0 0.0
    %2092 = vmatpush.msra.mxu0 0.0
    %2093 = vmatpush.msra.mxu0 %v2079
    %2094 = vmatpush.msra.mxu0 %v2076
    %2095 = vmatpush.msra.mxu0 %v2073
    %2096 = vmatpush.msra.mxu0 %v2070
    %2097 = vmatmul.f32.gmra.mxu0 %v1588
    %v2098 = vpop.f32.mrf.mxu0
    %v2099 = vadd.f32 0.0, %v2098
    %2100 = vmatmul.f32.gmra.mxu0 %v1591
    %v2101 = vpop.f32.mrf.mxu0
    %v2102 = vadd.f32 0.0, %v2101
    %2103 = vmatmul.f32.gmra.mxu0 %v1594
    %v2104 = vpop.f32.mrf.mxu0
    %v2105 = vadd.f32 0.0, %v2104
    %2106 = vmatmul.f32.gmra.mxu0 %v1597
    %v2107 = vpop.f32.mrf.mxu0
    %v2108 = vadd.f32 0.0, %v2107
    %2109 = vdwg.mxu0
    %v2110 = vadd.f32 %v2040, %v2099
    %v2111 = vadd.f32 %v2041, %v2102
    %v2112 = vadd.f32 %v2042, %v2105
    %v2113 = vadd.f32 %v2043, %v2108
    %v2114 = vld [vmem:[%s2 + $0x9] sm:$0x1]
    %v2115 = vperm.slane %v2114, 0
    %v2116 = vmul.f32 %v2110, %v2115
    %v2117 = vmul.f32 %v2111, %v2115
    %v2118 = vmul.f32 %v2112, %v2115
    %v2119 = vmul.f32 %v2113, %v2115
    %v2120 = vld [vmem:[%s2 + $0xa] sm:$0x1]
    %v2121 = vperm.slane %v2120, 0
    %v2122 = vadd.f32 %v2116, %v2121
    %v2123 = vadd.f32 %v2117, %v2121
    %v2124 = vadd.f32 %v2118, %v2121
    %v2125 = vadd.f32 %v2119, %v2121
    %v2126 = vld [vmem:[#allocation6 + $0x2a0] sm:$0xff]
    %v2127 = vld [vmem:[#allocation6 + $0x2a8] sm:$0xff]
    %v2128 = vld [vmem:[#allocation6 + $0x2b0] sm:$0xff]
    %v2129 = vld [vmem:[#allocation6 + $0x2b8] sm:$0xff]
    %v2130 = vld [vmem:[%s2 + $0xb] sm:$0x1]
    %v2131 = vperm.slane %v2130, 0
    %2132 = vmatpush.msra.mxu0 0.0
    %2133 = vmatpush.msra.mxu0 0.0
    %2134 = vmatpush.msra.mxu0 0.0
    %2135 = vmatpush.msra.mxu0 0.0
    %2136 = vmatpush.msra.mxu0 0.0
    %2137 = vmatpush.msra.mxu0 0.0
    %2138 = vmatpush.msra.mxu0 0.0
    %2139 = vmatpush.msra.mxu0 0.0
    %2140 = vmatpush.msra.mxu0 0.0
    %2141 = vmatpush.msra.mxu0 0.0
    %2142 = vmatpush.msra.mxu0 0.0
    %2143 = vmatpush.msra.mxu0 0.0
    %2144 = vmatpush.msra.mxu0 %v2129
    %2145 = vmatpush.msra.mxu0 %v2128
    %2146 = vmatpush.msra.mxu0 %v2127
    %2147 = vmatpush.msra.mxu0 %v2126
    %2148 = vmatmul.f32.gmra.mxu0 %v1156
    %v2149 = vpop.f32.mrf.mxu0
    %v2150 = vadd.f32 %v2131, %v2149
    %2151 = vmatmul.f32.gmra.mxu0 %v1159
    %v2152 = vpop.f32.mrf.mxu0
    %v2153 = vadd.f32 %v2131, %v2152
    %2154 = vmatmul.f32.gmra.mxu0 %v1162
    %v2155 = vpop.f32.mrf.mxu0
    %v2156 = vadd.f32 %v2131, %v2155
    %2157 = vmatmul.f32.gmra.mxu0 %v1165
    %v2158 = vpop.f32.mrf.mxu0
    %v2159 = vadd.f32 %v2131, %v2158
    %2160 = vdwg.mxu0
    %v2161 = vadd.f32 %v2122, %v2150
    %v2162 = vadd.f32 %v2123, %v2153
    %v2163 = vadd.f32 %v2124, %v2156
    %v2164 = vadd.f32 %v2125, %v2159
    %v2165 = vmax.f32 %v2161, 0.0
    %v2166 = vmax.f32 %v2162, 0.0
    %v2167 = vmax.f32 %v2163, 0.0
    %v2168 = vmax.f32 %v2164, 0.0
    %v2169 = vld [vmem:[#allocation7] sm:$0xff]
    %v2170 = vld [vmem:[#allocation7 + $0x8] sm:$0xff]
    %v2171 = vld [vmem:[#allocation7 + $0x10] sm:$0xff]
    %v2172 = vld [vmem:[#allocation7 + $0x18] sm:$0xff]
    %v2173 = vld [vmem:[#allocation7 + $0x20] sm:$0xff]
    %v2174 = vld [vmem:[#allocation7 + $0x28] sm:$0xff]
    %v2175 = vld [vmem:[#allocation7 + $0x30] sm:$0xff]
    %v2176 = vld [vmem:[#allocation7 + $0x38] sm:$0xff]
    %v2177 = vld [vmem:[#allocation7 + $0x40] sm:$0xff]
    %v2178 = vld [vmem:[#allocation7 + $0x48] sm:$0xff]
    %v2179 = vld [vmem:[#allocation7 + $0x50] sm:$0xff]
    %v2180 = vld [vmem:[#allocation7 + $0x58] sm:$0xff]
    %v2181 = vld [vmem:[#allocation7 + $0x60] sm:$0xff]
    %v2182 = vld [vmem:[#allocation7 + $0x68] sm:$0xff]
    %v2183 = vld [vmem:[#allocation7 + $0x70] sm:$0xff]
    %v2184 = vld [vmem:[#allocation7 + $0x78] sm:$0xff]
    %v2186 = vsel %vm1664, %v2165, 0
    %v2189 = vsel %vm1664, %v2166, 0
    %v2192 = vsel %vm1664, %v2167, 0
    %v2195 = vsel %vm1664, %v2168, 0
    %2197 = vmatpush.msra.mxu0 0.0
    %2198 = vmatpush.msra.mxu0 0.0
    %2199 = vmatpush.msra.mxu0 0.0
    %2200 = vmatpush.msra.mxu0 0.0
    %2201 = vmatpush.msra.mxu0 0.0
    %2202 = vmatpush.msra.mxu0 0.0
    %2203 = vmatpush.msra.mxu0 0.0
    %2204 = vmatpush.msra.mxu0 0.0
    %2205 = vmatpush.msra.mxu0 %v2184
    %2206 = vmatpush.msra.mxu0 %v2183
    %2207 = vmatpush.msra.mxu0 %v2182
    %2208 = vmatpush.msra.mxu0 %v2181
    %2209 = vmatpush.msra.mxu0 %v2180
    %2210 = vmatpush.msra.mxu0 %v2179
    %2211 = vmatpush.msra.mxu0 %v2178
    %2212 = vmatpush.msra.mxu0 %v2177
    %2213 = vmatmul.f32.gmra.mxu0 %v2186
    %v2214 = vpop.f32.mrf.mxu0
    %v2215 = vadd.f32 0.0, %v2214
    %2216 = vmatmul.f32.gmra.mxu0 %v2189
    %v2217 = vpop.f32.mrf.mxu0
    %v2218 = vadd.f32 0.0, %v2217
    %2219 = vmatmul.f32.gmra.mxu0 %v2192
    %v2220 = vpop.f32.mrf.mxu0
    %v2221 = vadd.f32 0.0, %v2220
    %2222 = vmatmul.f32.gmra.mxu0 %v2195
    %v2223 = vpop.f32.mrf.mxu0
    %v2224 = vadd.f32 0.0, %v2223
    %2225 = vdwg.mxu0
    %2226 = vmatpush.msra.mxu0 0.0
    %2227 = vmatpush.msra.mxu0 0.0
    %2228 = vmatpush.msra.mxu0 0.0
    %2229 = vmatpush.msra.mxu0 0.0
    %2230 = vmatpush.msra.mxu0 0.0
    %2231 = vmatpush.msra.mxu0 0.0
    %2232 = vmatpush.msra.mxu0 0.0
    %2233 = vmatpush.msra.mxu0 0.0
    %2234 = vmatpush.msra.mxu0 0.0
    %2235 = vmatpush.msra.mxu0 0.0
    %2236 = vmatpush.msra.mxu0 0.0
    %2237 = vmatpush.msra.mxu0 0.0
    %2238 = vmatpush.msra.mxu0 %v2224
    %2239 = vmatpush.msra.mxu0 %v2221
    %2240 = vmatpush.msra.mxu0 %v2218
    %2241 = vmatpush.msra.mxu0 %v2215
    %2242 = vmatmul.f32.gmra.mxu0 %v437
    %v2243 = vpop.f32.mrf.mxu0
    %v2244 = vadd.f32 0.0, %v2243
    %2245 = vmatmul.f32.gmra.mxu0 %v440
    %v2246 = vpop.f32.mrf.mxu0
    %v2247 = vadd.f32 0.0, %v2246
    %2248 = vmatmul.f32.gmra.mxu0 %v443
    %v2249 = vpop.f32.mrf.mxu0
    %v2250 = vadd.f32 0.0, %v2249
    %2251 = vmatmul.f32.gmra.mxu0 %v446
    %v2252 = vpop.f32.mrf.mxu0
    %v2253 = vadd.f32 0.0, %v2252
    %2254 = vdwg.mxu0
    %2255 = vmatpush.msra.mxu0 0.0
    %2256 = vmatpush.msra.mxu0 0.0
    %2257 = vmatpush.msra.mxu0 0.0
    %2258 = vmatpush.msra.mxu0 0.0
    %2259 = vmatpush.msra.mxu0 0.0
    %2260 = vmatpush.msra.mxu0 0.0
    %2261 = vmatpush.msra.mxu0 0.0
    %2262 = vmatpush.msra.mxu0 0.0
    %2263 = vmatpush.msra.mxu0 %v2176
    %2264 = vmatpush.msra.mxu0 %v2175
    %2265 = vmatpush.msra.mxu0 %v2174
    %2266 = vmatpush.msra.mxu0 %v2173
    %2267 = vmatpush.msra.mxu0 %v2172
    %2268 = vmatpush.msra.mxu0 %v2171
    %2269 = vmatpush.msra.mxu0 %v2170
    %2270 = vmatpush.msra.mxu0 %v2169
    %2271 = vmatmul.f32.gmra.mxu0 %v2186
    %v2272 = vpop.f32.mrf.mxu0
    %v2273 = vadd.f32 %v2244, %v2272
    %2274 = vmatmul.f32.gmra.mxu0 %v2189
    %v2275 = vpop.f32.mrf.mxu0
    %v2276 = vadd.f32 %v2247, %v2275
    %2277 = vmatmul.f32.gmra.mxu0 %v2192
    %v2278 = vpop.f32.mrf.mxu0
    %v2279 = vadd.f32 %v2250, %v2278
    %2280 = vmatmul.f32.gmra.mxu0 %v2195
    %v2281 = vpop.f32.mrf.mxu0
    %v2282 = vadd.f32 %v2253, %v2281
    %2283 = vdwg.mxu0
    %v2284 = vld [vmem:[#allocation7 + $0x80] sm:$0xff]
    %v2285 = vld [vmem:[#allocation7 + $0x88] sm:$0xff]
    %v2286 = vld [vmem:[#allocation7 + $0x90] sm:$0xff]
    %v2287 = vld [vmem:[#allocation7 + $0x98] sm:$0xff]
    %v2288 = vld [vmem:[#allocation7 + $0xa0] sm:$0xff]
    %v2289 = vld [vmem:[#allocation7 + $0xa8] sm:$0xff]
    %v2290 = vld [vmem:[#allocation7 + $0xb0] sm:$0xff]
    %v2291 = vld [vmem:[#allocation7 + $0xb8] sm:$0xff]
    %2292 = vmatpush.msra.mxu0 0.0
    %2293 = vmatpush.msra.mxu0 0.0
    %2294 = vmatpush.msra.mxu0 0.0
    %2295 = vmatpush.msra.mxu0 0.0
    %2296 = vmatpush.msra.mxu0 0.0
    %2297 = vmatpush.msra.mxu0 0.0
    %2298 = vmatpush.msra.mxu0 0.0
    %2299 = vmatpush.msra.mxu0 0.0
    %2300 = vmatpush.msra.mxu0 %v2291
    %2301 = vmatpush.msra.mxu0 %v2290
    %2302 = vmatpush.msra.mxu0 %v2289
    %2303 = vmatpush.msra.mxu0 %v2288
    %2304 = vmatpush.msra.mxu0 %v2287
    %2305 = vmatpush.msra.mxu0 %v2286
    %2306 = vmatpush.msra.mxu0 %v2285
    %2307 = vmatpush.msra.mxu0 %v2284
    %2308 = vmatmul.f32.gmra.mxu0 %v2186
    %v2309 = vpop.f32.mrf.mxu0
    %v2310 = vadd.f32 0.0, %v2309
    %2311 = vmatmul.f32.gmra.mxu0 %v2189
    %v2312 = vpop.f32.mrf.mxu0
    %v2313 = vadd.f32 0.0, %v2312
    %2314 = vmatmul.f32.gmra.mxu0 %v2192
    %v2315 = vpop.f32.mrf.mxu0
    %v2316 = vadd.f32 0.0, %v2315
    %2317 = vmatmul.f32.gmra.mxu0 %v2195
    %v2318 = vpop.f32.mrf.mxu0
    %v2319 = vadd.f32 0.0, %v2318
    %2320 = vdwg.mxu0
    %2321 = vmatpush.msra.mxu0 0.0
    %2322 = vmatpush.msra.mxu0 0.0
    %2323 = vmatpush.msra.mxu0 0.0
    %2324 = vmatpush.msra.mxu0 0.0
    %2325 = vmatpush.msra.mxu0 0.0
    %2326 = vmatpush.msra.mxu0 0.0
    %2327 = vmatpush.msra.mxu0 0.0
    %2328 = vmatpush.msra.mxu0 0.0
    %2329 = vmatpush.msra.mxu0 0.0
    %2330 = vmatpush.msra.mxu0 0.0
    %2331 = vmatpush.msra.mxu0 0.0
    %2332 = vmatpush.msra.mxu0 0.0
    %2333 = vmatpush.msra.mxu0 %v2319
    %2334 = vmatpush.msra.mxu0 %v2316
    %2335 = vmatpush.msra.mxu0 %v2313
    %2336 = vmatpush.msra.mxu0 %v2310
    %2337 = vmatmul.f32.gmra.mxu0 %v1424
    %v2338 = vpop.f32.mrf.mxu0
    %v2339 = vadd.f32 0.0, %v2338
    %2340 = vmatmul.f32.gmra.mxu0 %v1427
    %v2341 = vpop.f32.mrf.mxu0
    %v2342 = vadd.f32 0.0, %v2341
    %2343 = vmatmul.f32.gmra.mxu0 %v1430
    %v2344 = vpop.f32.mrf.mxu0
    %v2345 = vadd.f32 0.0, %v2344
    %2346 = vmatmul.f32.gmra.mxu0 %v1433
    %v2347 = vpop.f32.mrf.mxu0
    %v2348 = vadd.f32 0.0, %v2347
    %2349 = vdwg.mxu0
    %v2350 = vadd.f32 %v2273, %v2339
    %v2351 = vadd.f32 %v2276, %v2342
    %v2352 = vadd.f32 %v2279, %v2345
    %v2353 = vadd.f32 %v2282, %v2348
    %v2354 = vld [vmem:[#allocation7 + $0xc0] sm:$0xff]
    %v2355 = vld [vmem:[#allocation7 + $0xc8] sm:$0xff]
    %v2356 = vld [vmem:[#allocation7 + $0xd0] sm:$0xff]
    %v2357 = vld [vmem:[#allocation7 + $0xd8] sm:$0xff]
    %v2358 = vld [vmem:[#allocation7 + $0xe0] sm:$0xff]
    %v2359 = vld [vmem:[#allocation7 + $0xe8] sm:$0xff]
    %v2360 = vld [vmem:[#allocation7 + $0xf0] sm:$0xff]
    %v2361 = vld [vmem:[#allocation7 + $0xf8] sm:$0xff]
    %2362 = vmatpush.msra.mxu0 0.0
    %2363 = vmatpush.msra.mxu0 0.0
    %2364 = vmatpush.msra.mxu0 0.0
    %2365 = vmatpush.msra.mxu0 0.0
    %2366 = vmatpush.msra.mxu0 0.0
    %2367 = vmatpush.msra.mxu0 0.0
    %2368 = vmatpush.msra.mxu0 0.0
    %2369 = vmatpush.msra.mxu0 0.0
    %2370 = vmatpush.msra.mxu0 %v2361
    %2371 = vmatpush.msra.mxu0 %v2360
    %2372 = vmatpush.msra.mxu0 %v2359
    %2373 = vmatpush.msra.mxu0 %v2358
    %2374 = vmatpush.msra.mxu0 %v2357
    %2375 = vmatpush.msra.mxu0 %v2356
    %2376 = vmatpush.msra.mxu0 %v2355
    %2377 = vmatpush.msra.mxu0 %v2354
    %2378 = vmatmul.f32.gmra.mxu0 %v2186
    %v2379 = vpop.f32.mrf.mxu0
    %v2380 = vadd.f32 0.0, %v2379
    %2381 = vmatmul.f32.gmra.mxu0 %v2189
    %v2382 = vpop.f32.mrf.mxu0
    %v2383 = vadd.f32 0.0, %v2382
    %2384 = vmatmul.f32.gmra.mxu0 %v2192
    %v2385 = vpop.f32.mrf.mxu0
    %v2386 = vadd.f32 0.0, %v2385
    %2387 = vmatmul.f32.gmra.mxu0 %v2195
    %v2388 = vpop.f32.mrf.mxu0
    %v2389 = vadd.f32 0.0, %v2388
    %2390 = vdwg.mxu0
    %2391 = vmatpush.msra.mxu0 0.0
    %2392 = vmatpush.msra.mxu0 0.0
    %2393 = vmatpush.msra.mxu0 0.0
    %2394 = vmatpush.msra.mxu0 0.0
    %2395 = vmatpush.msra.mxu0 0.0
    %2396 = vmatpush.msra.mxu0 0.0
    %2397 = vmatpush.msra.mxu0 0.0
    %2398 = vmatpush.msra.mxu0 0.0
    %2399 = vmatpush.msra.mxu0 0.0
    %2400 = vmatpush.msra.mxu0 0.0
    %2401 = vmatpush.msra.mxu0 0.0
    %2402 = vmatpush.msra.mxu0 0.0
    %2403 = vmatpush.msra.mxu0 %v2389
    %2404 = vmatpush.msra.mxu0 %v2386
    %2405 = vmatpush.msra.mxu0 %v2383
    %2406 = vmatpush.msra.mxu0 %v2380
    %2407 = vmatmul.f32.gmra.mxu0 %v1588
    %v2408 = vpop.f32.mrf.mxu0
    %v2409 = vadd.f32 0.0, %v2408
    %2410 = vmatmul.f32.gmra.mxu0 %v1591
    %v2411 = vpop.f32.mrf.mxu0
    %v2412 = vadd.f32 0.0, %v2411
    %2413 = vmatmul.f32.gmra.mxu0 %v1594
    %v2414 = vpop.f32.mrf.mxu0
    %v2415 = vadd.f32 0.0, %v2414
    %2416 = vmatmul.f32.gmra.mxu0 %v1597
    %v2417 = vpop.f32.mrf.mxu0
    %v2418 = vadd.f32 0.0, %v2417
    %2419 = vdwg.mxu0
    %v2420 = vadd.f32 %v2350, %v2409
    %v2421 = vadd.f32 %v2351, %v2412
    %v2422 = vadd.f32 %v2352, %v2415
    %v2423 = vadd.f32 %v2353, %v2418
    %v2424 = vld [vmem:[%s2 + $0xc] sm:$0x1]
    %v2425 = vperm.slane %v2424, 0
    %v2426 = vmul.f32 %v2420, %v2425
    %v2427 = vmul.f32 %v2421, %v2425
    %v2428 = vmul.f32 %v2422, %v2425
    %v2429 = vmul.f32 %v2423, %v2425
    %v2430 = vld [vmem:[%s2 + $0xd] sm:$0x1]
    %v2431 = vperm.slane %v2430, 0
    %v2432 = vadd.f32 %v2426, %v2431
    %v2433 = vadd.f32 %v2427, %v2431
    %v2434 = vadd.f32 %v2428, %v2431
    %v2435 = vadd.f32 %v2429, %v2431
    %v2436 = vmax.f32 %v2432, 0.0
    %v2437 = vmax.f32 %v2433, 0.0
    %v2438 = vmax.f32 %v2434, 0.0
    %v2439 = vmax.f32 %v2435, 0.0
    %v2440 = vld [vmem:[#allocation7 + $0x100] sm:$0xff]
    %v2441 = vld [vmem:[#allocation7 + $0x108] sm:$0xff]
    %v2442 = vld [vmem:[#allocation7 + $0x110] sm:$0xff]
    %v2443 = vld [vmem:[#allocation7 + $0x118] sm:$0xff]
    %v2444 = vld [vmem:[#allocation7 + $0x120] sm:$0xff]
    %v2445 = vld [vmem:[#allocation7 + $0x128] sm:$0xff]
    %v2446 = vld [vmem:[#allocation7 + $0x130] sm:$0xff]
    %v2447 = vld [vmem:[#allocation7 + $0x138] sm:$0xff]
    %v2448 = vld [vmem:[#allocation7 + $0x140] sm:$0xff]
    %v2449 = vld [vmem:[#allocation7 + $0x148] sm:$0xff]
    %v2450 = vld [vmem:[#allocation7 + $0x150] sm:$0xff]
    %v2451 = vld [vmem:[#allocation7 + $0x158] sm:$0xff]
    %v2452 = vld [vmem:[#allocation7 + $0x160] sm:$0xff]
    %v2453 = vld [vmem:[#allocation7 + $0x168] sm:$0xff]
    %v2454 = vld [vmem:[#allocation7 + $0x170] sm:$0xff]
    %v2455 = vld [vmem:[#allocation7 + $0x178] sm:$0xff]
    %v2456 = vld [vmem:[#allocation7 + $0x180] sm:$0xff]
    %v2457 = vld [vmem:[#allocation7 + $0x188] sm:$0xff]
    %v2458 = vld [vmem:[#allocation7 + $0x190] sm:$0xff]
    %v2459 = vld [vmem:[#allocation7 + $0x198] sm:$0xff]
    %v2460 = vld [vmem:[#allocation7 + $0x1a0] sm:$0xff]
    %v2461 = vld [vmem:[#allocation7 + $0x1a8] sm:$0xff]
    %v2462 = vld [vmem:[#allocation7 + $0x1b0] sm:$0xff]
    %v2463 = vld [vmem:[#allocation7 + $0x1b8] sm:$0xff]
    %v2464 = vld [vmem:[#allocation7 + $0x1c0] sm:$0xff]
    %v2465 = vld [vmem:[#allocation7 + $0x1c8] sm:$0xff]
    %v2466 = vld [vmem:[#allocation7 + $0x1d0] sm:$0xff]
    %v2467 = vld [vmem:[#allocation7 + $0x1d8] sm:$0xff]
    %v2468 = vld [vmem:[#allocation7 + $0x1e0] sm:$0xff]
    %v2469 = vld [vmem:[#allocation7 + $0x1e8] sm:$0xff]
    %v2470 = vld [vmem:[#allocation7 + $0x1f0] sm:$0xff]
    %v2471 = vld [vmem:[#allocation7 + $0x1f8] sm:$0xff]
    %2472 = vmatpush.msra.mxu0 %v2471
    %2473 = vmatpush.msra.mxu0 %v2470
    %2474 = vmatpush.msra.mxu0 %v2469
    %2475 = vmatpush.msra.mxu0 %v2468
    %2476 = vmatpush.msra.mxu0 %v2467
    %2477 = vmatpush.msra.mxu0 %v2466
    %2478 = vmatpush.msra.mxu0 %v2465
    %2479 = vmatpush.msra.mxu0 %v2464
    %2480 = vmatpush.msra.mxu0 %v2463
    %2481 = vmatpush.msra.mxu0 %v2462
    %2482 = vmatpush.msra.mxu0 %v2461
    %2483 = vmatpush.msra.mxu0 %v2460
    %2484 = vmatpush.msra.mxu0 %v2459
    %2485 = vmatpush.msra.mxu0 %v2458
    %2486 = vmatpush.msra.mxu0 %v2457
    %2487 = vmatpush.msra.mxu0 %v2456
    %2488 = vmatmul.f32.gmra.mxu0 %v2436
    %v2489 = vpop.f32.mrf.mxu0
    %v2490 = vadd.f32 0.0, %v2489
    %2491 = vmatmul.f32.gmra.mxu0 %v2437
    %v2492 = vpop.f32.mrf.mxu0
    %v2493 = vadd.f32 0.0, %v2492
    %2494 = vmatmul.f32.gmra.mxu0 %v2438
    %v2495 = vpop.f32.mrf.mxu0
    %v2496 = vadd.f32 0.0, %v2495
    %2497 = vmatmul.f32.gmra.mxu0 %v2439
    %v2498 = vpop.f32.mrf.mxu0
    %v2499 = vadd.f32 0.0, %v2498
    %2500 = vdwg.mxu0
    %2501 = vmatpush.msra.mxu0 0.0
    %2502 = vmatpush.msra.mxu0 0.0
    %2503 = vmatpush.msra.mxu0 0.0
    %2504 = vmatpush.msra.mxu0 0.0
    %2505 = vmatpush.msra.mxu0 0.0
    %2506 = vmatpush.msra.mxu0 0.0
    %2507 = vmatpush.msra.mxu0 0.0
    %2508 = vmatpush.msra.mxu0 0.0
    %2509 = vmatpush.msra.mxu0 0.0
    %2510 = vmatpush.msra.mxu0 0.0
    %2511 = vmatpush.msra.mxu0 0.0
    %2512 = vmatpush.msra.mxu0 0.0
    %2513 = vmatpush.msra.mxu0 %v2499
    %2514 = vmatpush.msra.mxu0 %v2496
    %2515 = vmatpush.msra.mxu0 %v2493
    %2516 = vmatpush.msra.mxu0 %v2490
    %2517 = vmatmul.f32.gmra.mxu0 %v437
    %v2518 = vpop.f32.mrf.mxu0
    %v2519 = vadd.f32 0.0, %v2518
    %2520 = vmatmul.f32.gmra.mxu0 %v440
    %v2521 = vpop.f32.mrf.mxu0
    %v2522 = vadd.f32 0.0, %v2521
    %2523 = vmatmul.f32.gmra.mxu0 %v443
    %v2524 = vpop.f32.mrf.mxu0
    %v2525 = vadd.f32 0.0, %v2524
    %2526 = vmatmul.f32.gmra.mxu0 %v446
    %v2527 = vpop.f32.mrf.mxu0
    %v2528 = vadd.f32 0.0, %v2527
    %2529 = vdwg.mxu0
    %2530 = vmatpush.msra.mxu0 %v2455
    %2531 = vmatpush.msra.mxu0 %v2454
    %2532 = vmatpush.msra.mxu0 %v2453
    %2533 = vmatpush.msra.mxu0 %v2452
    %2534 = vmatpush.msra.mxu0 %v2451
    %2535 = vmatpush.msra.mxu0 %v2450
    %2536 = vmatpush.msra.mxu0 %v2449
    %2537 = vmatpush.msra.mxu0 %v2448
    %2538 = vmatpush.msra.mxu0 %v2447
    %2539 = vmatpush.msra.mxu0 %v2446
    %2540 = vmatpush.msra.mxu0 %v2445
    %2541 = vmatpush.msra.mxu0 %v2444
    %2542 = vmatpush.msra.mxu0 %v2443
    %2543 = vmatpush.msra.mxu0 %v2442
    %2544 = vmatpush.msra.mxu0 %v2441
    %2545 = vmatpush.msra.mxu0 %v2440
    %2546 = vmatmul.f32.gmra.mxu0 %v2436
    %v2547 = vpop.f32.mrf.mxu0
    %v2548 = vadd.f32 %v2519, %v2547
    %2549 = vmatmul.f32.gmra.mxu0 %v2437
    %v2550 = vpop.f32.mrf.mxu0
    %v2551 = vadd.f32 %v2522, %v2550
    %2552 = vmatmul.f32.gmra.mxu0 %v2438
    %v2553 = vpop.f32.mrf.mxu0
    %v2554 = vadd.f32 %v2525, %v2553
    %2555 = vmatmul.f32.gmra.mxu0 %v2439
    %v2556 = vpop.f32.mrf.mxu0
    %v2557 = vadd.f32 %v2528, %v2556
    %2558 = vdwg.mxu0
    %v2559 = vld [vmem:[#allocation7 + $0x200] sm:$0xff]
    %v2560 = vld [vmem:[#allocation7 + $0x208] sm:$0xff]
    %v2561 = vld [vmem:[#allocation7 + $0x210] sm:$0xff]
    %v2562 = vld [vmem:[#allocation7 + $0x218] sm:$0xff]
    %v2563 = vld [vmem:[#allocation7 + $0x220] sm:$0xff]
    %v2564 = vld [vmem:[#allocation7 + $0x228] sm:$0xff]
    %v2565 = vld [vmem:[#allocation7 + $0x230] sm:$0xff]
    %v2566 = vld [vmem:[#allocation7 + $0x238] sm:$0xff]
    %v2567 = vld [vmem:[#allocation7 + $0x240] sm:$0xff]
    %v2568 = vld [vmem:[#allocation7 + $0x248] sm:$0xff]
    %v2569 = vld [vmem:[#allocation7 + $0x250] sm:$0xff]
    %v2570 = vld [vmem:[#allocation7 + $0x258] sm:$0xff]
    %v2571 = vld [vmem:[#allocation7 + $0x260] sm:$0xff]
    %v2572 = vld [vmem:[#allocation7 + $0x268] sm:$0xff]
    %v2573 = vld [vmem:[#allocation7 + $0x270] sm:$0xff]
    %v2574 = vld [vmem:[#allocation7 + $0x278] sm:$0xff]
    %2575 = vmatpush.msra.mxu0 %v2574
    %2576 = vmatpush.msra.mxu0 %v2573
    %2577 = vmatpush.msra.mxu0 %v2572
    %2578 = vmatpush.msra.mxu0 %v2571
    %2579 = vmatpush.msra.mxu0 %v2570
    %2580 = vmatpush.msra.mxu0 %v2569
    %2581 = vmatpush.msra.mxu0 %v2568
    %2582 = vmatpush.msra.mxu0 %v2567
    %2583 = vmatpush.msra.mxu0 %v2566
    %2584 = vmatpush.msra.mxu0 %v2565
    %2585 = vmatpush.msra.mxu0 %v2564
    %2586 = vmatpush.msra.mxu0 %v2563
    %2587 = vmatpush.msra.mxu0 %v2562
    %2588 = vmatpush.msra.mxu0 %v2561
    %2589 = vmatpush.msra.mxu0 %v2560
    %2590 = vmatpush.msra.mxu0 %v2559
    %2591 = vmatmul.f32.gmra.mxu0 %v2436
    %v2592 = vpop.f32.mrf.mxu0
    %v2593 = vadd.f32 0.0, %v2592
    %2594 = vmatmul.f32.gmra.mxu0 %v2437
    %v2595 = vpop.f32.mrf.mxu0
    %v2596 = vadd.f32 0.0, %v2595
    %2597 = vmatmul.f32.gmra.mxu0 %v2438
    %v2598 = vpop.f32.mrf.mxu0
    %v2599 = vadd.f32 0.0, %v2598
    %2600 = vmatmul.f32.gmra.mxu0 %v2439
    %v2601 = vpop.f32.mrf.mxu0
    %v2602 = vadd.f32 0.0, %v2601
    %2603 = vdwg.mxu0
    %2604 = vmatpush.msra.mxu0 0.0
    %2605 = vmatpush.msra.mxu0 0.0
    %2606 = vmatpush.msra.mxu0 0.0
    %2607 = vmatpush.msra.mxu0 0.0
    %2608 = vmatpush.msra.mxu0 0.0
    %2609 = vmatpush.msra.mxu0 0.0
    %2610 = vmatpush.msra.mxu0 0.0
    %2611 = vmatpush.msra.mxu0 0.0
    %2612 = vmatpush.msra.mxu0 0.0
    %2613 = vmatpush.msra.mxu0 0.0
    %2614 = vmatpush.msra.mxu0 0.0
    %2615 = vmatpush.msra.mxu0 0.0
    %2616 = vmatpush.msra.mxu0 %v2602
    %2617 = vmatpush.msra.mxu0 %v2599
    %2618 = vmatpush.msra.mxu0 %v2596
    %2619 = vmatpush.msra.mxu0 %v2593
    %2620 = vmatmul.f32.gmra.mxu0 %v1424
    %v2621 = vpop.f32.mrf.mxu0
    %v2622 = vadd.f32 0.0, %v2621
    %2623 = vmatmul.f32.gmra.mxu0 %v1427
    %v2624 = vpop.f32.mrf.mxu0
    %v2625 = vadd.f32 0.0, %v2624
    %2626 = vmatmul.f32.gmra.mxu0 %v1430
    %v2627 = vpop.f32.mrf.mxu0
    %v2628 = vadd.f32 0.0, %v2627
    %2629 = vmatmul.f32.gmra.mxu0 %v1433
    %v2630 = vpop.f32.mrf.mxu0
    %v2631 = vadd.f32 0.0, %v2630
    %2632 = vdwg.mxu0
    %v2633 = vadd.f32 %v2548, %v2622
    %v2634 = vadd.f32 %v2551, %v2625
    %v2635 = vadd.f32 %v2554, %v2628
    %v2636 = vadd.f32 %v2557, %v2631
    %v2637 = vld [vmem:[#allocation7 + $0x280] sm:$0xff]
    %v2638 = vld [vmem:[#allocation7 + $0x288] sm:$0xff]
    %v2639 = vld [vmem:[#allocation7 + $0x290] sm:$0xff]
    %v2640 = vld [vmem:[#allocation7 + $0x298] sm:$0xff]
    %v2641 = vld [vmem:[#allocation7 + $0x2a0] sm:$0xff]
    %v2642 = vld [vmem:[#allocation7 + $0x2a8] sm:$0xff]
    %v2643 = vld [vmem:[#allocation7 + $0x2b0] sm:$0xff]
    %v2644 = vld [vmem:[#allocation7 + $0x2b8] sm:$0xff]
    %v2645 = vld [vmem:[#allocation7 + $0x2c0] sm:$0xff]
    %v2646 = vld [vmem:[#allocation7 + $0x2c8] sm:$0xff]
    %v2647 = vld [vmem:[#allocation7 + $0x2d0] sm:$0xff]
    %v2648 = vld [vmem:[#allocation7 + $0x2d8] sm:$0xff]
    %v2649 = vld [vmem:[#allocation7 + $0x2e0] sm:$0xff]
    %v2650 = vld [vmem:[#allocation7 + $0x2e8] sm:$0xff]
    %v2651 = vld [vmem:[#allocation7 + $0x2f0] sm:$0xff]
    %v2652 = vld [vmem:[#allocation7 + $0x2f8] sm:$0xff]
    %2653 = vmatpush.msra.mxu0 %v2652
    %2654 = vmatpush.msra.mxu0 %v2651
    %2655 = vmatpush.msra.mxu0 %v2650
    %2656 = vmatpush.msra.mxu0 %v2649
    %2657 = vmatpush.msra.mxu0 %v2648
    %2658 = vmatpush.msra.mxu0 %v2647
    %2659 = vmatpush.msra.mxu0 %v2646
    %2660 = vmatpush.msra.mxu0 %v2645
    %2661 = vmatpush.msra.mxu0 %v2644
    %2662 = vmatpush.msra.mxu0 %v2643
    %2663 = vmatpush.msra.mxu0 %v2642
    %2664 = vmatpush.msra.mxu0 %v2641
    %2665 = vmatpush.msra.mxu0 %v2640
    %2666 = vmatpush.msra.mxu0 %v2639
    %2667 = vmatpush.msra.mxu0 %v2638
    %2668 = vmatpush.msra.mxu0 %v2637
    %2669 = vmatmul.f32.gmra.mxu0 %v2436
    %v2670 = vpop.f32.mrf.mxu0
    %v2671 = vadd.f32 0.0, %v2670
    %2672 = vmatmul.f32.gmra.mxu0 %v2437
    %v2673 = vpop.f32.mrf.mxu0
    %v2674 = vadd.f32 0.0, %v2673
    %2675 = vmatmul.f32.gmra.mxu0 %v2438
    %v2676 = vpop.f32.mrf.mxu0
    %v2677 = vadd.f32 0.0, %v2676
    %2678 = vmatmul.f32.gmra.mxu0 %v2439
    %v2679 = vpop.f32.mrf.mxu0
    %v2680 = vadd.f32 0.0, %v2679
    %2681 = vdwg.mxu0
    %2682 = vmatpush.msra.mxu0 0.0
    %2683 = vmatpush.msra.mxu0 0.0
    %2684 = vmatpush.msra.mxu0 0.0
    %2685 = vmatpush.msra.mxu0 0.0
    %2686 = vmatpush.msra.mxu0 0.0
    %2687 = vmatpush.msra.mxu0 0.0
    %2688 = vmatpush.msra.mxu0 0.0
    %2689 = vmatpush.msra.mxu0 0.0
    %2690 = vmatpush.msra.mxu0 0.0
    %2691 = vmatpush.msra.mxu0 0.0
    %2692 = vmatpush.msra.mxu0 0.0
    %2693 = vmatpush.msra.mxu0 0.0
    %2694 = vmatpush.msra.mxu0 %v2680
    %2695 = vmatpush.msra.mxu0 %v2677
    %2696 = vmatpush.msra.mxu0 %v2674
    %2697 = vmatpush.msra.mxu0 %v2671
    %2698 = vmatmul.f32.gmra.mxu0 %v1588
    %v2699 = vpop.f32.mrf.mxu0
    %v2700 = vadd.f32 0.0, %v2699
    %2701 = vmatmul.f32.gmra.mxu0 %v1591
    %v2702 = vpop.f32.mrf.mxu0
    %v2703 = vadd.f32 0.0, %v2702
    %2704 = vmatmul.f32.gmra.mxu0 %v1594
    %v2705 = vpop.f32.mrf.mxu0
    %v2706 = vadd.f32 0.0, %v2705
    %2707 = vmatmul.f32.gmra.mxu0 %v1597
    %v2708 = vpop.f32.mrf.mxu0
    %v2709 = vadd.f32 0.0, %v2708
    %2710 = vdwg.mxu0
    %v2711 = vadd.f32 %v2633, %v2700
    %v2712 = vadd.f32 %v2634, %v2703
    %v2713 = vadd.f32 %v2635, %v2706
    %v2714 = vadd.f32 %v2636, %v2709
    %v2715 = vld [vmem:[%s2 + $0xe] sm:$0x1]
    %v2716 = vperm.slane %v2715, 0
    %v2717 = vmul.f32 %v2711, %v2716
    %v2718 = vmul.f32 %v2712, %v2716
    %v2719 = vmul.f32 %v2713, %v2716
    %v2720 = vmul.f32 %v2714, %v2716
    %v2721 = vld [vmem:[%s2 + $0xf] sm:$0x1]
    %v2722 = vperm.slane %v2721, 0
    %v2723 = vadd.f32 %v2717, %v2722
    %v2724 = vadd.f32 %v2718, %v2722
    %v2725 = vadd.f32 %v2719, %v2722
    %v2726 = vadd.f32 %v2720, %v2722
    %v2727 = vld [vmem:[#allocation7 + $0x300] sm:$0xff]
    %v2728 = vld [vmem:[#allocation7 + $0x308] sm:$0xff]
    %v2729 = vld [vmem:[#allocation7 + $0x310] sm:$0xff]
    %v2730 = vld [vmem:[#allocation7 + $0x318] sm:$0xff]
    %v2731 = vld [vmem:[#allocation7 + $0x320] sm:$0xff]
    %v2732 = vld [vmem:[#allocation7 + $0x328] sm:$0xff]
    %v2733 = vld [vmem:[#allocation7 + $0x330] sm:$0xff]
    %v2734 = vld [vmem:[#allocation7 + $0x338] sm:$0xff]
    %v2735 = vld [vmem:[%s2 + $0x10] sm:$0x1]
    %v2736 = vperm.slane %v2735, 0
    %2737 = vmatpush.msra.mxu0 0.0
    %2738 = vmatpush.msra.mxu0 0.0
    %2739 = vmatpush.msra.mxu0 0.0
    %2740 = vmatpush.msra.mxu0 0.0
    %2741 = vmatpush.msra.mxu0 0.0
    %2742 = vmatpush.msra.mxu0 0.0
    %2743 = vmatpush.msra.mxu0 0.0
    %2744 = vmatpush.msra.mxu0 0.0
    %2745 = vmatpush.msra.mxu0 %v2734
    %2746 = vmatpush.msra.mxu0 %v2733
    %2747 = vmatpush.msra.mxu0 %v2732
    %2748 = vmatpush.msra.mxu0 %v2731
    %2749 = vmatpush.msra.mxu0 %v2730
    %2750 = vmatpush.msra.mxu0 %v2729
    %2751 = vmatpush.msra.mxu0 %v2728
    %2752 = vmatpush.msra.mxu0 %v2727
    %2753 = vmatmul.f32.gmra.mxu0 %v2186
    %v2754 = vpop.f32.mrf.mxu0
    %v2755 = vadd.f32 %v2736, %v2754
    %2756 = vmatmul.f32.gmra.mxu0 %v2189
    %v2757 = vpop.f32.mrf.mxu0
    %v2758 = vadd.f32 %v2736, %v2757
    %2759 = vmatmul.f32.gmra.mxu0 %v2192
    %v2760 = vpop.f32.mrf.mxu0
    %v2761 = vadd.f32 %v2736, %v2760
    %2762 = vmatmul.f32.gmra.mxu0 %v2195
    %v2763 = vpop.f32.mrf.mxu0
    %v2764 = vadd.f32 %v2736, %v2763
    %2765 = vdwg.mxu0
    %v2766 = vadd.f32 %v2723, %v2755
    %v2767 = vadd.f32 %v2724, %v2758
    %v2768 = vadd.f32 %v2725, %v2761
    %v2769 = vadd.f32 %v2726, %v2764
    %v2770 = vmax.f32 %v2766, 0.0
    %v2771 = vmax.f32 %v2767, 0.0
    %v2772 = vmax.f32 %v2768, 0.0
    %v2773 = vmax.f32 %v2769, 0.0
    %v2774 = vld [vmem:[#allocation9] sm:$0xff]
    %v2775 = vld [vmem:[#allocation9 + $0x8] sm:$0xff]
    %v2776 = vld [vmem:[#allocation9 + $0x10] sm:$0xff]
    %v2777 = vld [vmem:[#allocation9 + $0x18] sm:$0xff]
    %v2778 = vld [vmem:[#allocation9 + $0x20] sm:$0xff]
    %v2779 = vld [vmem:[#allocation9 + $0x28] sm:$0xff]
    %v2780 = vld [vmem:[#allocation9 + $0x30] sm:$0xff]
    %v2781 = vld [vmem:[#allocation9 + $0x38] sm:$0xff]
    %v2782 = vld [vmem:[#allocation9 + $0x40] sm:$0xff]
    %v2783 = vld [vmem:[#allocation9 + $0x48] sm:$0xff]
    %v2784 = vld [vmem:[#allocation9 + $0x50] sm:$0xff]
    %v2785 = vld [vmem:[#allocation9 + $0x58] sm:$0xff]
    %v2786 = vld [vmem:[#allocation9 + $0x60] sm:$0xff]
    %v2787 = vld [vmem:[#allocation9 + $0x68] sm:$0xff]
    %v2788 = vld [vmem:[#allocation9 + $0x70] sm:$0xff]
    %v2789 = vld [vmem:[#allocation9 + $0x78] sm:$0xff]
    %v2790 = vld [vmem:[%s2 + $0x11] sm:$0x1]
    %v2791 = vperm.slane %v2790, 0
    %2792 = vmatpush.msra.mxu0 %v2789
    %2793 = vmatpush.msra.mxu0 %v2788
    %2794 = vmatpush.msra.mxu0 %v2787
    %2795 = vmatpush.msra.mxu0 %v2786
    %2796 = vmatpush.msra.mxu0 %v2785
    %2797 = vmatpush.msra.mxu0 %v2784
    %2798 = vmatpush.msra.mxu0 %v2783
    %2799 = vmatpush.msra.mxu0 %v2782
    %2800 = vmatpush.msra.mxu0 %v2781
    %2801 = vmatpush.msra.mxu0 %v2780
    %2802 = vmatpush.msra.mxu0 %v2779
    %2803 = vmatpush.msra.mxu0 %v2778
    %2804 = vmatpush.msra.mxu0 %v2777
    %2805 = vmatpush.msra.mxu0 %v2776
    %2806 = vmatpush.msra.mxu0 %v2775
    %2807 = vmatpush.msra.mxu0 %v2774
    %2808 = vmatmul.f32.gmra.mxu0 %v2770
    %v2809 = vpop.f32.mrf.mxu0
    %v2810 = vadd.f32 %v2791, %v2809
    %2811 = vmatmul.f32.gmra.mxu0 %v2771
    %v2812 = vpop.f32.mrf.mxu0
    %v2813 = vadd.f32 %v2791, %v2812
    %2814 = vmatmul.f32.gmra.mxu0 %v2772
    %v2815 = vpop.f32.mrf.mxu0
    %v2816 = vadd.f32 %v2791, %v2815
    %2817 = vmatmul.f32.gmra.mxu0 %v2773
    %v2818 = vpop.f32.mrf.mxu0
    %v2819 = vadd.f32 %v2791, %v2818
    %2820 = vdwg.mxu0
    %v2821 = vtanh.pop %v2810
    %v2822 = vtanh.pop %v2813
    %v2823 = vtanh.pop %v2816
    %v2824 = vtanh.pop %v2819
    %v2825 = vld [vmem:[%s2 + $0x12] sm:$0x1]
    %v2826 = vperm.slane %v2825, 0
    %v2827 = vmul.f32 %v2821, %v2826
    %v2828 = vmul.f32 %v2822, %v2826
    %v2829 = vmul.f32 %v2823, %v2826
    %v2830 = vmul.f32 %v2824, %v2826
    %2831 = vadd.xlane.f32.xlu0 %v2827
    %v2832 = vpop.xlane.xlu0 %2831
    %2833 = vadd.xlane.f32.xlu0 %v2828
    %v2834 = vpop.xlane.xlu0 %2833
    %2835 = vadd.xlane.f32.xlu0 %v2829
    %v2836 = vpop.xlane.xlu0 %2835
    %2837 = vadd.xlane.f32.xlu0 %v2830
    %v2838 = vpop.xlane.xlu0 %2837
    %v2839 = vld [vmem:[%s2 + $0x13] sm:$0x1]
    %v2840 = vperm.slane %v2839, 0
    %v2841 = vadd.f32 %v2832, %v2840
    %v2842 = vadd.f32 %v2834, %v2840
    %v2843 = vadd.f32 %v2836, %v2840
    %v2844 = vadd.f32 %v2838, %v2840
    %vm2845 = vcmask 7168
    %v2846 = vsel %vm2845, %v2841, -inf
    %v2847 = vsel %vm2845, %v2842, -inf
    %v2848 = vmax.f32 %v2846, %v2847
    %v2849 = vrot.slane %v2848, 4
    %v2850 = vmax.f32 %v2848, %v2849
    %v2851 = vrot.slane %v2850, 2
    %v2852 = vmax.f32 %v2850, %v2851
    %v2853 = vrot.slane %v2852, 1
    %v2854 = vmax.f32 %v2852, %v2853
    %v2855 = vsel %vm2845, %v2843, -inf
    %v2856 = vsel %vm2845, %v2844, -inf
    %v2857 = vmax.f32 %v2855, %v2856
    %v2858 = vrot.slane %v2857, 4
    %v2859 = vmax.f32 %v2857, %v2858
    %v2860 = vrot.slane %v2859, 2
    %v2861 = vmax.f32 %v2859, %v2860
    %v2862 = vrot.slane %v2861, 1
    %v2863 = vmax.f32 %v2861, %v2862
    %v2864 = vsub.f32 %v2841, %v2854
    %v2865 = vsub.f32 %v2842, %v2854
    %v2866 = vsub.f32 %v2843, %v2863
    %v2867 = vsub.f32 %v2844, %v2863
    %v2868 = vmul.f32 %v2864, 1.442695
    %v2869 = vpow.pop %v2868
    %v2870 = vmul.f32 %v2865, 1.442695
    %v2871 = vpow.pop %v2870
    %v2872 = vmul.f32 %v2866, 1.442695
    %v2873 = vpow.pop %v2872
    %v2874 = vmul.f32 %v2867, 1.442695
    %v2875 = vpow.pop %v2874
    %2877 = vset.pattern.permute.xlu0 0
    %2878 = vperm.xlu0 %2877, %v2869
    %v2879 = vpop.permute.xlu0 %2878
    %2882 = vset.pattern.permute.xlu0 0
    %2883 = vperm.xlu0 %2882, %v2871
    %v2884 = vpop.permute.xlu0 %2883
    %2887 = vset.pattern.permute.xlu0 0
    %2888 = vperm.xlu0 %2887, %v2873
    %v2889 = vpop.permute.xlu0 %2888
    %2892 = vset.pattern.permute.xlu0 0
    %2893 = vperm.xlu0 %2892, %v2875
    %v2894 = vpop.permute.xlu0 %2893
    %v2896 = vmul.f32 %v2879, %v2770
    %v2897 = vmul.f32 %v2884, %v2771
    %v2898 = vmul.f32 %v2889, %v2772
    %v2899 = vmul.f32 %v2894, %v2773
    %v2900 = vadd.f32 %v2896, %v2897
    %v2901 = vrot.slane %v2900, 4
    %v2902 = vadd.f32 %v2900, %v2901
    %v2903 = vrot.slane %v2902, 2
    %v2904 = vadd.f32 %v2902, %v2903
    %v2905 = vrot.slane %v2904, 1
    %v2906 = vadd.f32 %v2904, %v2905
    %v2907 = vadd.f32 %v2898, %v2899
    %v2908 = vrot.slane %v2907, 4
    %v2909 = vadd.f32 %v2907, %v2908
    %v2910 = vrot.slane %v2909, 2
    %v2911 = vadd.f32 %v2909, %v2910
    %v2912 = vrot.slane %v2911, 1
    %v2913 = vadd.f32 %v2911, %v2912
    %v2914 = vsel %vm2845, %v2869, 0.0
    %v2915 = vsel %vm2845, %v2871, 0.0
    %v2916 = vadd.f32 %v2914, %v2915
    %v2917 = vrot.slane %v2916, 4
    %v2918 = vadd.f32 %v2916, %v2917
    %v2919 = vrot.slane %v2918, 2
    %v2920 = vadd.f32 %v2918, %v2919
    %v2921 = vrot.slane %v2920, 1
    %v2922 = vadd.f32 %v2920, %v2921
    %v2923 = vsel %vm2845, %v2873, 0.0
    %v2924 = vsel %vm2845, %v2875, 0.0
    %v2925 = vadd.f32 %v2923, %v2924
    %v2926 = vrot.slane %v2925, 4
    %v2927 = vadd.f32 %v2925, %v2926
    %v2928 = vrot.slane %v2927, 2
    %v2929 = vadd.f32 %v2927, %v2928
    %v2930 = vrot.slane %v2929, 1
    %v2931 = vadd.f32 %v2929, %v2930
    %2933 = vset.pattern.permute.xlu0 0
    %2934 = vperm.xlu0 %2933, %v2922
    %v2935 = vpop.permute.xlu0 %2934
    %2938 = vset.pattern.permute.xlu0 0
    %2939 = vperm.xlu0 %2938, %v2931
    %v2940 = vpop.permute.xlu0 %2939
    %v2942 = vrcp.pop %v2935
    %v2943 = vmul.f32 %v2935, %v2942
    %v2944 = vsub.f32 1.0, %v2943
    %v2945 = vmul.f32 %v2942, %v2944
    %v2946 = vadd.f32 %v2942, %v2945
    %vm2947 = vweird.f32 %v2935
    %vm2948 = vweird.f32 %v2942
    %vm2949 = vmor %vm2947, %vm2948
    %v2950 = vsel %vm2949, %v2942, %v2946
    %v2951 = vand.u32 2147483647, %v2935
    %vm2952 = vcmp.eq.f32.partialorder %v2951, 8.507059e+37
    %v2953 = vand.u32 %v2935, 2147483648
    %v2954 = vor.u32 1.1754944e-38, %v2953
    %v2955 = vsel %vm2952, %v2954, %v2950
    %v2956 = vmul.f32 %v2906, %v2955
    %v2957 = vrcp.pop %v2940
    %v2958 = vmul.f32 %v2940, %v2957
    %v2959 = vsub.f32 1.0, %v2958
    %v2960 = vmul.f32 %v2957, %v2959
    %v2961 = vadd.f32 %v2957, %v2960
    %vm2962 = vweird.f32 %v2940
    %vm2963 = vweird.f32 %v2957
    %vm2964 = vmor %vm2962, %vm2963
    %v2965 = vsel %vm2964, %v2957, %v2961
    %v2966 = vand.u32 2147483647, %v2940
    %vm2967 = vcmp.eq.f32.partialorder %v2966, 8.507059e+37
    %v2968 = vand.u32 %v2940, 2147483648
    %v2969 = vor.u32 1.1754944e-38, %v2968
    %v2970 = vsel %vm2967, %v2969, %v2965
    %v2971 = vmul.f32 %v2913, %v2970
    %v2972 = vld [vmem:[#allocation9 + $0x80] sm:$0xff]
    %v2973 = vld [vmem:[#allocation9 + $0x88] sm:$0xff]
    %v2974 = vld [vmem:[#allocation9 + $0x90] sm:$0xff]
    %v2975 = vld [vmem:[#allocation9 + $0x98] sm:$0xff]
    %v2976 = vld [vmem:[#allocation9 + $0xa0] sm:$0xff]
    %v2977 = vld [vmem:[#allocation9 + $0xa8] sm:$0xff]
    %v2978 = vld [vmem:[#allocation9 + $0xb0] sm:$0xff]
    %v2979 = vld [vmem:[#allocation9 + $0xb8] sm:$0xff]
    %v2980 = vld [vmem:[#allocation9 + $0xc0] sm:$0xff]
    %v2981 = vld [vmem:[#allocation9 + $0xc8] sm:$0xff]
    %v2982 = vld [vmem:[#allocation9 + $0xd0] sm:$0xff]
    %v2983 = vld [vmem:[#allocation9 + $0xd8] sm:$0xff]
    %v2984 = vld [vmem:[#allocation9 + $0xe0] sm:$0xff]
    %v2985 = vld [vmem:[#allocation9 + $0xe8] sm:$0xff]
    %v2986 = vld [vmem:[#allocation9 + $0xf0] sm:$0xff]
    %v2987 = vld [vmem:[#allocation9 + $0xf8] sm:$0xff]
    %v2988 = vld [vmem:[%s2 + $0x14] sm:$0x1]
    %v2989 = vperm.slane %v2988, 0
    %vm2992 = vcmask 1041409
    %v2993 = vsel %vm2992, %v2971, %v2956
    %2995 = vmatpush.msra.mxu0 %v2987
    %2996 = vmatpush.msra.mxu0 %v2986
    %2997 = vmatpush.msra.mxu0 %v2985
    %2998 = vmatpush.msra.mxu0 %v2984
    %2999 = vmatpush.msra.mxu0 %v2983
    %3000 = vmatpush.msra.mxu0 %v2982
    %3001 = vmatpush.msra.mxu0 %v2981
    %3002 = vmatpush.msra.mxu0 %v2980
    %3003 = vmatpush.msra.mxu0 %v2979
    %3004 = vmatpush.msra.mxu0 %v2978
    %3005 = vmatpush.msra.mxu0 %v2977
    %3006 = vmatpush.msra.mxu0 %v2976
    %3007 = vmatpush.msra.mxu0 %v2975
    %3008 = vmatpush.msra.mxu0 %v2974
    %3009 = vmatpush.msra.mxu0 %v2973
    %3010 = vmatpush.msra.mxu0 %v2972
    %3011 = vmatmul.f32.gmra.mxu0 %v2993
    %v3012 = vpop.f32.mrf.mxu0
    %v3013 = vadd.f32 %v2989, %v3012
    %3014 = vdwg.mxu0
    %v3015 = vmax.f32 %v3013, 0.0
    %v3016 = vld [vmem:[#allocation9 + $0x100] sm:$0xff]
    %v3017 = vld [vmem:[#allocation9 + $0x108] sm:$0xff]
    %v3018 = vld [vmem:[#allocation9 + $0x110] sm:$0xff]
    %v3019 = vld [vmem:[#allocation9 + $0x118] sm:$0xff]
    %v3020 = vld [vmem:[#allocation9 + $0x120] sm:$0xff]
    %v3021 = vld [vmem:[#allocation9 + $0x128] sm:$0xff]
    %v3022 = vld [vmem:[#allocation9 + $0x130] sm:$0xff]
    %v3023 = vld [vmem:[#allocation9 + $0x138] sm:$0xff]
    %v3024 = vld [vmem:[#allocation9 + $0x140] sm:$0xff]
    %v3025 = vld [vmem:[#allocation9 + $0x148] sm:$0xff]
    %v3026 = vld [vmem:[#allocation9 + $0x150] sm:$0xff]
    %v3027 = vld [vmem:[#allocation9 + $0x158] sm:$0xff]
    %v3028 = vld [vmem:[#allocation9 + $0x160] sm:$0xff]
    %v3029 = vld [vmem:[#allocation9 + $0x168] sm:$0xff]
    %v3030 = vld [vmem:[#allocation9 + $0x170] sm:$0xff]
    %v3031 = vld [vmem:[#allocation9 + $0x178] sm:$0xff]
    %v3032 = vld [vmem:[%s2 + $0x15] sm:$0x1]
    %v3033 = vperm.slane %v3032, 0
    %3034 = vmatpush.msra.mxu0 %v3031
    %3035 = vmatpush.msra.mxu0 %v3030
    %3036 = vmatpush.msra.mxu0 %v3029
    %3037 = vmatpush.msra.mxu0 %v3028
    %3038 = vmatpush.msra.mxu0 %v3027
    %3039 = vmatpush.msra.mxu0 %v3026
    %3040 = vmatpush.msra.mxu0 %v3025
    %3041 = vmatpush.msra.mxu0 %v3024
    %3042 = vmatpush.msra.mxu0 %v3023
    %3043 = vmatpush.msra.mxu0 %v3022
    %3044 = vmatpush.msra.mxu0 %v3021
    %3045 = vmatpush.msra.mxu0 %v3020
    %3046 = vmatpush.msra.mxu0 %v3019
    %3047 = vmatpush.msra.mxu0 %v3018
    %3048 = vmatpush.msra.mxu0 %v3017
    %3049 = vmatpush.msra.mxu0 %v3016
    %3050 = vmatmul.f32.gmra.mxu0 %v3015
    %v3051 = vpop.f32.mrf.mxu0
    %v3052 = vadd.f32 %v3033, %v3051
    %3053 = vdwg.mxu0
    %v3054 = vmax.f32 %v3052, 0.0
    %v3055 = vld [vmem:[%s2 + $0x16] sm:$0x1]
    %v3056 = vperm.slane %v3055, 0
    %v3057 = vmul.f32 %v3054, %v3056
    %vm3058 = vcmask 1041408
    %v3059 = vsel %vm3058, %v3057, 0.0
    %3060 = vadd.xlane.f32.xlu0 %v3059
    %v3061 = vpop.xlane.xlu0 %3060
    %v3062 = vld [vmem:[%s2 + $0x17] sm:$0x1]
    %v3063 = vperm.slane %v3062, 0
    %v3064 = vadd.f32 %v3061, %v3063
    %v3065 = vxor.u32 %v3064, 2147483648
    %v3066 = vmul.f32 %v3065, 1.442695
    %v3067 = vpow.pop %v3066
    %v3068 = vadd.f32 %v3067, 1.0
    %v3069 = vrcp.pop %v3068
    %v3070 = vmul.f32 %v3068, %v3069
    %v3071 = vsub.f32 1.0, %v3070
    %v3072 = vmul.f32 %v3069, %v3071
    %v3073 = vadd.f32 %v3069, %v3072
    %vm3074 = vweird.f32 %v3068
    %vm3075 = vweird.f32 %v3069
    %vm3076 = vmor %vm3074, %vm3075
    %v3077 = vsel %vm3076, %v3069, %v3073
    %v3078 = vand.u32 2147483647, %v3068
    %vm3079 = vcmp.eq.f32.partialorder %v3078, 8.507059e+37
    %v3080 = vand.u32 %v3068, 2147483648
    %v3081 = vor.u32 1.1754944e-38, %v3080
    %v3082 = vsel %vm3079, %v3081, %v3077
    %v3083 = vmul.f32 1.0, %v3082
    %vm3084 = vcmask 1024
    %3085 = vst.msk [vmem:[%s7] sm:$0x3] %vm3084, %v3083
    // Predicated region
    $region50: #{forward.1} parent=1 // pred_check
      _
    $region51: #{forward.1} parent=1 // pred_check_branch
      %3087 = sbr.rel (0) target = $region53
    $region52: #{forward.1} parent=1 // pred_region
      _
    $region53: #{forward.1} parent=1 // pred_fallthru
      _
    // Predicated region
    $region54: #{forward.1} parent=1 // pred_check
      _
    $region55: #{forward.1} parent=1 // pred_check_branch
      %3089 = sbr.rel (0) target = $region57
    $region56: #{forward.1} parent=1 // pred_region
      _
    $region57: #{forward.1} parent=1 // pred_fallthru
      _
    %3090 = vsyncpa [#allocation3], 1
    %3091 = vsyncpa [#allocation5], 1
    %3092 = vsyncpa [#allocation8], 1

</llo_original>
